<compile_context>
chip_gen: v6e
topology: v6e:2x2x1
jax: 0.10.0
libtpu: 0.0.40
codegen_flags: <defaults>
</compile_context>

<pallas_src>
import functools

import jax
import jax.numpy as jnp
from jax.experimental import pallas as pl
from jax.experimental.pallas import tpu as pltpu


def _ccsb_kernel(x_ref, mask_ref, w1_ref, b1_ref, w2_ref, b2_ref,
                 wd1_ref, bd1_ref, wd2_ref, bd2_ref, wsa_ref,
                 o_ref, e_ref, sa_ref, *,
                 C, H, W, WP, LP, MG, LE, K, KSA):
    # x_ref:    (1, C, LP)  input, zero-padded by 3, HW-flattened, lane-padded
    # mask_ref: (1, LP)     1.0 inside the original HxW image, 0.0 elsewhere
    # w1/w2:    (C, K*K*C)  flattened 3x3 conv weights,  b1/b2: (C, 1)
    # wd1:(C,m) bd1:(1,m) wd2:(C,m) bd2:(C,1)   (channel-attention 1x1 convs)
    # wsa_ref:  (2, KSA*KSA) in SMEM (spatial-attention 7x7 weights)
    # o_ref:    (1, C, LP)  output (padded coords; halo/tail stripped outside)
    # e_ref:    (C, LE)     scratch with zero margins for shifted slices
    # sa_ref:   (2, LE)     scratch for the (avg, max) spatial maps
    x_flat = x_ref[0]                         # (C, LP) f32
    mask = mask_ref[...]                      # (1, LP)

    # Margins must read as zero for the shifted slices.  The interior
    # [MG, MG+LP) is fully rewritten every step, so only zero the margins
    # (per-core scratch: do NOT gate this on program_id).
    e_ref[:, :MG] = jnp.zeros((C, MG), jnp.float32)
    e_ref[:, MG + LP:] = jnp.zeros((C, LE - MG - LP), jnp.float32)
    sa_ref[:, :MG] = jnp.zeros((2, MG), jnp.float32)
    sa_ref[:, MG + LP:] = jnp.zeros((2, LE - MG - LP), jnp.float32)

    def conv3x3(w_ref):
        # im2col-lite: stack 9 shifted lane-slices on the sublane axis and do
        # a single MXU contraction (C, 9C) @ (9C, LP).
        slabs = []
        for kh in range(K):
            for kw in range(K):
                d = (kh - K // 2) * WP + (kw - K // 2)
                slabs.append(e_ref[:, MG + d:MG + d + LP])
        patch = jnp.concatenate(slabs, axis=0)          # (K*K*C, LP)
        return jnp.dot(w_ref[...], patch, preferred_element_type=jnp.float32)

    # ---------------- body: conv3x3 -> ReLU -> conv3x3 ----------------
    # (mask multiply keeps halo/tail at exact zero, matching zero-padded conv)
    e_ref[:, MG:MG + LP] = x_flat
    h1 = jnp.maximum(conv3x3(w1_ref) + b1_ref[...], 0.0) * mask     # (C, LP)
    e_ref[:, MG:MG + LP] = h1
    res = (conv3x3(w2_ref) + b2_ref[...]) * mask                    # (C, LP)

    # ---------------- channel attention (CALayer) ----------------
    # global average pool over the image (halo/tail positions are exact zeros)
    y = jnp.sum(res, axis=1, keepdims=True) * (1.0 / (H * W))       # (C, 1)
    z1 = jnp.sum(wd1_ref[...] * y, axis=0, keepdims=True) + bd1_ref[...]   # (1, m)
    z1 = jnp.where(z1 >= 0.0, z1, 0.1 * z1)                         # LeakyReLU(0.1)
    z2 = jnp.sum(wd2_ref[...] * z1, axis=1, keepdims=True) + bd2_ref[...]  # (C, 1)
    ca = 1.0 / (1.0 + jnp.exp(-z2))                                 # sigmoid
    res = res * ca                                                  # halo stays zero

    # ---------------- spatial attention ----------------
    sa_ref[0:1, MG:MG + LP] = jnp.sum(res, axis=0, keepdims=True) * (1.0 / C)
    sa_ref[1:2, MG:MG + LP] = jnp.max(res, axis=0, keepdims=True)

    # 7x7 / 2-channel conv: 98 scalar weights -> VPU broadcast-FMAs
    acc0 = jnp.zeros((1, LP), jnp.float32)
    acc1 = jnp.zeros((1, LP), jnp.float32)
    for kh in range(KSA):
        for kw in range(KSA):
            d = (kh - KSA // 2) * WP + (kw - KSA // 2)
            k = kh * KSA + kw
            s = sa_ref[:, MG + d:MG + d + LP]            # (2, LP), one slice/tap
            acc0 = acc0 + wsa_ref[0, k] * s[0:1]
            acc1 = acc1 + wsa_ref[1, k] * s[1:2]
    sa_map = 1.0 / (1.0 + jnp.exp(-(acc0 + acc1)))                  # (1, LP)

    # ---------------- residual:  out = x + sa_map ----------------
    o_ref[0] = (x_flat + sa_map).astype(o_ref.dtype)


def ccsb_pallas(x, params):
    """CCSB forward.  x: (N, C, H, W) f32, params as created in __main__."""
    w1, b1, w2, b2, wd1, bd1, wd2, bd2, wsa = params
    n, c, h, w = x.shape
    k = w1.shape[-1]                  # 3
    ksa = wsa.shape[-1]               # 7
    m = wd1.shape[0]                  # c // 16

    pad = ksa // 2                    # pad once by the largest halo (3)
    hp, wp = h + 2 * pad, w + 2 * pad
    L = hp * wp                       # flattened padded spatial length
    LP = ((L + 127) // 128) * 128     # lane-dense (unmasked vld/vst) length
    reach = (ksa // 2) * wp + (ksa // 2)           # largest lane shift
    MG = 128                                       # lane-aligned left margin
    assert MG >= reach
    LE = ((MG + LP + reach + 127) // 128) * 128    # scratch lane extent

    # ---- thin wrapper glue (no activation transposes) ----
    xp = jnp.pad(x, ((0, 0), (0, 0), (pad, pad), (pad, pad))).reshape(n, c, L)
    xp = jnp.pad(xp, ((0, 0), (0, 0), (0, LP - L)))
    mask = jnp.pad(jnp.pad(jnp.ones((h, w), x.dtype), pad).reshape(1, L),
                   ((0, 0), (0, LP - L)))
    w1f = jnp.transpose(w1, (0, 2, 3, 1)).reshape(c, k * k * c)
    w2f = jnp.transpose(w2, (0, 2, 3, 1)).reshape(c, k * k * c)
    b1c = b1.reshape(c, 1)
    b2c = b2.reshape(c, 1)
    wd1t = wd1.reshape(m, c).T                     # (c, m)
    bd1r = bd1.reshape(1, m)
    wd2r = wd2.reshape(c, m)
    bd2r = bd2.reshape(c, 1)
    wsar = wsa.reshape(2, ksa * ksa)

    kernel = functools.partial(_ccsb_kernel, C=c, H=h, W=w, WP=wp, LP=LP,
                               MG=MG, LE=LE, K=k, KSA=ksa)
    const = lambda ni: (0, 0)   # resident blocks (no re-DMA across steps)

    out = pl.pallas_call(
        kernel,
        out_shape=jax.ShapeDtypeStruct((n, c, LP), x.dtype),
        grid_spec=pltpu.PrefetchScalarGridSpec(
            num_scalar_prefetch=0,
            grid=(n,),
            in_specs=[
                pl.BlockSpec((1, c, LP), lambda ni: (ni, 0, 0)),  # x (flat, padded)
                pl.BlockSpec((1, LP), const),                     # interior mask
                pl.BlockSpec((c, k * k * c), const),              # w1 (flattened)
                pl.BlockSpec((c, 1), const),                      # b1
                pl.BlockSpec((c, k * k * c), const),              # w2
                pl.BlockSpec((c, 1), const),                      # b2
                pl.BlockSpec((c, m), const),                      # ca w1^T
                pl.BlockSpec((1, m), const),                      # ca b1
                pl.BlockSpec((c, m), const),                      # ca w2
                pl.BlockSpec((c, 1), const),                      # ca b2
                pl.BlockSpec(memory_space=pltpu.MemorySpace.SMEM),  # sa weights
            ],
            out_specs=pl.BlockSpec((1, c, LP), lambda ni: (ni, 0, 0)),
            scratch_shapes=[pltpu.VMEM((c, LE), jnp.float32),
                            pltpu.VMEM((2, LE), jnp.float32)],
        ),
        compiler_params=pltpu.CompilerParams(
            dimension_semantics=("parallel",)),
    )(xp, mask, w1f, b1c, w2f, b2c, wd1t, bd1r, wd2r, bd2r, wsar)

    # strip lane-pad + halo: (n, c, LP) -> (n, c, h, w)
    out = out[:, :, :L].reshape(n, c, hp, wp)
    return out[:, :, pad:pad + h, pad:pad + w]


def ccsb_ref(x, params):
    """Pure-JAX reference matching the PyTorch CCSB forward."""
    w1, b1, w2, b2, wd1, bd1, wd2, bd2, wsa = params

    def conv(v, wgt, pad):
        return jax.lax.conv_general_dilated(
            v, wgt, window_strides=(1, 1),
            padding=[(pad, pad), (pad, pad)],
            dimension_numbers=("NCHW", "OIHW", "NCHW"))

    r = conv(x, w1, 1) + b1[None, :, None, None]
    r = jnp.maximum(r, 0.0)
    r = conv(r, w2, 1) + b2[None, :, None, None]
    # CALayer
    y = jnp.mean(r, axis=(2, 3), keepdims=True)
    y = conv(y, wd1, 0) + bd1[None, :, None, None]
    y = jnp.where(y >= 0.0, y, 0.1 * y)
    y = conv(y, wd2, 0) + bd2[None, :, None, None]
    y = jax.nn.sigmoid(y)
    r = r * y
    # SpatialAttention (note: it returns the sigmoid map itself)
    avg = jnp.mean(r, axis=1, keepdims=True)
    mx = jnp.max(r, axis=1, keepdims=True)
    s = jnp.concatenate([avg, mx], axis=1)
    s = jax.nn.sigmoid(conv(s, wsa, 3))
    return x + s


if __name__ == "__main__":
    # Small shapes consistent with the module (CALayer needs channels >= 16).
    N, C, H, W = 2, 16, 16, 16
    K, KSA = 3, 7
    M = C // 16

    key = jax.random.PRNGKey(0)
    ks = jax.random.split(key, 10)

    def uinit(kk, shape, fan_in):
        b = 1.0 / (fan_in ** 0.5)
        return jax.random.uniform(kk, shape, minval=-b, maxval=b,
                                  dtype=jnp.float32)

    x = jax.random.normal(ks[0], (N, C, H, W), dtype=jnp.float32)
    w1 = uinit(ks[1], (C, C, K, K), C * K * K)
    b1 = uinit(ks[2], (C,), C * K * K)
    w2 = uinit(ks[3], (C, C, K, K), C * K * K)
    b2 = uinit(ks[4], (C,), C * K * K)
    wd1 = uinit(ks[5], (M, C, 1, 1), C)
    bd1 = uinit(ks[6], (M,), C)
    wd2 = uinit(ks[7], (C, M, 1, 1), M)
    bd2 = uinit(ks[8], (C,), M)
    wsa = uinit(ks[9], (1, 2, KSA, KSA), 2 * KSA * KSA)
    params = (w1, b1, w2, b2, wd1, bd1, wd2, bd2, wsa)

    out = jax.block_until_ready(ccsb_pallas(x, params))
    ref = jax.block_until_ready(ccsb_ref(x, params))

    assert out.shape == (N, C, H, W)
    assert jnp.allclose(out, ref, atol=1e-3, rtol=1e-3), \
        float(jnp.max(jnp.abs(out - ref)))
    print("KERNEL_OK")
</pallas_src>

<mosaic_0001>
module attributes {stable_mosaic.version = 11 : i64} {
  func.func @_ccsb_kernel(%arg0: i32, %arg1: memref<1x16x512xf32, #tpu.memory_space<vmem>>, %arg2: memref<1x512xf32, #tpu.memory_space<vmem>>, %arg3: memref<16x144xf32, #tpu.memory_space<vmem>>, %arg4: memref<16x1xf32, #tpu.memory_space<vmem>>, %arg5: memref<16x144xf32, #tpu.memory_space<vmem>>, %arg6: memref<16x1xf32, #tpu.memory_space<vmem>>, %arg7: memref<16x1xf32, #tpu.memory_space<vmem>>, %arg8: memref<1x1xf32, #tpu.memory_space<vmem>>, %arg9: memref<16x1xf32, #tpu.memory_space<vmem>>, %arg10: memref<16x1xf32, #tpu.memory_space<vmem>>, %arg11: memref<2x49xf32, #tpu.memory_space<smem>>, %arg12: memref<1x16x512xf32, #tpu.memory_space<vmem>>, %arg13: memref<16x768xf32, #tpu.memory_space<vmem>>, %arg14: memref<2x768xf32, #tpu.memory_space<vmem>>) attributes {dimension_semantics = [#tpu.dimension_semantics<parallel>], iteration_bounds = array<i64: 2>, scalar_prefetch = 0 : i64, scratch_operands = 2 : i64, tpu.core_type = #tpu.core_type<tc>, window_params = [{transform_indices = @transform_0, window_bounds = array<i64: 1, 16, 512>}, {pipeline_mode = #tpu.pipeline_mode<synchronous>, transform_indices = @transform_1, window_bounds = array<i64: 1, 512>}, {pipeline_mode = #tpu.pipeline_mode<synchronous>, transform_indices = @transform_2, window_bounds = array<i64: 16, 144>}, {pipeline_mode = #tpu.pipeline_mode<synchronous>, transform_indices = @transform_3, window_bounds = array<i64: 16, 1>}, {pipeline_mode = #tpu.pipeline_mode<synchronous>, transform_indices = @transform_4, window_bounds = array<i64: 16, 144>}, {pipeline_mode = #tpu.pipeline_mode<synchronous>, transform_indices = @transform_5, window_bounds = array<i64: 16, 1>}, {pipeline_mode = #tpu.pipeline_mode<synchronous>, transform_indices = @transform_6, window_bounds = array<i64: 16, 1>}, {pipeline_mode = #tpu.pipeline_mode<synchronous>, transform_indices = @transform_7, window_bounds = array<i64: 1, 1>}, {pipeline_mode = #tpu.pipeline_mode<synchronous>, transform_indices = @transform_8, window_bounds = array<i64: 16, 1>}, {pipeline_mode = #tpu.pipeline_mode<synchronous>, transform_indices = @transform_9, window_bounds = array<i64: 16, 1>}, {transform_indices = @transform_10, window_bounds = array<i64: 2, 49>}, {transform_indices = @transform_11, window_bounds = array<i64: 1, 16, 512>}]} {
    %c0 = arith.constant 0 : index
    %c0_0 = arith.constant 0 : index
    %c0_1 = arith.constant 0 : index
    %0 = vector.load %arg1[%c0, %c0_0, %c0_1] : memref<1x16x512xf32, #tpu.memory_space<vmem>>, vector<1x16x512xf32>
    %1 = vector.shape_cast %0 : vector<1x16x512xf32> to vector<16x512xf32>
    %c0_2 = arith.constant 0 : index
    %c0_3 = arith.constant 0 : index
    %2 = vector.load %arg2[%c0_2, %c0_3] : memref<1x512xf32, #tpu.memory_space<vmem>>, vector<1x512xf32>
    %cst = arith.constant 0.000000e+00 : f32
    %3 = vector.broadcast %cst : f32 to vector<16x128xf32>
    %c0_4 = arith.constant 0 : index
    %c0_5 = arith.constant 0 : index
    %4 = vector.load %arg13[%c0_4, %c0_5] : memref<16x768xf32, #tpu.memory_space<vmem>>, vector<16x128xf32>
    tpu.vector_store %arg13[%c0_4, %c0_5], %3 {strides = array<i32>} : memref<16x768xf32, #tpu.memory_space<vmem>>, vector<16x128xf32>,
    %cst_6 = arith.constant 0.000000e+00 : f32
    %5 = vector.broadcast %cst_6 : f32 to vector<16x128xf32>
    %c0_7 = arith.constant 0 : index
    %c640 = arith.constant 640 : index
    %6 = vector.load %arg13[%c0_7, %c640] : memref<16x768xf32, #tpu.memory_space<vmem>>, vector<16x128xf32>
    tpu.vector_store %arg13[%c0_7, %c640], %5 {strides = array<i32>} : memref<16x768xf32, #tpu.memory_space<vmem>>, vector<16x128xf32>,
    %cst_8 = arith.constant 0.000000e+00 : f32
    %7 = vector.broadcast %cst_8 : f32 to vector<2x128xf32>
    %c0_9 = arith.constant 0 : index
    %c0_10 = arith.constant 0 : index
    %8 = vector.load %arg14[%c0_9, %c0_10] : memref<2x768xf32, #tpu.memory_space<vmem>>, vector<2x128xf32>
    tpu.vector_store %arg14[%c0_9, %c0_10], %7 {strides = array<i32>} : memref<2x768xf32, #tpu.memory_space<vmem>>, vector<2x128xf32>,
    %cst_11 = arith.constant 0.000000e+00 : f32
    %9 = vector.broadcast %cst_11 : f32 to vector<2x128xf32>
    %c0_12 = arith.constant 0 : index
    %c640_13 = arith.constant 640 : index
    %10 = vector.load %arg14[%c0_12, %c640_13] : memref<2x768xf32, #tpu.memory_space<vmem>>, vector<2x128xf32>
    tpu.vector_store %arg14[%c0_12, %c640_13], %9 {strides = array<i32>} : memref<2x768xf32, #tpu.memory_space<vmem>>, vector<2x128xf32>,
    %c0_14 = arith.constant 0 : index
    %c128 = arith.constant 128 : index
    %11 = vector.load %arg13[%c0_14, %c128] : memref<16x768xf32, #tpu.memory_space<vmem>>, vector<16x512xf32>
    tpu.vector_store %arg13[%c0_14, %c128], %1 {strides = array<i32>} : memref<16x768xf32, #tpu.memory_space<vmem>>, vector<16x512xf32>,
    %c0_15 = arith.constant 0 : index
    %c105 = arith.constant 105 : index
    %12 = vector.load %arg13[%c0_15, %c105] : memref<16x768xf32, #tpu.memory_space<vmem>>, vector<16x512xf32>
    %c0_16 = arith.constant 0 : index
    %c106 = arith.constant 106 : index
    %13 = vector.load %arg13[%c0_16, %c106] : memref<16x768xf32, #tpu.memory_space<vmem>>, vector<16x512xf32>
    %c0_17 = arith.constant 0 : index
    %c107 = arith.constant 107 : index
    %14 = vector.load %arg13[%c0_17, %c107] : memref<16x768xf32, #tpu.memory_space<vmem>>, vector<16x512xf32>
    %c0_18 = arith.constant 0 : index
    %c127 = arith.constant 127 : index
    %15 = vector.load %arg13[%c0_18, %c127] : memref<16x768xf32, #tpu.memory_space<vmem>>, vector<16x512xf32>
    %c0_19 = arith.constant 0 : index
    %c128_20 = arith.constant 128 : index
    %16 = vector.load %arg13[%c0_19, %c128_20] : memref<16x768xf32, #tpu.memory_space<vmem>>, vector<16x512xf32>
    %c0_21 = arith.constant 0 : index
    %c129 = arith.constant 129 : index
    %17 = vector.load %arg13[%c0_21, %c129] : memref<16x768xf32, #tpu.memory_space<vmem>>, vector<16x512xf32>
    %c0_22 = arith.constant 0 : index
    %c149 = arith.constant 149 : index
    %18 = vector.load %arg13[%c0_22, %c149] : memref<16x768xf32, #tpu.memory_space<vmem>>, vector<16x512xf32>
    %c0_23 = arith.constant 0 : index
    %c150 = arith.constant 150 : index
    %19 = vector.load %arg13[%c0_23, %c150] : memref<16x768xf32, #tpu.memory_space<vmem>>, vector<16x512xf32>
    %c0_24 = arith.constant 0 : index
    %c151 = arith.constant 151 : index
    %20 = vector.load %arg13[%c0_24, %c151] : memref<16x768xf32, #tpu.memory_space<vmem>>, vector<16x512xf32>
    %21 = tpu.concatenate %12, %13, %14, %15, %16, %17, %18, %19, %20 in 0 : vector<16x512xf32>, vector<16x512xf32>, vector<16x512xf32>, vector<16x512xf32>, vector<16x512xf32>, vector<16x512xf32>, vector<16x512xf32>, vector<16x512xf32>, vector<16x512xf32> -> vector<144x512xf32>
    %c0_25 = arith.constant 0 : index
    %c0_26 = arith.constant 0 : index
    %22 = vector.load %arg3[%c0_25, %c0_26] : memref<16x144xf32, #tpu.memory_space<vmem>>, vector<16x144xf32>
    %cst_27 = arith.constant dense<0.000000e+00> : vector<16x512xf32>
    %23 = tpu.matmul %22, %21, %cst_27 {dimension_numbers = #tpu.dot_dimension_numbers<[1], [0], [0], [1], [0, 0, 1, 1], [], []>} : vector<16x144xf32>, vector<144x512xf32>, vector<16x512xf32> -> vector<16x512xf32>
    %c0_28 = arith.constant 0 : index
    %c0_29 = arith.constant 0 : index
    %24 = vector.load %arg4[%c0_28, %c0_29] : memref<16x1xf32, #tpu.memory_space<vmem>>, vector<16x1xf32>
    %25 = vector.broadcast %24 : vector<16x1xf32> to vector<16x512xf32>
    %26 = arith.addf %23, %25 : vector<16x512xf32>
    %cst_30 = arith.constant 0.000000e+00 : f32
    %27 = vector.broadcast %cst_30 : f32 to vector<16x512xf32>
    %28 = arith.maximumf %26, %27 : vector<16x512xf32>
    %29 = vector.broadcast %2 : vector<1x512xf32> to vector<16x512xf32>
    %30 = arith.mulf %28, %29 : vector<16x512xf32>
    %c0_31 = arith.constant 0 : index
    %c128_32 = arith.constant 128 : index
    %31 = vector.load %arg13[%c0_31, %c128_32] : memref<16x768xf32, #tpu.memory_space<vmem>>, vector<16x512xf32>
    tpu.vector_store %arg13[%c0_31, %c128_32], %30 {strides = array<i32>} : memref<16x768xf32, #tpu.memory_space<vmem>>, vector<16x512xf32>,
    %c0_33 = arith.constant 0 : index
    %c105_34 = arith.constant 105 : index
    %32 = vector.load %arg13[%c0_33, %c105_34] : memref<16x768xf32, #tpu.memory_space<vmem>>, vector<16x512xf32>
    %c0_35 = arith.constant 0 : index
    %c106_36 = arith.constant 106 : index
    %33 = vector.load %arg13[%c0_35, %c106_36] : memref<16x768xf32, #tpu.memory_space<vmem>>, vector<16x512xf32>
    %c0_37 = arith.constant 0 : index
    %c107_38 = arith.constant 107 : index
    %34 = vector.load %arg13[%c0_37, %c107_38] : memref<16x768xf32, #tpu.memory_space<vmem>>, vector<16x512xf32>
    %c0_39 = arith.constant 0 : index
    %c127_40 = arith.constant 127 : index
    %35 = vector.load %arg13[%c0_39, %c127_40] : memref<16x768xf32, #tpu.memory_space<vmem>>, vector<16x512xf32>
    %c0_41 = arith.constant 0 : index
    %c128_42 = arith.constant 128 : index
    %36 = vector.load %arg13[%c0_41, %c128_42] : memref<16x768xf32, #tpu.memory_space<vmem>>, vector<16x512xf32>
    %c0_43 = arith.constant 0 : index
    %c129_44 = arith.constant 129 : index
    %37 = vector.load %arg13[%c0_43, %c129_44] : memref<16x768xf32, #tpu.memory_space<vmem>>, vector<16x512xf32>
    %c0_45 = arith.constant 0 : index
    %c149_46 = arith.constant 149 : index
    %38 = vector.load %arg13[%c0_45, %c149_46] : memref<16x768xf32, #tpu.memory_space<vmem>>, vector<16x512xf32>
    %c0_47 = arith.constant 0 : index
    %c150_48 = arith.constant 150 : index
    %39 = vector.load %arg13[%c0_47, %c150_48] : memref<16x768xf32, #tpu.memory_space<vmem>>, vector<16x512xf32>
    %c0_49 = arith.constant 0 : index
    %c151_50 = arith.constant 151 : index
    %40 = vector.load %arg13[%c0_49, %c151_50] : memref<16x768xf32, #tpu.memory_space<vmem>>, vector<16x512xf32>
    %41 = tpu.concatenate %32, %33, %34, %35, %36, %37, %38, %39, %40 in 0 : vector<16x512xf32>, vector<16x512xf32>, vector<16x512xf32>, vector<16x512xf32>, vector<16x512xf32>, vector<16x512xf32>, vector<16x512xf32>, vector<16x512xf32>, vector<16x512xf32> -> vector<144x512xf32>
    %c0_51 = arith.constant 0 : index
    %c0_52 = arith.constant 0 : index
    %42 = vector.load %arg5[%c0_51, %c0_52] : memref<16x144xf32, #tpu.memory_space<vmem>>, vector<16x144xf32>
    %cst_53 = arith.constant dense<0.000000e+00> : vector<16x512xf32>
    %43 = tpu.matmul %42, %41, %cst_53 {dimension_numbers = #tpu.dot_dimension_numbers<[1], [0], [0], [1], [0, 0, 1, 1], [], []>} : vector<16x144xf32>, vector<144x512xf32>, vector<16x512xf32> -> vector<16x512xf32>
    %c0_54 = arith.constant 0 : index
    %c0_55 = arith.constant 0 : index
    %44 = vector.load %arg6[%c0_54, %c0_55] : memref<16x1xf32, #tpu.memory_space<vmem>>, vector<16x1xf32>
    %45 = vector.broadcast %44 : vector<16x1xf32> to vector<16x512xf32>
    %46 = arith.addf %43, %45 : vector<16x512xf32>
    %47 = vector.broadcast %2 : vector<1x512xf32> to vector<16x512xf32>
    %48 = arith.mulf %46, %47 : vector<16x512xf32>
    %cst_56 = arith.constant dense<0.000000e+00> : vector<16xf32>
    %49 = vector.multi_reduction <add>, %48, %cst_56 [1] : vector<16x512xf32> to vector<16xf32>
    %50 = vector.shape_cast %49 : vector<16xf32> to vector<16x1xf32>
    %cst_57 = arith.constant 3.906250e-03 : f32
    %51 = vector.broadcast %cst_57 : f32 to vector<16x1xf32>
    %52 = arith.mulf %50, %51 : vector<16x1xf32>
    %c0_58 = arith.constant 0 : index
    %c0_59 = arith.constant 0 : index
    %53 = vector.load %arg7[%c0_58, %c0_59] : memref<16x1xf32, #tpu.memory_space<vmem>>, vector<16x1xf32>
    %54 = arith.mulf %53, %52 : vector<16x1xf32>
    %cst_60 = arith.constant dense<0.000000e+00> : vector<1xf32>
    %55 = vector.multi_reduction <add>, %54, %cst_60 [0] : vector<16x1xf32> to vector<1xf32>
    %56 = vector.shape_cast %55 : vector<1xf32> to vector<1x1xf32>
    %c0_61 = arith.constant 0 : index
    %c0_62 = arith.constant 0 : index
    %57 = vector.load %arg8[%c0_61, %c0_62] : memref<1x1xf32, #tpu.memory_space<vmem>>, vector<1x1xf32>
    %58 = arith.addf %56, %57 : vector<1x1xf32>
    %cst_63 = arith.constant 0.000000e+00 : f32
    %59 = vector.broadcast %cst_63 : f32 to vector<1x1xf32>
    %60 = arith.cmpf oge, %58, %59 : vector<1x1xf32>
    %cst_64 = arith.constant 1.000000e-01 : f32
    %61 = vector.broadcast %cst_64 : f32 to vector<1x1xf32>
    %62 = arith.mulf %61, %58 : vector<1x1xf32>
    %63 = arith.select %60, %58, %62 : vector<1x1xi1>, vector<1x1xf32>
    %c0_65 = arith.constant 0 : index
    %c0_66 = arith.constant 0 : index
    %64 = vector.load %arg9[%c0_65, %c0_66] : memref<16x1xf32, #tpu.memory_space<vmem>>, vector<16x1xf32>
    %65 = vector.broadcast %63 : vector<1x1xf32> to vector<16x1xf32>
    %66 = arith.mulf %64, %65 : vector<16x1xf32>
    %cst_67 = arith.constant dense<0.000000e+00> : vector<16xf32>
    %67 = vector.multi_reduction <add>, %66, %cst_67 [1] : vector<16x1xf32> to vector<16xf32>
    %68 = vector.shape_cast %67 : vector<16xf32> to vector<16x1xf32>
    %c0_68 = arith.constant 0 : index
    %c0_69 = arith.constant 0 : index
    %69 = vector.load %arg10[%c0_68, %c0_69] : memref<16x1xf32, #tpu.memory_space<vmem>>, vector<16x1xf32>
    %70 = arith.addf %68, %69 : vector<16x1xf32>
    %cst_70 = arith.constant 0.000000e+00 : f32
    %71 = vector.broadcast %cst_70 : f32 to vector<16x1xf32>
    %72 = arith.subf %71, %70 : vector<16x1xf32>
    %73 = math.exp %72 : vector<16x1xf32>
    %cst_71 = arith.constant 1.000000e+00 : f32
    %74 = vector.broadcast %cst_71 : f32 to vector<16x1xf32>
    %75 = arith.addf %74, %73 : vector<16x1xf32>
    %cst_72 = arith.constant 1.000000e+00 : f32
    %76 = vector.broadcast %cst_72 : f32 to vector<16x1xf32>
    %77 = arith.divf %76, %75 : vector<16x1xf32>
    %78 = vector.broadcast %77 : vector<16x1xf32> to vector<16x512xf32>
    %79 = arith.mulf %48, %78 : vector<16x512xf32>
    %cst_73 = arith.constant dense<0.000000e+00> : vector<512xf32>
    %80 = vector.multi_reduction <add>, %79, %cst_73 [0] : vector<16x512xf32> to vector<512xf32>
    %81 = vector.shape_cast %80 : vector<512xf32> to vector<1x512xf32>
    %cst_74 = arith.constant 6.250000e-02 : f32
    %82 = vector.broadcast %cst_74 : f32 to vector<1x512xf32>
    %83 = arith.mulf %81, %82 : vector<1x512xf32>
    %c0_75 = arith.constant 0 : index
    %c128_76 = arith.constant 128 : index
    %84 = vector.load %arg14[%c0_75, %c128_76] : memref<2x768xf32, #tpu.memory_space<vmem>>, vector<1x512xf32>
    tpu.vector_store %arg14[%c0_75, %c128_76], %83 {strides = array<i32>} : memref<2x768xf32, #tpu.memory_space<vmem>>, vector<1x512xf32>,
    %cst_77 = arith.constant dense<0xFF800000> : vector<512xf32>
    %85 = vector.multi_reduction <maximumf>, %79, %cst_77 [0] : vector<16x512xf32> to vector<512xf32>
    %86 = vector.shape_cast %85 : vector<512xf32> to vector<1x512xf32>
    %c1 = arith.constant 1 : index
    %c128_78 = arith.constant 128 : index
    %87 = vector.load %arg14[%c1, %c128_78] : memref<2x768xf32, #tpu.memory_space<vmem>>, vector<1x512xf32>
    tpu.vector_store %arg14[%c1, %c128_78], %86 {strides = array<i32>} : memref<2x768xf32, #tpu.memory_space<vmem>>, vector<1x512xf32>,
    %cst_79 = arith.constant 0.000000e+00 : f32
    %88 = vector.broadcast %cst_79 : f32 to vector<1x512xf32>
    %cst_80 = arith.constant 0.000000e+00 : f32
    %89 = vector.broadcast %cst_80 : f32 to vector<1x512xf32>
    %c0_81 = arith.constant 0 : index
    %c59 = arith.constant 59 : index
    %90 = vector.load %arg14[%c0_81, %c59] : memref<2x768xf32, #tpu.memory_space<vmem>>, vector<2x512xf32>
    %c0_82 = arith.constant 0 : index
    %c0_83 = arith.constant 0 : index
    %91 = memref.load %arg11[%c0_82, %c0_83] : memref<2x49xf32, #tpu.memory_space<smem>>
    %92 = vector.extract_strided_slice %90 {offsets = [0, 0], sizes = [1, 512], strides = [1, 1]} : vector<2x512xf32> to vector<1x512xf32>
    %93 = vector.broadcast %91 : f32 to vector<1x512xf32>
    %94 = arith.mulf %93, %92 : vector<1x512xf32>
    %95 = arith.addf %88, %94 : vector<1x512xf32>
    %c1_84 = arith.constant 1 : index
    %c0_85 = arith.constant 0 : index
    %96 = memref.load %arg11[%c1_84, %c0_85] : memref<2x49xf32, #tpu.memory_space<smem>>
    %97 = vector.extract_strided_slice %90 {offsets = [1, 0], sizes = [1, 512], strides = [1, 1]} : vector<2x512xf32> to vector<1x512xf32>
    %98 = vector.broadcast %96 : f32 to vector<1x512xf32>
    %99 = arith.mulf %98, %97 : vector<1x512xf32>
    %100 = arith.addf %89, %99 : vector<1x512xf32>
    %c0_86 = arith.constant 0 : index
    %c60 = arith.constant 60 : index
    %101 = vector.load %arg14[%c0_86, %c60] : memref<2x768xf32, #tpu.memory_space<vmem>>, vector<2x512xf32>
    %c0_87 = arith.constant 0 : index
    %c1_88 = arith.constant 1 : index
    %102 = memref.load %arg11[%c0_87, %c1_88] : memref<2x49xf32, #tpu.memory_space<smem>>
    %103 = vector.extract_strided_slice %101 {offsets = [0, 0], sizes = [1, 512], strides = [1, 1]} : vector<2x512xf32> to vector<1x512xf32>
    %104 = vector.broadcast %102 : f32 to vector<1x512xf32>
    %105 = arith.mulf %104, %103 : vector<1x512xf32>
    %106 = arith.addf %95, %105 : vector<1x512xf32>
    %c1_89 = arith.constant 1 : index
    %c1_90 = arith.constant 1 : index
    %107 = memref.load %arg11[%c1_89, %c1_90] : memref<2x49xf32, #tpu.memory_space<smem>>
    %108 = vector.extract_strided_slice %101 {offsets = [1, 0], sizes = [1, 512], strides = [1, 1]} : vector<2x512xf32> to vector<1x512xf32>
    %109 = vector.broadcast %107 : f32 to vector<1x512xf32>
    %110 = arith.mulf %109, %108 : vector<1x512xf32>
    %111 = arith.addf %100, %110 : vector<1x512xf32>
    %c0_91 = arith.constant 0 : index
    %c61 = arith.constant 61 : index
    %112 = vector.load %arg14[%c0_91, %c61] : memref<2x768xf32, #tpu.memory_space<vmem>>, vector<2x512xf32>
    %c0_92 = arith.constant 0 : index
    %c2 = arith.constant 2 : index
    %113 = memref.load %arg11[%c0_92, %c2] : memref<2x49xf32, #tpu.memory_space<smem>>
    %114 = vector.extract_strided_slice %112 {offsets = [0, 0], sizes = [1, 512], strides = [1, 1]} : vector<2x512xf32> to vector<1x512xf32>
    %115 = vector.broadcast %113 : f32 to vector<1x512xf32>
    %116 = arith.mulf %115, %114 : vector<1x512xf32>
    %117 = arith.addf %106, %116 : vector<1x512xf32>
    %c1_93 = arith.constant 1 : index
    %c2_94 = arith.constant 2 : index
    %118 = memref.load %arg11[%c1_93, %c2_94] : memref<2x49xf32, #tpu.memory_space<smem>>
    %119 = vector.extract_strided_slice %112 {offsets = [1, 0], sizes = [1, 512], strides = [1, 1]} : vector<2x512xf32> to vector<1x512xf32>
    %120 = vector.broadcast %118 : f32 to vector<1x512xf32>
    %121 = arith.mulf %120, %119 : vector<1x512xf32>
    %122 = arith.addf %111, %121 : vector<1x512xf32>
    %c0_95 = arith.constant 0 : index
    %c62 = arith.constant 62 : index
    %123 = vector.load %arg14[%c0_95, %c62] : memref<2x768xf32, #tpu.memory_space<vmem>>, vector<2x512xf32>
    %c0_96 = arith.constant 0 : index
    %c3 = arith.constant 3 : index
    %124 = memref.load %arg11[%c0_96, %c3] : memref<2x49xf32, #tpu.memory_space<smem>>
    %125 = vector.extract_strided_slice %123 {offsets = [0, 0], sizes = [1, 512], strides = [1, 1]} : vector<2x512xf32> to vector<1x512xf32>
    %126 = vector.broadcast %124 : f32 to vector<1x512xf32>
    %127 = arith.mulf %126, %125 : vector<1x512xf32>
    %128 = arith.addf %117, %127 : vector<1x512xf32>
    %c1_97 = arith.constant 1 : index
    %c3_98 = arith.constant 3 : index
    %129 = memref.load %arg11[%c1_97, %c3_98] : memref<2x49xf32, #tpu.memory_space<smem>>
    %130 = vector.extract_strided_slice %123 {offsets = [1, 0], sizes = [1, 512], strides = [1, 1]} : vector<2x512xf32> to vector<1x512xf32>
    %131 = vector.broadcast %129 : f32 to vector<1x512xf32>
    %132 = arith.mulf %131, %130 : vector<1x512xf32>
    %133 = arith.addf %122, %132 : vector<1x512xf32>
    %c0_99 = arith.constant 0 : index
    %c63 = arith.constant 63 : index
    %134 = vector.load %arg14[%c0_99, %c63] : memref<2x768xf32, #tpu.memory_space<vmem>>, vector<2x512xf32>
    %c0_100 = arith.constant 0 : index
    %c4 = arith.constant 4 : index
    %135 = memref.load %arg11[%c0_100, %c4] : memref<2x49xf32, #tpu.memory_space<smem>>
    %136 = vector.extract_strided_slice %134 {offsets = [0, 0], sizes = [1, 512], strides = [1, 1]} : vector<2x512xf32> to vector<1x512xf32>
    %137 = vector.broadcast %135 : f32 to vector<1x512xf32>
    %138 = arith.mulf %137, %136 : vector<1x512xf32>
    %139 = arith.addf %128, %138 : vector<1x512xf32>
    %c1_101 = arith.constant 1 : index
    %c4_102 = arith.constant 4 : index
    %140 = memref.load %arg11[%c1_101, %c4_102] : memref<2x49xf32, #tpu.memory_space<smem>>
    %141 = vector.extract_strided_slice %134 {offsets = [1, 0], sizes = [1, 512], strides = [1, 1]} : vector<2x512xf32> to vector<1x512xf32>
    %142 = vector.broadcast %140 : f32 to vector<1x512xf32>
    %143 = arith.mulf %142, %141 : vector<1x512xf32>
    %144 = arith.addf %133, %143 : vector<1x512xf32>
    %c0_103 = arith.constant 0 : index
    %c64 = arith.constant 64 : index
    %145 = vector.load %arg14[%c0_103, %c64] : memref<2x768xf32, #tpu.memory_space<vmem>>, vector<2x512xf32>
    %c0_104 = arith.constant 0 : index
    %c5 = arith.constant 5 : index
    %146 = memref.load %arg11[%c0_104, %c5] : memref<2x49xf32, #tpu.memory_space<smem>>
    %147 = vector.extract_strided_slice %145 {offsets = [0, 0], sizes = [1, 512], strides = [1, 1]} : vector<2x512xf32> to vector<1x512xf32>
    %148 = vector.broadcast %146 : f32 to vector<1x512xf32>
    %149 = arith.mulf %148, %147 : vector<1x512xf32>
    %150 = arith.addf %139, %149 : vector<1x512xf32>
    %c1_105 = arith.constant 1 : index
    %c5_106 = arith.constant 5 : index
    %151 = memref.load %arg11[%c1_105, %c5_106] : memref<2x49xf32, #tpu.memory_space<smem>>
    %152 = vector.extract_strided_slice %145 {offsets = [1, 0], sizes = [1, 512], strides = [1, 1]} : vector<2x512xf32> to vector<1x512xf32>
    %153 = vector.broadcast %151 : f32 to vector<1x512xf32>
    %154 = arith.mulf %153, %152 : vector<1x512xf32>
    %155 = arith.addf %144, %154 : vector<1x512xf32>
    %c0_107 = arith.constant 0 : index
    %c65 = arith.constant 65 : index
    %156 = vector.load %arg14[%c0_107, %c65] : memref<2x768xf32, #tpu.memory_space<vmem>>, vector<2x512xf32>
    %c0_108 = arith.constant 0 : index
    %c6 = arith.constant 6 : index
    %157 = memref.load %arg11[%c0_108, %c6] : memref<2x49xf32, #tpu.memory_space<smem>>
    %158 = vector.extract_strided_slice %156 {offsets = [0, 0], sizes = [1, 512], strides = [1, 1]} : vector<2x512xf32> to vector<1x512xf32>
    %159 = vector.broadcast %157 : f32 to vector<1x512xf32>
    %160 = arith.mulf %159, %158 : vector<1x512xf32>
    %161 = arith.addf %150, %160 : vector<1x512xf32>
    %c1_109 = arith.constant 1 : index
    %c6_110 = arith.constant 6 : index
    %162 = memref.load %arg11[%c1_109, %c6_110] : memref<2x49xf32, #tpu.memory_space<smem>>
    %163 = vector.extract_strided_slice %156 {offsets = [1, 0], sizes = [1, 512], strides = [1, 1]} : vector<2x512xf32> to vector<1x512xf32>
    %164 = vector.broadcast %162 : f32 to vector<1x512xf32>
    %165 = arith.mulf %164, %163 : vector<1x512xf32>
    %166 = arith.addf %155, %165 : vector<1x512xf32>
    %c0_111 = arith.constant 0 : index
    %c81 = arith.constant 81 : index
    %167 = vector.load %arg14[%c0_111, %c81] : memref<2x768xf32, #tpu.memory_space<vmem>>, vector<2x512xf32>
    %c0_112 = arith.constant 0 : index
    %c7 = arith.constant 7 : index
    %168 = memref.load %arg11[%c0_112, %c7] : memref<2x49xf32, #tpu.memory_space<smem>>
    %169 = vector.extract_strided_slice %167 {offsets = [0, 0], sizes = [1, 512], strides = [1, 1]} : vector<2x512xf32> to vector<1x512xf32>
    %170 = vector.broadcast %168 : f32 to vector<1x512xf32>
    %171 = arith.mulf %170, %169 : vector<1x512xf32>
    %172 = arith.addf %161, %171 : vector<1x512xf32>
    %c1_113 = arith.constant 1 : index
    %c7_114 = arith.constant 7 : index
    %173 = memref.load %arg11[%c1_113, %c7_114] : memref<2x49xf32, #tpu.memory_space<smem>>
    %174 = vector.extract_strided_slice %167 {offsets = [1, 0], sizes = [1, 512], strides = [1, 1]} : vector<2x512xf32> to vector<1x512xf32>
    %175 = vector.broadcast %173 : f32 to vector<1x512xf32>
    %176 = arith.mulf %175, %174 : vector<1x512xf32>
    %177 = arith.addf %166, %176 : vector<1x512xf32>
    %c0_115 = arith.constant 0 : index
    %c82 = arith.constant 82 : index
    %178 = vector.load %arg14[%c0_115, %c82] : memref<2x768xf32, #tpu.memory_space<vmem>>, vector<2x512xf32>
    %c0_116 = arith.constant 0 : index
    %c8 = arith.constant 8 : index
    %179 = memref.load %arg11[%c0_116, %c8] : memref<2x49xf32, #tpu.memory_space<smem>>
    %180 = vector.extract_strided_slice %178 {offsets = [0, 0], sizes = [1, 512], strides = [1, 1]} : vector<2x512xf32> to vector<1x512xf32>
    %181 = vector.broadcast %179 : f32 to vector<1x512xf32>
    %182 = arith.mulf %181, %180 : vector<1x512xf32>
    %183 = arith.addf %172, %182 : vector<1x512xf32>
    %c1_117 = arith.constant 1 : index
    %c8_118 = arith.constant 8 : index
    %184 = memref.load %arg11[%c1_117, %c8_118] : memref<2x49xf32, #tpu.memory_space<smem>>
    %185 = vector.extract_strided_slice %178 {offsets = [1, 0], sizes = [1, 512], strides = [1, 1]} : vector<2x512xf32> to vector<1x512xf32>
    %186 = vector.broadcast %184 : f32 to vector<1x512xf32>
    %187 = arith.mulf %186, %185 : vector<1x512xf32>
    %188 = arith.addf %177, %187 : vector<1x512xf32>
    %c0_119 = arith.constant 0 : index
    %c83 = arith.constant 83 : index
    %189 = vector.load %arg14[%c0_119, %c83] : memref<2x768xf32, #tpu.memory_space<vmem>>, vector<2x512xf32>
    %c0_120 = arith.constant 0 : index
    %c9 = arith.constant 9 : index
    %190 = memref.load %arg11[%c0_120, %c9] : memref<2x49xf32, #tpu.memory_space<smem>>
    %191 = vector.extract_strided_slice %189 {offsets = [0, 0], sizes = [1, 512], strides = [1, 1]} : vector<2x512xf32> to vector<1x512xf32>
    %192 = vector.broadcast %190 : f32 to vector<1x512xf32>
    %193 = arith.mulf %192, %191 : vector<1x512xf32>
    %194 = arith.addf %183, %193 : vector<1x512xf32>
    %c1_121 = arith.constant 1 : index
    %c9_122 = arith.constant 9 : index
    %195 = memref.load %arg11[%c1_121, %c9_122] : memref<2x49xf32, #tpu.memory_space<smem>>
    %196 = vector.extract_strided_slice %189 {offsets = [1, 0], sizes = [1, 512], strides = [1, 1]} : vector<2x512xf32> to vector<1x512xf32>
    %197 = vector.broadcast %195 : f32 to vector<1x512xf32>
    %198 = arith.mulf %197, %196 : vector<1x512xf32>
    %199 = arith.addf %188, %198 : vector<1x512xf32>
    %c0_123 = arith.constant 0 : index
    %c84 = arith.constant 84 : index
    %200 = vector.load %arg14[%c0_123, %c84] : memref<2x768xf32, #tpu.memory_space<vmem>>, vector<2x512xf32>
    %c0_124 = arith.constant 0 : index
    %c10 = arith.constant 10 : index
    %201 = memref.load %arg11[%c0_124, %c10] : memref<2x49xf32, #tpu.memory_space<smem>>
    %202 = vector.extract_strided_slice %200 {offsets = [0, 0], sizes = [1, 512], strides = [1, 1]} : vector<2x512xf32> to vector<1x512xf32>
    %203 = vector.broadcast %201 : f32 to vector<1x512xf32>
    %204 = arith.mulf %203, %202 : vector<1x512xf32>
    %205 = arith.addf %194, %204 : vector<1x512xf32>
    %c1_125 = arith.constant 1 : index
    %c10_126 = arith.constant 10 : index
    %206 = memref.load %arg11[%c1_125, %c10_126] : memref<2x49xf32, #tpu.memory_space<smem>>
    %207 = vector.extract_strided_slice %200 {offsets = [1, 0], sizes = [1, 512], strides = [1, 1]} : vector<2x512xf32> to vector<1x512xf32>
    %208 = vector.broadcast %206 : f32 to vector<1x512xf32>
    %209 = arith.mulf %208, %207 : vector<1x512xf32>
    %210 = arith.addf %199, %209 : vector<1x512xf32>
    %c0_127 = arith.constant 0 : index
    %c85 = arith.constant 85 : index
    %211 = vector.load %arg14[%c0_127, %c85] : memref<2x768xf32, #tpu.memory_space<vmem>>, vector<2x512xf32>
    %c0_128 = arith.constant 0 : index
    %c11 = arith.constant 11 : index
    %212 = memref.load %arg11[%c0_128, %c11] : memref<2x49xf32, #tpu.memory_space<smem>>
    %213 = vector.extract_strided_slice %211 {offsets = [0, 0], sizes = [1, 512], strides = [1, 1]} : vector<2x512xf32> to vector<1x512xf32>
    %214 = vector.broadcast %212 : f32 to vector<1x512xf32>
    %215 = arith.mulf %214, %213 : vector<1x512xf32>
    %216 = arith.addf %205, %215 : vector<1x512xf32>
    %c1_129 = arith.constant 1 : index
    %c11_130 = arith.constant 11 : index
    %217 = memref.load %arg11[%c1_129, %c11_130] : memref<2x49xf32, #tpu.memory_space<smem>>
    %218 = vector.extract_strided_slice %211 {offsets = [1, 0], sizes = [1, 512], strides = [1, 1]} : vector<2x512xf32> to vector<1x512xf32>
    %219 = vector.broadcast %217 : f32 to vector<1x512xf32>
    %220 = arith.mulf %219, %218 : vector<1x512xf32>
    %221 = arith.addf %210, %220 : vector<1x512xf32>
    %c0_131 = arith.constant 0 : index
    %c86 = arith.constant 86 : index
    %222 = vector.load %arg14[%c0_131, %c86] : memref<2x768xf32, #tpu.memory_space<vmem>>, vector<2x512xf32>
    %c0_132 = arith.constant 0 : index
    %c12 = arith.constant 12 : index
    %223 = memref.load %arg11[%c0_132, %c12] : memref<2x49xf32, #tpu.memory_space<smem>>
    %224 = vector.extract_strided_slice %222 {offsets = [0, 0], sizes = [1, 512], strides = [1, 1]} : vector<2x512xf32> to vector<1x512xf32>
    %225 = vector.broadcast %223 : f32 to vector<1x512xf32>
    %226 = arith.mulf %225, %224 : vector<1x512xf32>
    %227 = arith.addf %216, %226 : vector<1x512xf32>
    %c1_133 = arith.constant 1 : index
    %c12_134 = arith.constant 12 : index
    %228 = memref.load %arg11[%c1_133, %c12_134] : memref<2x49xf32, #tpu.memory_space<smem>>
    %229 = vector.extract_strided_slice %222 {offsets = [1, 0], sizes = [1, 512], strides = [1, 1]} : vector<2x512xf32> to vector<1x512xf32>
    %230 = vector.broadcast %228 : f32 to vector<1x512xf32>
    %231 = arith.mulf %230, %229 : vector<1x512xf32>
    %232 = arith.addf %221, %231 : vector<1x512xf32>
    %c0_135 = arith.constant 0 : index
    %c87 = arith.constant 87 : index
    %233 = vector.load %arg14[%c0_135, %c87] : memref<2x768xf32, #tpu.memory_space<vmem>>, vector<2x512xf32>
    %c0_136 = arith.constant 0 : index
    %c13 = arith.constant 13 : index
    %234 = memref.load %arg11[%c0_136, %c13] : memref<2x49xf32, #tpu.memory_space<smem>>
    %235 = vector.extract_strided_slice %233 {offsets = [0, 0], sizes = [1, 512], strides = [1, 1]} : vector<2x512xf32> to vector<1x512xf32>
    %236 = vector.broadcast %234 : f32 to vector<1x512xf32>
    %237 = arith.mulf %236, %235 : vector<1x512xf32>
    %238 = arith.addf %227, %237 : vector<1x512xf32>
    %c1_137 = arith.constant 1 : index
    %c13_138 = arith.constant 13 : index
    %239 = memref.load %arg11[%c1_137, %c13_138] : memref<2x49xf32, #tpu.memory_space<smem>>
    %240 = vector.extract_strided_slice %233 {offsets = [1, 0], sizes = [1, 512], strides = [1, 1]} : vector<2x512xf32> to vector<1x512xf32>
    %241 = vector.broadcast %239 : f32 to vector<1x512xf32>
    %242 = arith.mulf %241, %240 : vector<1x512xf32>
    %243 = arith.addf %232, %242 : vector<1x512xf32>
    %c0_139 = arith.constant 0 : index
    %c103 = arith.constant 103 : index
    %244 = vector.load %arg14[%c0_139, %c103] : memref<2x768xf32, #tpu.memory_space<vmem>>, vector<2x512xf32>
    %c0_140 = arith.constant 0 : index
    %c14 = arith.constant 14 : index
    %245 = memref.load %arg11[%c0_140, %c14] : memref<2x49xf32, #tpu.memory_space<smem>>
    %246 = vector.extract_strided_slice %244 {offsets = [0, 0], sizes = [1, 512], strides = [1, 1]} : vector<2x512xf32> to vector<1x512xf32>
    %247 = vector.broadcast %245 : f32 to vector<1x512xf32>
    %248 = arith.mulf %247, %246 : vector<1x512xf32>
    %249 = arith.addf %238, %248 : vector<1x512xf32>
    %c1_141 = arith.constant 1 : index
    %c14_142 = arith.constant 14 : index
    %250 = memref.load %arg11[%c1_141, %c14_142] : memref<2x49xf32, #tpu.memory_space<smem>>
    %251 = vector.extract_strided_slice %244 {offsets = [1, 0], sizes = [1, 512], strides = [1, 1]} : vector<2x512xf32> to vector<1x512xf32>
    %252 = vector.broadcast %250 : f32 to vector<1x512xf32>
    %253 = arith.mulf %252, %251 : vector<1x512xf32>
    %254 = arith.addf %243, %253 : vector<1x512xf32>
    %c0_143 = arith.constant 0 : index
    %c104 = arith.constant 104 : index
    %255 = vector.load %arg14[%c0_143, %c104] : memref<2x768xf32, #tpu.memory_space<vmem>>, vector<2x512xf32>
    %c0_144 = arith.constant 0 : index
    %c15 = arith.constant 15 : index
    %256 = memref.load %arg11[%c0_144, %c15] : memref<2x49xf32, #tpu.memory_space<smem>>
    %257 = vector.extract_strided_slice %255 {offsets = [0, 0], sizes = [1, 512], strides = [1, 1]} : vector<2x512xf32> to vector<1x512xf32>
    %258 = vector.broadcast %256 : f32 to vector<1x512xf32>
    %259 = arith.mulf %258, %257 : vector<1x512xf32>
    %260 = arith.addf %249, %259 : vector<1x512xf32>
    %c1_145 = arith.constant 1 : index
    %c15_146 = arith.constant 15 : index
    %261 = memref.load %arg11[%c1_145, %c15_146] : memref<2x49xf32, #tpu.memory_space<smem>>
    %262 = vector.extract_strided_slice %255 {offsets = [1, 0], sizes = [1, 512], strides = [1, 1]} : vector<2x512xf32> to vector<1x512xf32>
    %263 = vector.broadcast %261 : f32 to vector<1x512xf32>
    %264 = arith.mulf %263, %262 : vector<1x512xf32>
    %265 = arith.addf %254, %264 : vector<1x512xf32>
    %c0_147 = arith.constant 0 : index
    %c105_148 = arith.constant 105 : index
    %266 = vector.load %arg14[%c0_147, %c105_148] : memref<2x768xf32, #tpu.memory_space<vmem>>, vector<2x512xf32>
    %c0_149 = arith.constant 0 : index
    %c16 = arith.constant 16 : index
    %267 = memref.load %arg11[%c0_149, %c16] : memref<2x49xf32, #tpu.memory_space<smem>>
    %268 = vector.extract_strided_slice %266 {offsets = [0, 0], sizes = [1, 512], strides = [1, 1]} : vector<2x512xf32> to vector<1x512xf32>
    %269 = vector.broadcast %267 : f32 to vector<1x512xf32>
    %270 = arith.mulf %269, %268 : vector<1x512xf32>
    %271 = arith.addf %260, %270 : vector<1x512xf32>
    %c1_150 = arith.constant 1 : index
    %c16_151 = arith.constant 16 : index
    %272 = memref.load %arg11[%c1_150, %c16_151] : memref<2x49xf32, #tpu.memory_space<smem>>
    %273 = vector.extract_strided_slice %266 {offsets = [1, 0], sizes = [1, 512], strides = [1, 1]} : vector<2x512xf32> to vector<1x512xf32>
    %274 = vector.broadcast %272 : f32 to vector<1x512xf32>
    %275 = arith.mulf %274, %273 : vector<1x512xf32>
    %276 = arith.addf %265, %275 : vector<1x512xf32>
    %c0_152 = arith.constant 0 : index
    %c106_153 = arith.constant 106 : index
    %277 = vector.load %arg14[%c0_152, %c106_153] : memref<2x768xf32, #tpu.memory_space<vmem>>, vector<2x512xf32>
    %c0_154 = arith.constant 0 : index
    %c17 = arith.constant 17 : index
    %278 = memref.load %arg11[%c0_154, %c17] : memref<2x49xf32, #tpu.memory_space<smem>>
    %279 = vector.extract_strided_slice %277 {offsets = [0, 0], sizes = [1, 512], strides = [1, 1]} : vector<2x512xf32> to vector<1x512xf32>
    %280 = vector.broadcast %278 : f32 to vector<1x512xf32>
    %281 = arith.mulf %280, %279 : vector<1x512xf32>
    %282 = arith.addf %271, %281 : vector<1x512xf32>
    %c1_155 = arith.constant 1 : index
    %c17_156 = arith.constant 17 : index
    %283 = memref.load %arg11[%c1_155, %c17_156] : memref<2x49xf32, #tpu.memory_space<smem>>
    %284 = vector.extract_strided_slice %277 {offsets = [1, 0], sizes = [1, 512], strides = [1, 1]} : vector<2x512xf32> to vector<1x512xf32>
    %285 = vector.broadcast %283 : f32 to vector<1x512xf32>
    %286 = arith.mulf %285, %284 : vector<1x512xf32>
    %287 = arith.addf %276, %286 : vector<1x512xf32>
    %c0_157 = arith.constant 0 : index
    %c107_158 = arith.constant 107 : index
    %288 = vector.load %arg14[%c0_157, %c107_158] : memref<2x768xf32, #tpu.memory_space<vmem>>, vector<2x512xf32>
    %c0_159 = arith.constant 0 : index
    %c18 = arith.constant 18 : index
    %289 = memref.load %arg11[%c0_159, %c18] : memref<2x49xf32, #tpu.memory_space<smem>>
    %290 = vector.extract_strided_slice %288 {offsets = [0, 0], sizes = [1, 512], strides = [1, 1]} : vector<2x512xf32> to vector<1x512xf32>
    %291 = vector.broadcast %289 : f32 to vector<1x512xf32>
    %292 = arith.mulf %291, %290 : vector<1x512xf32>
    %293 = arith.addf %282, %292 : vector<1x512xf32>
    %c1_160 = arith.constant 1 : index
    %c18_161 = arith.constant 18 : index
    %294 = memref.load %arg11[%c1_160, %c18_161] : memref<2x49xf32, #tpu.memory_space<smem>>
    %295 = vector.extract_strided_slice %288 {offsets = [1, 0], sizes = [1, 512], strides = [1, 1]} : vector<2x512xf32> to vector<1x512xf32>
    %296 = vector.broadcast %294 : f32 to vector<1x512xf32>
    %297 = arith.mulf %296, %295 : vector<1x512xf32>
    %298 = arith.addf %287, %297 : vector<1x512xf32>
    %c0_162 = arith.constant 0 : index
    %c108 = arith.constant 108 : index
    %299 = vector.load %arg14[%c0_162, %c108] : memref<2x768xf32, #tpu.memory_space<vmem>>, vector<2x512xf32>
    %c0_163 = arith.constant 0 : index
    %c19 = arith.constant 19 : index
    %300 = memref.load %arg11[%c0_163, %c19] : memref<2x49xf32, #tpu.memory_space<smem>>
    %301 = vector.extract_strided_slice %299 {offsets = [0, 0], sizes = [1, 512], strides = [1, 1]} : vector<2x512xf32> to vector<1x512xf32>
    %302 = vector.broadcast %300 : f32 to vector<1x512xf32>
    %303 = arith.mulf %302, %301 : vector<1x512xf32>
    %304 = arith.addf %293, %303 : vector<1x512xf32>
    %c1_164 = arith.constant 1 : index
    %c19_165 = arith.constant 19 : index
    %305 = memref.load %arg11[%c1_164, %c19_165] : memref<2x49xf32, #tpu.memory_space<smem>>
    %306 = vector.extract_strided_slice %299 {offsets = [1, 0], sizes = [1, 512], strides = [1, 1]} : vector<2x512xf32> to vector<1x512xf32>
    %307 = vector.broadcast %305 : f32 to vector<1x512xf32>
    %308 = arith.mulf %307, %306 : vector<1x512xf32>
    %309 = arith.addf %298, %308 : vector<1x512xf32>
    %c0_166 = arith.constant 0 : index
    %c109 = arith.constant 109 : index
    %310 = vector.load %arg14[%c0_166, %c109] : memref<2x768xf32, #tpu.memory_space<vmem>>, vector<2x512xf32>
    %c0_167 = arith.constant 0 : index
    %c20 = arith.constant 20 : index
    %311 = memref.load %arg11[%c0_167, %c20] : memref<2x49xf32, #tpu.memory_space<smem>>
    %312 = vector.extract_strided_slice %310 {offsets = [0, 0], sizes = [1, 512], strides = [1, 1]} : vector<2x512xf32> to vector<1x512xf32>
    %313 = vector.broadcast %311 : f32 to vector<1x512xf32>
    %314 = arith.mulf %313, %312 : vector<1x512xf32>
    %315 = arith.addf %304, %314 : vector<1x512xf32>
    %c1_168 = arith.constant 1 : index
    %c20_169 = arith.constant 20 : index
    %316 = memref.load %arg11[%c1_168, %c20_169] : memref<2x49xf32, #tpu.memory_space<smem>>
    %317 = vector.extract_strided_slice %310 {offsets = [1, 0], sizes = [1, 512], strides = [1, 1]} : vector<2x512xf32> to vector<1x512xf32>
    %318 = vector.broadcast %316 : f32 to vector<1x512xf32>
    %319 = arith.mulf %318, %317 : vector<1x512xf32>
    %320 = arith.addf %309, %319 : vector<1x512xf32>
    %c0_170 = arith.constant 0 : index
    %c125 = arith.constant 125 : index
    %321 = vector.load %arg14[%c0_170, %c125] : memref<2x768xf32, #tpu.memory_space<vmem>>, vector<2x512xf32>
    %c0_171 = arith.constant 0 : index
    %c21 = arith.constant 21 : index
    %322 = memref.load %arg11[%c0_171, %c21] : memref<2x49xf32, #tpu.memory_space<smem>>
    %323 = vector.extract_strided_slice %321 {offsets = [0, 0], sizes = [1, 512], strides = [1, 1]} : vector<2x512xf32> to vector<1x512xf32>
    %324 = vector.broadcast %322 : f32 to vector<1x512xf32>
    %325 = arith.mulf %324, %323 : vector<1x512xf32>
    %326 = arith.addf %315, %325 : vector<1x512xf32>
    %c1_172 = arith.constant 1 : index
    %c21_173 = arith.constant 21 : index
    %327 = memref.load %arg11[%c1_172, %c21_173] : memref<2x49xf32, #tpu.memory_space<smem>>
    %328 = vector.extract_strided_slice %321 {offsets = [1, 0], sizes = [1, 512], strides = [1, 1]} : vector<2x512xf32> to vector<1x512xf32>
    %329 = vector.broadcast %327 : f32 to vector<1x512xf32>
    %330 = arith.mulf %329, %328 : vector<1x512xf32>
    %331 = arith.addf %320, %330 : vector<1x512xf32>
    %c0_174 = arith.constant 0 : index
    %c126 = arith.constant 126 : index
    %332 = vector.load %arg14[%c0_174, %c126] : memref<2x768xf32, #tpu.memory_space<vmem>>, vector<2x512xf32>
    %c0_175 = arith.constant 0 : index
    %c22 = arith.constant 22 : index
    %333 = memref.load %arg11[%c0_175, %c22] : memref<2x49xf32, #tpu.memory_space<smem>>
    %334 = vector.extract_strided_slice %332 {offsets = [0, 0], sizes = [1, 512], strides = [1, 1]} : vector<2x512xf32> to vector<1x512xf32>
    %335 = vector.broadcast %333 : f32 to vector<1x512xf32>
    %336 = arith.mulf %335, %334 : vector<1x512xf32>
    %337 = arith.addf %326, %336 : vector<1x512xf32>
    %c1_176 = arith.constant 1 : index
    %c22_177 = arith.constant 22 : index
    %338 = memref.load %arg11[%c1_176, %c22_177] : memref<2x49xf32, #tpu.memory_space<smem>>
    %339 = vector.extract_strided_slice %332 {offsets = [1, 0], sizes = [1, 512], strides = [1, 1]} : vector<2x512xf32> to vector<1x512xf32>
    %340 = vector.broadcast %338 : f32 to vector<1x512xf32>
    %341 = arith.mulf %340, %339 : vector<1x512xf32>
    %342 = arith.addf %331, %341 : vector<1x512xf32>
    %c0_178 = arith.constant 0 : index
    %c127_179 = arith.constant 127 : index
    %343 = vector.load %arg14[%c0_178, %c127_179] : memref<2x768xf32, #tpu.memory_space<vmem>>, vector<2x512xf32>
    %c0_180 = arith.constant 0 : index
    %c23 = arith.constant 23 : index
    %344 = memref.load %arg11[%c0_180, %c23] : memref<2x49xf32, #tpu.memory_space<smem>>
    %345 = vector.extract_strided_slice %343 {offsets = [0, 0], sizes = [1, 512], strides = [1, 1]} : vector<2x512xf32> to vector<1x512xf32>
    %346 = vector.broadcast %344 : f32 to vector<1x512xf32>
    %347 = arith.mulf %346, %345 : vector<1x512xf32>
    %348 = arith.addf %337, %347 : vector<1x512xf32>
    %c1_181 = arith.constant 1 : index
    %c23_182 = arith.constant 23 : index
    %349 = memref.load %arg11[%c1_181, %c23_182] : memref<2x49xf32, #tpu.memory_space<smem>>
    %350 = vector.extract_strided_slice %343 {offsets = [1, 0], sizes = [1, 512], strides = [1, 1]} : vector<2x512xf32> to vector<1x512xf32>
    %351 = vector.broadcast %349 : f32 to vector<1x512xf32>
    %352 = arith.mulf %351, %350 : vector<1x512xf32>
    %353 = arith.addf %342, %352 : vector<1x512xf32>
    %c0_183 = arith.constant 0 : index
    %c128_184 = arith.constant 128 : index
    %354 = vector.load %arg14[%c0_183, %c128_184] : memref<2x768xf32, #tpu.memory_space<vmem>>, vector<2x512xf32>
    %c0_185 = arith.constant 0 : index
    %c24 = arith.constant 24 : index
    %355 = memref.load %arg11[%c0_185, %c24] : memref<2x49xf32, #tpu.memory_space<smem>>
    %356 = vector.extract_strided_slice %354 {offsets = [0, 0], sizes = [1, 512], strides = [1, 1]} : vector<2x512xf32> to vector<1x512xf32>
    %357 = vector.broadcast %355 : f32 to vector<1x512xf32>
    %358 = arith.mulf %357, %356 : vector<1x512xf32>
    %359 = arith.addf %348, %358 : vector<1x512xf32>
    %c1_186 = arith.constant 1 : index
    %c24_187 = arith.constant 24 : index
    %360 = memref.load %arg11[%c1_186, %c24_187] : memref<2x49xf32, #tpu.memory_space<smem>>
    %361 = vector.extract_strided_slice %354 {offsets = [1, 0], sizes = [1, 512], strides = [1, 1]} : vector<2x512xf32> to vector<1x512xf32>
    %362 = vector.broadcast %360 : f32 to vector<1x512xf32>
    %363 = arith.mulf %362, %361 : vector<1x512xf32>
    %364 = arith.addf %353, %363 : vector<1x512xf32>
    %c0_188 = arith.constant 0 : index
    %c129_189 = arith.constant 129 : index
    %365 = vector.load %arg14[%c0_188, %c129_189] : memref<2x768xf32, #tpu.memory_space<vmem>>, vector<2x512xf32>
    %c0_190 = arith.constant 0 : index
    %c25 = arith.constant 25 : index
    %366 = memref.load %arg11[%c0_190, %c25] : memref<2x49xf32, #tpu.memory_space<smem>>
    %367 = vector.extract_strided_slice %365 {offsets = [0, 0], sizes = [1, 512], strides = [1, 1]} : vector<2x512xf32> to vector<1x512xf32>
    %368 = vector.broadcast %366 : f32 to vector<1x512xf32>
    %369 = arith.mulf %368, %367 : vector<1x512xf32>
    %370 = arith.addf %359, %369 : vector<1x512xf32>
    %c1_191 = arith.constant 1 : index
    %c25_192 = arith.constant 25 : index
    %371 = memref.load %arg11[%c1_191, %c25_192] : memref<2x49xf32, #tpu.memory_space<smem>>
    %372 = vector.extract_strided_slice %365 {offsets = [1, 0], sizes = [1, 512], strides = [1, 1]} : vector<2x512xf32> to vector<1x512xf32>
    %373 = vector.broadcast %371 : f32 to vector<1x512xf32>
    %374 = arith.mulf %373, %372 : vector<1x512xf32>
    %375 = arith.addf %364, %374 : vector<1x512xf32>
    %c0_193 = arith.constant 0 : index
    %c130 = arith.constant 130 : index
    %376 = vector.load %arg14[%c0_193, %c130] : memref<2x768xf32, #tpu.memory_space<vmem>>, vector<2x512xf32>
    %c0_194 = arith.constant 0 : index
    %c26 = arith.constant 26 : index
    %377 = memref.load %arg11[%c0_194, %c26] : memref<2x49xf32, #tpu.memory_space<smem>>
    %378 = vector.extract_strided_slice %376 {offsets = [0, 0], sizes = [1, 512], strides = [1, 1]} : vector<2x512xf32> to vector<1x512xf32>
    %379 = vector.broadcast %377 : f32 to vector<1x512xf32>
    %380 = arith.mulf %379, %378 : vector<1x512xf32>
    %381 = arith.addf %370, %380 : vector<1x512xf32>
    %c1_195 = arith.constant 1 : index
    %c26_196 = arith.constant 26 : index
    %382 = memref.load %arg11[%c1_195, %c26_196] : memref<2x49xf32, #tpu.memory_space<smem>>
    %383 = vector.extract_strided_slice %376 {offsets = [1, 0], sizes = [1, 512], strides = [1, 1]} : vector<2x512xf32> to vector<1x512xf32>
    %384 = vector.broadcast %382 : f32 to vector<1x512xf32>
    %385 = arith.mulf %384, %383 : vector<1x512xf32>
    %386 = arith.addf %375, %385 : vector<1x512xf32>
    %c0_197 = arith.constant 0 : index
    %c131 = arith.constant 131 : index
    %387 = vector.load %arg14[%c0_197, %c131] : memref<2x768xf32, #tpu.memory_space<vmem>>, vector<2x512xf32>
    %c0_198 = arith.constant 0 : index
    %c27 = arith.constant 27 : index
    %388 = memref.load %arg11[%c0_198, %c27] : memref<2x49xf32, #tpu.memory_space<smem>>
    %389 = vector.extract_strided_slice %387 {offsets = [0, 0], sizes = [1, 512], strides = [1, 1]} : vector<2x512xf32> to vector<1x512xf32>
    %390 = vector.broadcast %388 : f32 to vector<1x512xf32>
    %391 = arith.mulf %390, %389 : vector<1x512xf32>
    %392 = arith.addf %381, %391 : vector<1x512xf32>
    %c1_199 = arith.constant 1 : index
    %c27_200 = arith.constant 27 : index
    %393 = memref.load %arg11[%c1_199, %c27_200] : memref<2x49xf32, #tpu.memory_space<smem>>
    %394 = vector.extract_strided_slice %387 {offsets = [1, 0], sizes = [1, 512], strides = [1, 1]} : vector<2x512xf32> to vector<1x512xf32>
    %395 = vector.broadcast %393 : f32 to vector<1x512xf32>
    %396 = arith.mulf %395, %394 : vector<1x512xf32>
    %397 = arith.addf %386, %396 : vector<1x512xf32>
    %c0_201 = arith.constant 0 : index
    %c147 = arith.constant 147 : index
    %398 = vector.load %arg14[%c0_201, %c147] : memref<2x768xf32, #tpu.memory_space<vmem>>, vector<2x512xf32>
    %c0_202 = arith.constant 0 : index
    %c28 = arith.constant 28 : index
    %399 = memref.load %arg11[%c0_202, %c28] : memref<2x49xf32, #tpu.memory_space<smem>>
    %400 = vector.extract_strided_slice %398 {offsets = [0, 0], sizes = [1, 512], strides = [1, 1]} : vector<2x512xf32> to vector<1x512xf32>
    %401 = vector.broadcast %399 : f32 to vector<1x512xf32>
    %402 = arith.mulf %401, %400 : vector<1x512xf32>
    %403 = arith.addf %392, %402 : vector<1x512xf32>
    %c1_203 = arith.constant 1 : index
    %c28_204 = arith.constant 28 : index
    %404 = memref.load %arg11[%c1_203, %c28_204] : memref<2x49xf32, #tpu.memory_space<smem>>
    %405 = vector.extract_strided_slice %398 {offsets = [1, 0], sizes = [1, 512], strides = [1, 1]} : vector<2x512xf32> to vector<1x512xf32>
    %406 = vector.broadcast %404 : f32 to vector<1x512xf32>
    %407 = arith.mulf %406, %405 : vector<1x512xf32>
    %408 = arith.addf %397, %407 : vector<1x512xf32>
    %c0_205 = arith.constant 0 : index
    %c148 = arith.constant 148 : index
    %409 = vector.load %arg14[%c0_205, %c148] : memref<2x768xf32, #tpu.memory_space<vmem>>, vector<2x512xf32>
    %c0_206 = arith.constant 0 : index
    %c29 = arith.constant 29 : index
    %410 = memref.load %arg11[%c0_206, %c29] : memref<2x49xf32, #tpu.memory_space<smem>>
    %411 = vector.extract_strided_slice %409 {offsets = [0, 0], sizes = [1, 512], strides = [1, 1]} : vector<2x512xf32> to vector<1x512xf32>
    %412 = vector.broadcast %410 : f32 to vector<1x512xf32>
    %413 = arith.mulf %412, %411 : vector<1x512xf32>
    %414 = arith.addf %403, %413 : vector<1x512xf32>
    %c1_207 = arith.constant 1 : index
    %c29_208 = arith.constant 29 : index
    %415 = memref.load %arg11[%c1_207, %c29_208] : memref<2x49xf32, #tpu.memory_space<smem>>
    %416 = vector.extract_strided_slice %409 {offsets = [1, 0], sizes = [1, 512], strides = [1, 1]} : vector<2x512xf32> to vector<1x512xf32>
    %417 = vector.broadcast %415 : f32 to vector<1x512xf32>
    %418 = arith.mulf %417, %416 : vector<1x512xf32>
    %419 = arith.addf %408, %418 : vector<1x512xf32>
    %c0_209 = arith.constant 0 : index
    %c149_210 = arith.constant 149 : index
    %420 = vector.load %arg14[%c0_209, %c149_210] : memref<2x768xf32, #tpu.memory_space<vmem>>, vector<2x512xf32>
    %c0_211 = arith.constant 0 : index
    %c30 = arith.constant 30 : index
    %421 = memref.load %arg11[%c0_211, %c30] : memref<2x49xf32, #tpu.memory_space<smem>>
    %422 = vector.extract_strided_slice %420 {offsets = [0, 0], sizes = [1, 512], strides = [1, 1]} : vector<2x512xf32> to vector<1x512xf32>
    %423 = vector.broadcast %421 : f32 to vector<1x512xf32>
    %424 = arith.mulf %423, %422 : vector<1x512xf32>
    %425 = arith.addf %414, %424 : vector<1x512xf32>
    %c1_212 = arith.constant 1 : index
    %c30_213 = arith.constant 30 : index
    %426 = memref.load %arg11[%c1_212, %c30_213] : memref<2x49xf32, #tpu.memory_space<smem>>
    %427 = vector.extract_strided_slice %420 {offsets = [1, 0], sizes = [1, 512], strides = [1, 1]} : vector<2x512xf32> to vector<1x512xf32>
    %428 = vector.broadcast %426 : f32 to vector<1x512xf32>
    %429 = arith.mulf %428, %427 : vector<1x512xf32>
    %430 = arith.addf %419, %429 : vector<1x512xf32>
    %c0_214 = arith.constant 0 : index
    %c150_215 = arith.constant 150 : index
    %431 = vector.load %arg14[%c0_214, %c150_215] : memref<2x768xf32, #tpu.memory_space<vmem>>, vector<2x512xf32>
    %c0_216 = arith.constant 0 : index
    %c31 = arith.constant 31 : index
    %432 = memref.load %arg11[%c0_216, %c31] : memref<2x49xf32, #tpu.memory_space<smem>>
    %433 = vector.extract_strided_slice %431 {offsets = [0, 0], sizes = [1, 512], strides = [1, 1]} : vector<2x512xf32> to vector<1x512xf32>
    %434 = vector.broadcast %432 : f32 to vector<1x512xf32>
    %435 = arith.mulf %434, %433 : vector<1x512xf32>
    %436 = arith.addf %425, %435 : vector<1x512xf32>
    %c1_217 = arith.constant 1 : index
    %c31_218 = arith.constant 31 : index
    %437 = memref.load %arg11[%c1_217, %c31_218] : memref<2x49xf32, #tpu.memory_space<smem>>
    %438 = vector.extract_strided_slice %431 {offsets = [1, 0], sizes = [1, 512], strides = [1, 1]} : vector<2x512xf32> to vector<1x512xf32>
    %439 = vector.broadcast %437 : f32 to vector<1x512xf32>
    %440 = arith.mulf %439, %438 : vector<1x512xf32>
    %441 = arith.addf %430, %440 : vector<1x512xf32>
    %c0_219 = arith.constant 0 : index
    %c151_220 = arith.constant 151 : index
    %442 = vector.load %arg14[%c0_219, %c151_220] : memref<2x768xf32, #tpu.memory_space<vmem>>, vector<2x512xf32>
    %c0_221 = arith.constant 0 : index
    %c32 = arith.constant 32 : index
    %443 = memref.load %arg11[%c0_221, %c32] : memref<2x49xf32, #tpu.memory_space<smem>>
    %444 = vector.extract_strided_slice %442 {offsets = [0, 0], sizes = [1, 512], strides = [1, 1]} : vector<2x512xf32> to vector<1x512xf32>
    %445 = vector.broadcast %443 : f32 to vector<1x512xf32>
    %446 = arith.mulf %445, %444 : vector<1x512xf32>
    %447 = arith.addf %436, %446 : vector<1x512xf32>
    %c1_222 = arith.constant 1 : index
    %c32_223 = arith.constant 32 : index
    %448 = memref.load %arg11[%c1_222, %c32_223] : memref<2x49xf32, #tpu.memory_space<smem>>
    %449 = vector.extract_strided_slice %442 {offsets = [1, 0], sizes = [1, 512], strides = [1, 1]} : vector<2x512xf32> to vector<1x512xf32>
    %450 = vector.broadcast %448 : f32 to vector<1x512xf32>
    %451 = arith.mulf %450, %449 : vector<1x512xf32>
    %452 = arith.addf %441, %451 : vector<1x512xf32>
    %c0_224 = arith.constant 0 : index
    %c152 = arith.constant 152 : index
    %453 = vector.load %arg14[%c0_224, %c152] : memref<2x768xf32, #tpu.memory_space<vmem>>, vector<2x512xf32>
    %c0_225 = arith.constant 0 : index
    %c33 = arith.constant 33 : index
    %454 = memref.load %arg11[%c0_225, %c33] : memref<2x49xf32, #tpu.memory_space<smem>>
    %455 = vector.extract_strided_slice %453 {offsets = [0, 0], sizes = [1, 512], strides = [1, 1]} : vector<2x512xf32> to vector<1x512xf32>
    %456 = vector.broadcast %454 : f32 to vector<1x512xf32>
    %457 = arith.mulf %456, %455 : vector<1x512xf32>
    %458 = arith.addf %447, %457 : vector<1x512xf32>
    %c1_226 = arith.constant 1 : index
    %c33_227 = arith.constant 33 : index
    %459 = memref.load %arg11[%c1_226, %c33_227] : memref<2x49xf32, #tpu.memory_space<smem>>
    %460 = vector.extract_strided_slice %453 {offsets = [1, 0], sizes = [1, 512], strides = [1, 1]} : vector<2x512xf32> to vector<1x512xf32>
    %461 = vector.broadcast %459 : f32 to vector<1x512xf32>
    %462 = arith.mulf %461, %460 : vector<1x512xf32>
    %463 = arith.addf %452, %462 : vector<1x512xf32>
    %c0_228 = arith.constant 0 : index
    %c153 = arith.constant 153 : index
    %464 = vector.load %arg14[%c0_228, %c153] : memref<2x768xf32, #tpu.memory_space<vmem>>, vector<2x512xf32>
    %c0_229 = arith.constant 0 : index
    %c34 = arith.constant 34 : index
    %465 = memref.load %arg11[%c0_229, %c34] : memref<2x49xf32, #tpu.memory_space<smem>>
    %466 = vector.extract_strided_slice %464 {offsets = [0, 0], sizes = [1, 512], strides = [1, 1]} : vector<2x512xf32> to vector<1x512xf32>
    %467 = vector.broadcast %465 : f32 to vector<1x512xf32>
    %468 = arith.mulf %467, %466 : vector<1x512xf32>
    %469 = arith.addf %458, %468 : vector<1x512xf32>
    %c1_230 = arith.constant 1 : index
    %c34_231 = arith.constant 34 : index
    %470 = memref.load %arg11[%c1_230, %c34_231] : memref<2x49xf32, #tpu.memory_space<smem>>
    %471 = vector.extract_strided_slice %464 {offsets = [1, 0], sizes = [1, 512], strides = [1, 1]} : vector<2x512xf32> to vector<1x512xf32>
    %472 = vector.broadcast %470 : f32 to vector<1x512xf32>
    %473 = arith.mulf %472, %471 : vector<1x512xf32>
    %474 = arith.addf %463, %473 : vector<1x512xf32>
    %c0_232 = arith.constant 0 : index
    %c169 = arith.constant 169 : index
    %475 = vector.load %arg14[%c0_232, %c169] : memref<2x768xf32, #tpu.memory_space<vmem>>, vector<2x512xf32>
    %c0_233 = arith.constant 0 : index
    %c35 = arith.constant 35 : index
    %476 = memref.load %arg11[%c0_233, %c35] : memref<2x49xf32, #tpu.memory_space<smem>>
    %477 = vector.extract_strided_slice %475 {offsets = [0, 0], sizes = [1, 512], strides = [1, 1]} : vector<2x512xf32> to vector<1x512xf32>
    %478 = vector.broadcast %476 : f32 to vector<1x512xf32>
    %479 = arith.mulf %478, %477 : vector<1x512xf32>
    %480 = arith.addf %469, %479 : vector<1x512xf32>
    %c1_234 = arith.constant 1 : index
    %c35_235 = arith.constant 35 : index
    %481 = memref.load %arg11[%c1_234, %c35_235] : memref<2x49xf32, #tpu.memory_space<smem>>
    %482 = vector.extract_strided_slice %475 {offsets = [1, 0], sizes = [1, 512], strides = [1, 1]} : vector<2x512xf32> to vector<1x512xf32>
    %483 = vector.broadcast %481 : f32 to vector<1x512xf32>
    %484 = arith.mulf %483, %482 : vector<1x512xf32>
    %485 = arith.addf %474, %484 : vector<1x512xf32>
    %c0_236 = arith.constant 0 : index
    %c170 = arith.constant 170 : index
    %486 = vector.load %arg14[%c0_236, %c170] : memref<2x768xf32, #tpu.memory_space<vmem>>, vector<2x512xf32>
    %c0_237 = arith.constant 0 : index
    %c36 = arith.constant 36 : index
    %487 = memref.load %arg11[%c0_237, %c36] : memref<2x49xf32, #tpu.memory_space<smem>>
    %488 = vector.extract_strided_slice %486 {offsets = [0, 0], sizes = [1, 512], strides = [1, 1]} : vector<2x512xf32> to vector<1x512xf32>
    %489 = vector.broadcast %487 : f32 to vector<1x512xf32>
    %490 = arith.mulf %489, %488 : vector<1x512xf32>
    %491 = arith.addf %480, %490 : vector<1x512xf32>
    %c1_238 = arith.constant 1 : index
    %c36_239 = arith.constant 36 : index
    %492 = memref.load %arg11[%c1_238, %c36_239] : memref<2x49xf32, #tpu.memory_space<smem>>
    %493 = vector.extract_strided_slice %486 {offsets = [1, 0], sizes = [1, 512], strides = [1, 1]} : vector<2x512xf32> to vector<1x512xf32>
    %494 = vector.broadcast %492 : f32 to vector<1x512xf32>
    %495 = arith.mulf %494, %493 : vector<1x512xf32>
    %496 = arith.addf %485, %495 : vector<1x512xf32>
    %c0_240 = arith.constant 0 : index
    %c171 = arith.constant 171 : index
    %497 = vector.load %arg14[%c0_240, %c171] : memref<2x768xf32, #tpu.memory_space<vmem>>, vector<2x512xf32>
    %c0_241 = arith.constant 0 : index
    %c37 = arith.constant 37 : index
    %498 = memref.load %arg11[%c0_241, %c37] : memref<2x49xf32, #tpu.memory_space<smem>>
    %499 = vector.extract_strided_slice %497 {offsets = [0, 0], sizes = [1, 512], strides = [1, 1]} : vector<2x512xf32> to vector<1x512xf32>
    %500 = vector.broadcast %498 : f32 to vector<1x512xf32>
    %501 = arith.mulf %500, %499 : vector<1x512xf32>
    %502 = arith.addf %491, %501 : vector<1x512xf32>
    %c1_242 = arith.constant 1 : index
    %c37_243 = arith.constant 37 : index
    %503 = memref.load %arg11[%c1_242, %c37_243] : memref<2x49xf32, #tpu.memory_space<smem>>
    %504 = vector.extract_strided_slice %497 {offsets = [1, 0], sizes = [1, 512], strides = [1, 1]} : vector<2x512xf32> to vector<1x512xf32>
    %505 = vector.broadcast %503 : f32 to vector<1x512xf32>
    %506 = arith.mulf %505, %504 : vector<1x512xf32>
    %507 = arith.addf %496, %506 : vector<1x512xf32>
    %c0_244 = arith.constant 0 : index
    %c172 = arith.constant 172 : index
    %508 = vector.load %arg14[%c0_244, %c172] : memref<2x768xf32, #tpu.memory_space<vmem>>, vector<2x512xf32>
    %c0_245 = arith.constant 0 : index
    %c38 = arith.constant 38 : index
    %509 = memref.load %arg11[%c0_245, %c38] : memref<2x49xf32, #tpu.memory_space<smem>>
    %510 = vector.extract_strided_slice %508 {offsets = [0, 0], sizes = [1, 512], strides = [1, 1]} : vector<2x512xf32> to vector<1x512xf32>
    %511 = vector.broadcast %509 : f32 to vector<1x512xf32>
    %512 = arith.mulf %511, %510 : vector<1x512xf32>
    %513 = arith.addf %502, %512 : vector<1x512xf32>
    %c1_246 = arith.constant 1 : index
    %c38_247 = arith.constant 38 : index
    %514 = memref.load %arg11[%c1_246, %c38_247] : memref<2x49xf32, #tpu.memory_space<smem>>
    %515 = vector.extract_strided_slice %508 {offsets = [1, 0], sizes = [1, 512], strides = [1, 1]} : vector<2x512xf32> to vector<1x512xf32>
    %516 = vector.broadcast %514 : f32 to vector<1x512xf32>
    %517 = arith.mulf %516, %515 : vector<1x512xf32>
    %518 = arith.addf %507, %517 : vector<1x512xf32>
    %c0_248 = arith.constant 0 : index
    %c173 = arith.constant 173 : index
    %519 = vector.load %arg14[%c0_248, %c173] : memref<2x768xf32, #tpu.memory_space<vmem>>, vector<2x512xf32>
    %c0_249 = arith.constant 0 : index
    %c39 = arith.constant 39 : index
    %520 = memref.load %arg11[%c0_249, %c39] : memref<2x49xf32, #tpu.memory_space<smem>>
    %521 = vector.extract_strided_slice %519 {offsets = [0, 0], sizes = [1, 512], strides = [1, 1]} : vector<2x512xf32> to vector<1x512xf32>
    %522 = vector.broadcast %520 : f32 to vector<1x512xf32>
    %523 = arith.mulf %522, %521 : vector<1x512xf32>
    %524 = arith.addf %513, %523 : vector<1x512xf32>
    %c1_250 = arith.constant 1 : index
    %c39_251 = arith.constant 39 : index
    %525 = memref.load %arg11[%c1_250, %c39_251] : memref<2x49xf32, #tpu.memory_space<smem>>
    %526 = vector.extract_strided_slice %519 {offsets = [1, 0], sizes = [1, 512], strides = [1, 1]} : vector<2x512xf32> to vector<1x512xf32>
    %527 = vector.broadcast %525 : f32 to vector<1x512xf32>
    %528 = arith.mulf %527, %526 : vector<1x512xf32>
    %529 = arith.addf %518, %528 : vector<1x512xf32>
    %c0_252 = arith.constant 0 : index
    %c174 = arith.constant 174 : index
    %530 = vector.load %arg14[%c0_252, %c174] : memref<2x768xf32, #tpu.memory_space<vmem>>, vector<2x512xf32>
    %c0_253 = arith.constant 0 : index
    %c40 = arith.constant 40 : index
    %531 = memref.load %arg11[%c0_253, %c40] : memref<2x49xf32, #tpu.memory_space<smem>>
    %532 = vector.extract_strided_slice %530 {offsets = [0, 0], sizes = [1, 512], strides = [1, 1]} : vector<2x512xf32> to vector<1x512xf32>
    %533 = vector.broadcast %531 : f32 to vector<1x512xf32>
    %534 = arith.mulf %533, %532 : vector<1x512xf32>
    %535 = arith.addf %524, %534 : vector<1x512xf32>
    %c1_254 = arith.constant 1 : index
    %c40_255 = arith.constant 40 : index
    %536 = memref.load %arg11[%c1_254, %c40_255] : memref<2x49xf32, #tpu.memory_space<smem>>
    %537 = vector.extract_strided_slice %530 {offsets = [1, 0], sizes = [1, 512], strides = [1, 1]} : vector<2x512xf32> to vector<1x512xf32>
    %538 = vector.broadcast %536 : f32 to vector<1x512xf32>
    %539 = arith.mulf %538, %537 : vector<1x512xf32>
    %540 = arith.addf %529, %539 : vector<1x512xf32>
    %c0_256 = arith.constant 0 : index
    %c175 = arith.constant 175 : index
    %541 = vector.load %arg14[%c0_256, %c175] : memref<2x768xf32, #tpu.memory_space<vmem>>, vector<2x512xf32>
    %c0_257 = arith.constant 0 : index
    %c41 = arith.constant 41 : index
    %542 = memref.load %arg11[%c0_257, %c41] : memref<2x49xf32, #tpu.memory_space<smem>>
    %543 = vector.extract_strided_slice %541 {offsets = [0, 0], sizes = [1, 512], strides = [1, 1]} : vector<2x512xf32> to vector<1x512xf32>
    %544 = vector.broadcast %542 : f32 to vector<1x512xf32>
    %545 = arith.mulf %544, %543 : vector<1x512xf32>
    %546 = arith.addf %535, %545 : vector<1x512xf32>
    %c1_258 = arith.constant 1 : index
    %c41_259 = arith.constant 41 : index
    %547 = memref.load %arg11[%c1_258, %c41_259] : memref<2x49xf32, #tpu.memory_space<smem>>
    %548 = vector.extract_strided_slice %541 {offsets = [1, 0], sizes = [1, 512], strides = [1, 1]} : vector<2x512xf32> to vector<1x512xf32>
    %549 = vector.broadcast %547 : f32 to vector<1x512xf32>
    %550 = arith.mulf %549, %548 : vector<1x512xf32>
    %551 = arith.addf %540, %550 : vector<1x512xf32>
    %c0_260 = arith.constant 0 : index
    %c191 = arith.constant 191 : index
    %552 = vector.load %arg14[%c0_260, %c191] : memref<2x768xf32, #tpu.memory_space<vmem>>, vector<2x512xf32>
    %c0_261 = arith.constant 0 : index
    %c42 = arith.constant 42 : index
    %553 = memref.load %arg11[%c0_261, %c42] : memref<2x49xf32, #tpu.memory_space<smem>>
    %554 = vector.extract_strided_slice %552 {offsets = [0, 0], sizes = [1, 512], strides = [1, 1]} : vector<2x512xf32> to vector<1x512xf32>
    %555 = vector.broadcast %553 : f32 to vector<1x512xf32>
    %556 = arith.mulf %555, %554 : vector<1x512xf32>
    %557 = arith.addf %546, %556 : vector<1x512xf32>
    %c1_262 = arith.constant 1 : index
    %c42_263 = arith.constant 42 : index
    %558 = memref.load %arg11[%c1_262, %c42_263] : memref<2x49xf32, #tpu.memory_space<smem>>
    %559 = vector.extract_strided_slice %552 {offsets = [1, 0], sizes = [1, 512], strides = [1, 1]} : vector<2x512xf32> to vector<1x512xf32>
    %560 = vector.broadcast %558 : f32 to vector<1x512xf32>
    %561 = arith.mulf %560, %559 : vector<1x512xf32>
    %562 = arith.addf %551, %561 : vector<1x512xf32>
    %c0_264 = arith.constant 0 : index
    %c192 = arith.constant 192 : index
    %563 = vector.load %arg14[%c0_264, %c192] : memref<2x768xf32, #tpu.memory_space<vmem>>, vector<2x512xf32>
    %c0_265 = arith.constant 0 : index
    %c43 = arith.constant 43 : index
    %564 = memref.load %arg11[%c0_265, %c43] : memref<2x49xf32, #tpu.memory_space<smem>>
    %565 = vector.extract_strided_slice %563 {offsets = [0, 0], sizes = [1, 512], strides = [1, 1]} : vector<2x512xf32> to vector<1x512xf32>
    %566 = vector.broadcast %564 : f32 to vector<1x512xf32>
    %567 = arith.mulf %566, %565 : vector<1x512xf32>
    %568 = arith.addf %557, %567 : vector<1x512xf32>
    %c1_266 = arith.constant 1 : index
    %c43_267 = arith.constant 43 : index
    %569 = memref.load %arg11[%c1_266, %c43_267] : memref<2x49xf32, #tpu.memory_space<smem>>
    %570 = vector.extract_strided_slice %563 {offsets = [1, 0], sizes = [1, 512], strides = [1, 1]} : vector<2x512xf32> to vector<1x512xf32>
    %571 = vector.broadcast %569 : f32 to vector<1x512xf32>
    %572 = arith.mulf %571, %570 : vector<1x512xf32>
    %573 = arith.addf %562, %572 : vector<1x512xf32>
    %c0_268 = arith.constant 0 : index
    %c193 = arith.constant 193 : index
    %574 = vector.load %arg14[%c0_268, %c193] : memref<2x768xf32, #tpu.memory_space<vmem>>, vector<2x512xf32>
    %c0_269 = arith.constant 0 : index
    %c44 = arith.constant 44 : index
    %575 = memref.load %arg11[%c0_269, %c44] : memref<2x49xf32, #tpu.memory_space<smem>>
    %576 = vector.extract_strided_slice %574 {offsets = [0, 0], sizes = [1, 512], strides = [1, 1]} : vector<2x512xf32> to vector<1x512xf32>
    %577 = vector.broadcast %575 : f32 to vector<1x512xf32>
    %578 = arith.mulf %577, %576 : vector<1x512xf32>
    %579 = arith.addf %568, %578 : vector<1x512xf32>
    %c1_270 = arith.constant 1 : index
    %c44_271 = arith.constant 44 : index
    %580 = memref.load %arg11[%c1_270, %c44_271] : memref<2x49xf32, #tpu.memory_space<smem>>
    %581 = vector.extract_strided_slice %574 {offsets = [1, 0], sizes = [1, 512], strides = [1, 1]} : vector<2x512xf32> to vector<1x512xf32>
    %582 = vector.broadcast %580 : f32 to vector<1x512xf32>
    %583 = arith.mulf %582, %581 : vector<1x512xf32>
    %584 = arith.addf %573, %583 : vector<1x512xf32>
    %c0_272 = arith.constant 0 : index
    %c194 = arith.constant 194 : index
    %585 = vector.load %arg14[%c0_272, %c194] : memref<2x768xf32, #tpu.memory_space<vmem>>, vector<2x512xf32>
    %c0_273 = arith.constant 0 : index
    %c45 = arith.constant 45 : index
    %586 = memref.load %arg11[%c0_273, %c45] : memref<2x49xf32, #tpu.memory_space<smem>>
    %587 = vector.extract_strided_slice %585 {offsets = [0, 0], sizes = [1, 512], strides = [1, 1]} : vector<2x512xf32> to vector<1x512xf32>
    %588 = vector.broadcast %586 : f32 to vector<1x512xf32>
    %589 = arith.mulf %588, %587 : vector<1x512xf32>
    %590 = arith.addf %579, %589 : vector<1x512xf32>
    %c1_274 = arith.constant 1 : index
    %c45_275 = arith.constant 45 : index
    %591 = memref.load %arg11[%c1_274, %c45_275] : memref<2x49xf32, #tpu.memory_space<smem>>
    %592 = vector.extract_strided_slice %585 {offsets = [1, 0], sizes = [1, 512], strides = [1, 1]} : vector<2x512xf32> to vector<1x512xf32>
    %593 = vector.broadcast %591 : f32 to vector<1x512xf32>
    %594 = arith.mulf %593, %592 : vector<1x512xf32>
    %595 = arith.addf %584, %594 : vector<1x512xf32>
    %c0_276 = arith.constant 0 : index
    %c195 = arith.constant 195 : index
    %596 = vector.load %arg14[%c0_276, %c195] : memref<2x768xf32, #tpu.memory_space<vmem>>, vector<2x512xf32>
    %c0_277 = arith.constant 0 : index
    %c46 = arith.constant 46 : index
    %597 = memref.load %arg11[%c0_277, %c46] : memref<2x49xf32, #tpu.memory_space<smem>>
    %598 = vector.extract_strided_slice %596 {offsets = [0, 0], sizes = [1, 512], strides = [1, 1]} : vector<2x512xf32> to vector<1x512xf32>
    %599 = vector.broadcast %597 : f32 to vector<1x512xf32>
    %600 = arith.mulf %599, %598 : vector<1x512xf32>
    %601 = arith.addf %590, %600 : vector<1x512xf32>
    %c1_278 = arith.constant 1 : index
    %c46_279 = arith.constant 46 : index
    %602 = memref.load %arg11[%c1_278, %c46_279] : memref<2x49xf32, #tpu.memory_space<smem>>
    %603 = vector.extract_strided_slice %596 {offsets = [1, 0], sizes = [1, 512], strides = [1, 1]} : vector<2x512xf32> to vector<1x512xf32>
    %604 = vector.broadcast %602 : f32 to vector<1x512xf32>
    %605 = arith.mulf %604, %603 : vector<1x512xf32>
    %606 = arith.addf %595, %605 : vector<1x512xf32>
    %c0_280 = arith.constant 0 : index
    %c196 = arith.constant 196 : index
    %607 = vector.load %arg14[%c0_280, %c196] : memref<2x768xf32, #tpu.memory_space<vmem>>, vector<2x512xf32>
    %c0_281 = arith.constant 0 : index
    %c47 = arith.constant 47 : index
    %608 = memref.load %arg11[%c0_281, %c47] : memref<2x49xf32, #tpu.memory_space<smem>>
    %609 = vector.extract_strided_slice %607 {offsets = [0, 0], sizes = [1, 512], strides = [1, 1]} : vector<2x512xf32> to vector<1x512xf32>
    %610 = vector.broadcast %608 : f32 to vector<1x512xf32>
    %611 = arith.mulf %610, %609 : vector<1x512xf32>
    %612 = arith.addf %601, %611 : vector<1x512xf32>
    %c1_282 = arith.constant 1 : index
    %c47_283 = arith.constant 47 : index
    %613 = memref.load %arg11[%c1_282, %c47_283] : memref<2x49xf32, #tpu.memory_space<smem>>
    %614 = vector.extract_strided_slice %607 {offsets = [1, 0], sizes = [1, 512], strides = [1, 1]} : vector<2x512xf32> to vector<1x512xf32>
    %615 = vector.broadcast %613 : f32 to vector<1x512xf32>
    %616 = arith.mulf %615, %614 : vector<1x512xf32>
    %617 = arith.addf %606, %616 : vector<1x512xf32>
    %c0_284 = arith.constant 0 : index
    %c197 = arith.constant 197 : index
    %618 = vector.load %arg14[%c0_284, %c197] : memref<2x768xf32, #tpu.memory_space<vmem>>, vector<2x512xf32>
    %c0_285 = arith.constant 0 : index
    %c48 = arith.constant 48 : index
    %619 = memref.load %arg11[%c0_285, %c48] : memref<2x49xf32, #tpu.memory_space<smem>>
    %620 = vector.extract_strided_slice %618 {offsets = [0, 0], sizes = [1, 512], strides = [1, 1]} : vector<2x512xf32> to vector<1x512xf32>
    %621 = vector.broadcast %619 : f32 to vector<1x512xf32>
    %622 = arith.mulf %621, %620 : vector<1x512xf32>
    %623 = arith.addf %612, %622 : vector<1x512xf32>
    %c1_286 = arith.constant 1 : index
    %c48_287 = arith.constant 48 : index
    %624 = memref.load %arg11[%c1_286, %c48_287] : memref<2x49xf32, #tpu.memory_space<smem>>
    %625 = vector.extract_strided_slice %618 {offsets = [1, 0], sizes = [1, 512], strides = [1, 1]} : vector<2x512xf32> to vector<1x512xf32>
    %626 = vector.broadcast %624 : f32 to vector<1x512xf32>
    %627 = arith.mulf %626, %625 : vector<1x512xf32>
    %628 = arith.addf %617, %627 : vector<1x512xf32>
    %629 = arith.addf %623, %628 : vector<1x512xf32>
    %cst_288 = arith.constant 0.000000e+00 : f32
    %630 = vector.broadcast %cst_288 : f32 to vector<1x512xf32>
    %631 = arith.subf %630, %629 : vector<1x512xf32>
    %632 = math.exp %631 : vector<1x512xf32>
    %cst_289 = arith.constant 1.000000e+00 : f32
    %633 = vector.broadcast %cst_289 : f32 to vector<1x512xf32>
    %634 = arith.addf %633, %632 : vector<1x512xf32>
    %cst_290 = arith.constant 1.000000e+00 : f32
    %635 = vector.broadcast %cst_290 : f32 to vector<1x512xf32>
    %636 = arith.divf %635, %634 : vector<1x512xf32>
    %637 = vector.broadcast %636 : vector<1x512xf32> to vector<16x512xf32>
    %638 = arith.addf %1, %637 : vector<16x512xf32>
    %c0_291 = arith.constant 0 : index
    %c0_292 = arith.constant 0 : index
    %c0_293 = arith.constant 0 : index
    %639 = vector.load %arg12[%c0_291, %c0_292, %c0_293] : memref<1x16x512xf32, #tpu.memory_space<vmem>>, vector<1x16x512xf32>
    %640 = vector.shape_cast %639 : vector<1x16x512xf32> to vector<16x512xf32>
    %641 = vector.shape_cast %638 : vector<16x512xf32> to vector<1x16x512xf32>
    tpu.vector_store %arg12[%c0_291, %c0_292, %c0_293], %641 {strides = array<i32>} : memref<1x16x512xf32, #tpu.memory_space<vmem>>, vector<1x16x512xf32>,
    return
  }
  func.func @transform_0(%arg0: i32) -> (i32, i32, i32) {
    %c0_i32 = arith.constant 0 : i32
    %c0_i32_0 = arith.constant 0 : i32
    %c0_i32_1 = arith.constant 0 : i32
    return %arg0, %c0_i32, %c0_i32_0 : i32, i32, i32
  }
  func.func @transform_1(%arg0: i32) -> (i32, i32) {
    %c0_i32 = arith.constant 0 : i32
    %c0_i32_0 = arith.constant 0 : i32
    %c0_i32_1 = arith.constant 0 : i32
    return %c0_i32, %c0_i32_0 : i32, i32
  }
  func.func @transform_2(%arg0: i32) -> (i32, i32) {
    %c0_i32 = arith.constant 0 : i32
    %c0_i32_0 = arith.constant 0 : i32
    %c0_i32_1 = arith.constant 0 : i32
    return %c0_i32, %c0_i32_0 : i32, i32
  }
  func.func @transform_3(%arg0: i32) -> (i32, i32) {
    %c0_i32 = arith.constant 0 : i32
    %c0_i32_0 = arith.constant 0 : i32
    %c0_i32_1 = arith.constant 0 : i32
    return %c0_i32, %c0_i32_0 : i32, i32
  }
  func.func @transform_4(%arg0: i32) -> (i32, i32) {
    %c0_i32 = arith.constant 0 : i32
    %c0_i32_0 = arith.constant 0 : i32
    %c0_i32_1 = arith.constant 0 : i32
    return %c0_i32, %c0_i32_0 : i32, i32
  }
  func.func @transform_5(%arg0: i32) -> (i32, i32) {
    %c0_i32 = arith.constant 0 : i32
    %c0_i32_0 = arith.constant 0 : i32
    %c0_i32_1 = arith.constant 0 : i32
    return %c0_i32, %c0_i32_0 : i32, i32
  }
  func.func @transform_6(%arg0: i32) -> (i32, i32) {
    %c0_i32 = arith.constant 0 : i32
    %c0_i32_0 = arith.constant 0 : i32
    %c0_i32_1 = arith.constant 0 : i32
    return %c0_i32, %c0_i32_0 : i32, i32
  }
  func.func @transform_7(%arg0: i32) -> (i32, i32) {
    %c0_i32 = arith.constant 0 : i32
    %c0_i32_0 = arith.constant 0 : i32
    %c0_i32_1 = arith.constant 0 : i32
    return %c0_i32, %c0_i32_0 : i32, i32
  }
  func.func @transform_8(%arg0: i32) -> (i32, i32) {
    %c0_i32 = arith.constant 0 : i32
    %c0_i32_0 = arith.constant 0 : i32
    %c0_i32_1 = arith.constant 0 : i32
    return %c0_i32, %c0_i32_0 : i32, i32
  }
  func.func @transform_9(%arg0: i32) -> (i32, i32) {
    %c0_i32 = arith.constant 0 : i32
    %c0_i32_0 = arith.constant 0 : i32
    %c0_i32_1 = arith.constant 0 : i32
    return %c0_i32, %c0_i32_0 : i32, i32
  }
  func.func @transform_10(%arg0: i32) -> (i32, i32) {
    %c0_i32 = arith.constant 0 : i32
    %c0_i32_0 = arith.constant 0 : i32
    %c0_i32_1 = arith.constant 0 : i32
    return %c0_i32, %c0_i32_0 : i32, i32
  }
  func.func @transform_11(%arg0: i32) -> (i32, i32, i32) {
    %c0_i32 = arith.constant 0 : i32
    %c0_i32_0 = arith.constant 0 : i32
    %c0_i32_1 = arith.constant 0 : i32
    return %arg0, %c0_i32, %c0_i32_0 : i32, i32, i32
  }
}

</mosaic_0001>

<llo_original>
// kernel: tpu_custom_call.1
$region0: #{tpu_custom_call.1}
  #allocation0 [shape = 'u32[]', space=smem, size = 0x4, offset = 0x4, fixed_abs, tag = 'smem constant byte address 0x4 - core index']
  #allocation1 [shape = 'u32[144,128]{1,0:T(1,128)}', space=vmem, size = 0x12000, scoped, tag = 'internal scratch']
  #allocation2 [shape = 'f32[16,768]{1,0:T(8,128)}', space=vmem, size = 0xc000, scoped, tag = 'scratch operand']
  #allocation3 [shape = 'f32[2,768]{1,0:T(2,128)}', space=vmem, size = 0x1800, scoped, tag = 'scratch operand']
  #allocation4 [shape = 'f32[1,1]{1,0:T(1,128)S(1)}', space=vmem, size = 0x200, scoped, tag = 'scoped memory for tpu_custom_call.1']
  %s0 = inlined_call_operand.hbm [shape: f32[2,16,512], index: 0, kind: input, shape index: {}]
  %s1 = inlined_call_operand.vmem [shape: f32[1,512], index: 1, kind: input, shape index: {}]
  %s2 = inlined_call_operand.vmem [shape: f32[16,144], index: 2, kind: input, shape index: {}]
  %s3 = inlined_call_operand.vmem [shape: f32[16,1], index: 3, kind: input, shape index: {}]
  %s4 = inlined_call_operand.vmem [shape: f32[16,144], index: 4, kind: input, shape index: {}]
  %s5 = inlined_call_operand.vmem [shape: f32[16,1], index: 5, kind: input, shape index: {}]
  %s6 = inlined_call_operand.vmem [shape: f32[16,1], index: 6, kind: input, shape index: {}]
  %s7 = inlined_call_operand.<no memory space> [shape: f32[1,1], index: 7, kind: input, shape index: {}]
  %s8 = inlined_call_operand.vmem [shape: f32[16,1], index: 8, kind: input, shape index: {}]
  %s9 = inlined_call_operand.vmem [shape: f32[16,1], index: 9, kind: input, shape index: {}]
  %s10 = inlined_call_operand.vmem [shape: f32[2,49], index: 10, kind: input, shape index: {}]
  %s11 = inlined_call_operand.hbm [shape: f32[2,16,512], index: 11, kind: output, shape index: {}]
  %s12 = sld [smem:[#allocation0]]
  $region85: #{tpu_custom_call.1} parent=0
    _
  %s14 = ssub.s32 1, %s12
  %s15 = scalar_select 0, %s14, %s12
  %v16 = vstv %s7
  %17 = vst [vmem:[#allocation4] sm:$0x1] %v16
  $region1: #{tpu_custom_call.1} parent=0
    #allocation5 [shape = 'u8[65536]{0}', space=vmem, size = 0x10000, scoped, tag = 'input window, operand 0']
    #allocation6 [shape = 's32[2]{0}', space=sflag, size = 0x8, scoped, tag = 'scoped memory for tpu_custom_call.1']
    #allocation7 [shape = 's32[2]{0}', space=sflag, size = 0x8, scoped, tag = 'scoped memory for tpu_custom_call.1']
    #allocation8 [shape = 's32[2]{0}', space=sflag, size = 0x8, scoped, tag = 'scoped memory for tpu_custom_call.1']
    #allocation9 [shape = 'u8[1024]{0}', space=smem, size = 0x400, scoped, tag = 'input window, operand 10, single buffered']
    #allocation10 [shape = 'u8[65536]{0}', space=vmem, size = 0x10000, scoped, tag = 'output window, operand 0']
    %18 = vsyncpa [#allocation6], 0
    %s19 = scalar_lea.sflag [#allocation6], 1
    %20 = vsyncpa %s19, 0
    %21 = vsyncpa [#allocation8], 0
    %22 = vsyncpa [#allocation7], 0
    %s23 = scalar_lea.sflag [#allocation7], 1
    %24 = vsyncpa %s23, 0
    loop: start=0, step=1, limit=4
    $region2: #{tpu_custom_call.1} parent=1 // loop_pre_header
      _
    $region3: #{tpu_custom_call.1} parent=1 // loop_header
      %s26 = sphi 0, %s30
      %p27 = scmp.ge.s32.totalorder %s26, 4
      %s36 = sphi 0, %s38
      %s39 = sphi 0, %s36
      %s40 = sphi 0, %s39
      %s56 = sphi 0, %s40
      %s60 = sphi 0, %s60
      %s62 = sphi 0, %s60
      %s63 = sphi 0, %s62
      %s77 = sphi 0, %s63
      %s81 = sphi 0, %s81
      %s83 = sphi 0, %s81
      %s84 = sphi 0, %s83
      %s98 = sphi 0, %s84
      %s102 = sphi 0, %s102
      %s104 = sphi 0, %s102
      %s105 = sphi 0, %s104
      %s119 = sphi 0, %s105
      %s123 = sphi 0, %s123
      %s125 = sphi 0, %s123
      %s126 = sphi 0, %s125
      %s140 = sphi 0, %s126
      %s144 = sphi 0, %s144
      %s146 = sphi 0, %s144
      %s147 = sphi 0, %s146
      %s161 = sphi 0, %s147
      %s165 = sphi 0, %s165
      %s167 = sphi 0, %s165
      %s168 = sphi 0, %s167
      %s182 = sphi 0, %s168
      %s186 = sphi 0, %s186
      %s188 = sphi 0, %s186
      %s189 = sphi 0, %s188
      %s203 = sphi 0, %s189
      %s207 = sphi 0, %s207
      %s209 = sphi 0, %s207
      %s210 = sphi 0, %s209
      %s224 = sphi 0, %s210
      %s228 = sphi 0, %s228
      %s230 = sphi 0, %s228
      %s231 = sphi 0, %s230
      %s245 = sphi 0, %s231
      %s249 = sphi 0, %s249
      %s251 = sphi 0, %s249
      %s252 = sphi 0, %s251
      %s266 = sphi 0, %s252
      %s272 = sphi 0, %s274
      %s275 = sphi 0, %s272
      %s276 = sphi 0, %s275
      %s292 = sphi 0, %s276
    $region4: #{tpu_custom_call.1} parent=1 // loop_header_branch
      %29 = sbr.rel (%p27) target = $region8
    $region5: #{tpu_custom_call.1} parent=1 // loop_body
      %s31 = ssub.s32 %s26, 1
      %s32 = ssub.s32 %s26, 2
      %s33 = sadd.s32 %s26, 1
      %s34 = ssub.s32 %s26, %s33
      %p35 = scmp.eq.s32.totalorder %s34, 0
      %s37 = sadd.s32 %s36, 1
      %s38 = scalar_select %p35, %s36, %s37
      %p41 = pneg %p35
      %p42 = scmp.eq.s32.totalorder %s26, 1
      %p43 = por %p41, %p42
      %p44 = scmp.ne.s32.totalorder %s36, %s39
      %p45 = scmp.eq.s32.totalorder %s26, 0
      %p46 = por %p44, %p45
      %p47 = scmp.ne.s32.totalorder %s36, %s39
      %p48 = scmp.eq.s32.totalorder %s31, 1
      %p49 = por %p47, %p48
      %p50 = scmp.ne.s32.totalorder %s39, %s40
      %p51 = scmp.eq.s32.totalorder %s31, 0
      %p52 = por %p50, %p51
      %p53 = scmp.ne.s32.totalorder %s39, %s40
      %p54 = scmp.eq.s32.totalorder %s32, 1
      %p55 = por %p53, %p54
      %p57 = scmp.ne.s32.totalorder %s40, %s56
      %p58 = scmp.eq.s32.totalorder %s32, 0
      %p59 = por %p57, %p58
      %s61 = sadd.s32 %s60, 1
      %p64 = scmp.eq.s32.totalorder %s26, 1
      %p65 = scmp.ne.s32.totalorder %s60, %s62
      %p66 = scmp.eq.s32.totalorder %s26, 0
      %p67 = por %p65, %p66
      %p68 = scmp.ne.s32.totalorder %s60, %s62
      %p69 = scmp.eq.s32.totalorder %s31, 1
      %p70 = por %p68, %p69
      %p71 = scmp.ne.s32.totalorder %s62, %s63
      %p72 = scmp.eq.s32.totalorder %s31, 0
      %p73 = por %p71, %p72
      %p74 = scmp.ne.s32.totalorder %s62, %s63
      %p75 = scmp.eq.s32.totalorder %s32, 1
      %p76 = por %p74, %p75
      %p78 = scmp.ne.s32.totalorder %s63, %s77
      %p79 = scmp.eq.s32.totalorder %s32, 0
      %p80 = por %p78, %p79
      %s82 = sadd.s32 %s81, 1
      %p85 = scmp.eq.s32.totalorder %s26, 1
      %p86 = scmp.ne.s32.totalorder %s81, %s83
      %p87 = scmp.eq.s32.totalorder %s26, 0
      %p88 = por %p86, %p87
      %p89 = scmp.ne.s32.totalorder %s81, %s83
      %p90 = scmp.eq.s32.totalorder %s31, 1
      %p91 = por %p89, %p90
      %p92 = scmp.ne.s32.totalorder %s83, %s84
      %p93 = scmp.eq.s32.totalorder %s31, 0
      %p94 = por %p92, %p93
      %p95 = scmp.ne.s32.totalorder %s83, %s84
      %p96 = scmp.eq.s32.totalorder %s32, 1
      %p97 = por %p95, %p96
      %p99 = scmp.ne.s32.totalorder %s84, %s98
      %p100 = scmp.eq.s32.totalorder %s32, 0
      %p101 = por %p99, %p100
      %s103 = sadd.s32 %s102, 1
      %p106 = scmp.eq.s32.totalorder %s26, 1
      %p107 = scmp.ne.s32.totalorder %s102, %s104
      %p108 = scmp.eq.s32.totalorder %s26, 0
      %p109 = por %p107, %p108
      %p110 = scmp.ne.s32.totalorder %s102, %s104
      %p111 = scmp.eq.s32.totalorder %s31, 1
      %p112 = por %p110, %p111
      %p113 = scmp.ne.s32.totalorder %s104, %s105
      %p114 = scmp.eq.s32.totalorder %s31, 0
      %p115 = por %p113, %p114
      %p116 = scmp.ne.s32.totalorder %s104, %s105
      %p117 = scmp.eq.s32.totalorder %s32, 1
      %p118 = por %p116, %p117
      %p120 = scmp.ne.s32.totalorder %s105, %s119
      %p121 = scmp.eq.s32.totalorder %s32, 0
      %p122 = por %p120, %p121
      %s124 = sadd.s32 %s123, 1
      %p127 = scmp.eq.s32.totalorder %s26, 1
      %p128 = scmp.ne.s32.totalorder %s123, %s125
      %p129 = scmp.eq.s32.totalorder %s26, 0
      %p130 = por %p128, %p129
      %p131 = scmp.ne.s32.totalorder %s123, %s125
      %p132 = scmp.eq.s32.totalorder %s31, 1
      %p133 = por %p131, %p132
      %p134 = scmp.ne.s32.totalorder %s125, %s126
      %p135 = scmp.eq.s32.totalorder %s31, 0
      %p136 = por %p134, %p135
      %p137 = scmp.ne.s32.totalorder %s125, %s126
      %p138 = scmp.eq.s32.totalorder %s32, 1
      %p139 = por %p137, %p138
      %p141 = scmp.ne.s32.totalorder %s126, %s140
      %p142 = scmp.eq.s32.totalorder %s32, 0
      %p143 = por %p141, %p142
      %s145 = sadd.s32 %s144, 1
      %p148 = scmp.eq.s32.totalorder %s26, 1
      %p149 = scmp.ne.s32.totalorder %s144, %s146
      %p150 = scmp.eq.s32.totalorder %s26, 0
      %p151 = por %p149, %p150
      %p152 = scmp.ne.s32.totalorder %s144, %s146
      %p153 = scmp.eq.s32.totalorder %s31, 1
      %p154 = por %p152, %p153
      %p155 = scmp.ne.s32.totalorder %s146, %s147
      %p156 = scmp.eq.s32.totalorder %s31, 0
      %p157 = por %p155, %p156
      %p158 = scmp.ne.s32.totalorder %s146, %s147
      %p159 = scmp.eq.s32.totalorder %s32, 1
      %p160 = por %p158, %p159
      %p162 = scmp.ne.s32.totalorder %s147, %s161
      %p163 = scmp.eq.s32.totalorder %s32, 0
      %p164 = por %p162, %p163
      %s166 = sadd.s32 %s165, 1
      %p169 = scmp.eq.s32.totalorder %s26, 1
      %p170 = scmp.ne.s32.totalorder %s165, %s167
      %p171 = scmp.eq.s32.totalorder %s26, 0
      %p172 = por %p170, %p171
      %p173 = scmp.ne.s32.totalorder %s165, %s167
      %p174 = scmp.eq.s32.totalorder %s31, 1
      %p175 = por %p173, %p174
      %p176 = scmp.ne.s32.totalorder %s167, %s168
      %p177 = scmp.eq.s32.totalorder %s31, 0
      %p178 = por %p176, %p177
      %p179 = scmp.ne.s32.totalorder %s167, %s168
      %p180 = scmp.eq.s32.totalorder %s32, 1
      %p181 = por %p179, %p180
      %p183 = scmp.ne.s32.totalorder %s168, %s182
      %p184 = scmp.eq.s32.totalorder %s32, 0
      %p185 = por %p183, %p184
      %s187 = sadd.s32 %s186, 1
      %p190 = scmp.eq.s32.totalorder %s26, 1
      %p191 = scmp.ne.s32.totalorder %s186, %s188
      %p192 = scmp.eq.s32.totalorder %s26, 0
      %p193 = por %p191, %p192
      %p194 = scmp.ne.s32.totalorder %s186, %s188
      %p195 = scmp.eq.s32.totalorder %s31, 1
      %p196 = por %p194, %p195
      %p197 = scmp.ne.s32.totalorder %s188, %s189
      %p198 = scmp.eq.s32.totalorder %s31, 0
      %p199 = por %p197, %p198
      %p200 = scmp.ne.s32.totalorder %s188, %s189
      %p201 = scmp.eq.s32.totalorder %s32, 1
      %p202 = por %p200, %p201
      %p204 = scmp.ne.s32.totalorder %s189, %s203
      %p205 = scmp.eq.s32.totalorder %s32, 0
      %p206 = por %p204, %p205
      %s208 = sadd.s32 %s207, 1
      %p211 = scmp.eq.s32.totalorder %s26, 1
      %p212 = scmp.ne.s32.totalorder %s207, %s209
      %p213 = scmp.eq.s32.totalorder %s26, 0
      %p214 = por %p212, %p213
      %p215 = scmp.ne.s32.totalorder %s207, %s209
      %p216 = scmp.eq.s32.totalorder %s31, 1
      %p217 = por %p215, %p216
      %p218 = scmp.ne.s32.totalorder %s209, %s210
      %p219 = scmp.eq.s32.totalorder %s31, 0
      %p220 = por %p218, %p219
      %p221 = scmp.ne.s32.totalorder %s209, %s210
      %p222 = scmp.eq.s32.totalorder %s32, 1
      %p223 = por %p221, %p222
      %p225 = scmp.ne.s32.totalorder %s210, %s224
      %p226 = scmp.eq.s32.totalorder %s32, 0
      %p227 = por %p225, %p226
      %s229 = sadd.s32 %s228, 1
      %p232 = scmp.eq.s32.totalorder %s26, 1
      %p233 = scmp.ne.s32.totalorder %s228, %s230
      %p234 = scmp.eq.s32.totalorder %s26, 0
      %p235 = por %p233, %p234
      %p236 = scmp.ne.s32.totalorder %s228, %s230
      %p237 = scmp.eq.s32.totalorder %s31, 1
      %p238 = por %p236, %p237
      %p239 = scmp.ne.s32.totalorder %s230, %s231
      %p240 = scmp.eq.s32.totalorder %s31, 0
      %p241 = por %p239, %p240
      %p242 = scmp.ne.s32.totalorder %s230, %s231
      %p243 = scmp.eq.s32.totalorder %s32, 1
      %p244 = por %p242, %p243
      %p246 = scmp.ne.s32.totalorder %s231, %s245
      %p247 = scmp.eq.s32.totalorder %s32, 0
      %p248 = por %p246, %p247
      %s250 = sadd.s32 %s249, 1
      %p253 = scmp.eq.s32.totalorder %s26, 1
      %p254 = scmp.ne.s32.totalorder %s249, %s251
      %p255 = scmp.eq.s32.totalorder %s26, 0
      %p256 = por %p254, %p255
      %p257 = scmp.ne.s32.totalorder %s249, %s251
      %p258 = scmp.eq.s32.totalorder %s31, 1
      %p259 = por %p257, %p258
      %p260 = scmp.ne.s32.totalorder %s251, %s252
      %p261 = scmp.eq.s32.totalorder %s31, 0
      %p262 = por %p260, %p261
      %p263 = scmp.ne.s32.totalorder %s251, %s252
      %p264 = scmp.eq.s32.totalorder %s32, 1
      %p265 = por %p263, %p264
      %p267 = scmp.ne.s32.totalorder %s252, %s266
      %p268 = scmp.eq.s32.totalorder %s32, 0
      %p269 = por %p267, %p268
      %s270 = ssub.s32 %s26, %s33
      %p271 = scmp.eq.s32.totalorder %s270, 0
      %s273 = sadd.s32 %s272, 1
      %s274 = scalar_select %p271, %s272, %s273
      %p277 = pneg %p271
      %p278 = scmp.eq.s32.totalorder %s26, 1
      %p279 = por %p277, %p278
      %p280 = scmp.ne.s32.totalorder %s272, %s275
      %p281 = scmp.eq.s32.totalorder %s26, 0
      %p282 = por %p280, %p281
      %p283 = scmp.ne.s32.totalorder %s272, %s275
      %p284 = scmp.eq.s32.totalorder %s31, 1
      %p285 = por %p283, %p284
      %p286 = scmp.ne.s32.totalorder %s275, %s276
      %p287 = scmp.eq.s32.totalorder %s31, 0
      %p288 = por %p286, %p287
      %p289 = scmp.ne.s32.totalorder %s275, %s276
      %p290 = scmp.eq.s32.totalorder %s32, 1
      %p291 = por %p289, %p290
      %p293 = scmp.ne.s32.totalorder %s276, %s292
      %p294 = scmp.eq.s32.totalorder %s32, 0
      %p295 = por %p293, %p294
      %p296 = scmp.le.s32.totalorder 1, %s26
      %p297 = scmp.lt.s32.totalorder %s26, 3
      %p298 = pnand %p296, %p297
      %p299 = pneg %p298
      // Predicated region
      $region9: #{tpu_custom_call.1} parent=5 // pred_check
        _
      $region10: #{tpu_custom_call.1} parent=5 // pred_check_branch
        %301 = sbr.rel (%p298) target = $region12
      $region11: #{tpu_custom_call.1} parent=5 // pred_region
        %s302 = ssub.s32 %s26, 1
        // Predicated region
        $region13: #{tpu_custom_call.1} parent=11 // pred_check
          %p303 = pneg %p73
        $region14: #{tpu_custom_call.1} parent=11 // pred_check_branch
          %305 = sbr.rel (%p303) target = $region16
        $region15: #{tpu_custom_call.1} parent=11 // pred_region
          _
        $region16: #{tpu_custom_call.1} parent=11 // pred_fallthru
          _
        // Predicated region
        $region17: #{tpu_custom_call.1} parent=11 // pred_check
          %p306 = pneg %p94
        $region18: #{tpu_custom_call.1} parent=11 // pred_check_branch
          %308 = sbr.rel (%p306) target = $region20
        $region19: #{tpu_custom_call.1} parent=11 // pred_region
          _
        $region20: #{tpu_custom_call.1} parent=11 // pred_fallthru
          _
        // Predicated region
        $region21: #{tpu_custom_call.1} parent=11 // pred_check
          %p309 = pneg %p115
        $region22: #{tpu_custom_call.1} parent=11 // pred_check_branch
          %311 = sbr.rel (%p309) target = $region24
        $region23: #{tpu_custom_call.1} parent=11 // pred_region
          _
        $region24: #{tpu_custom_call.1} parent=11 // pred_fallthru
          _
        // Predicated region
        $region25: #{tpu_custom_call.1} parent=11 // pred_check
          %p312 = pneg %p136
        $region26: #{tpu_custom_call.1} parent=11 // pred_check_branch
          %314 = sbr.rel (%p312) target = $region28
        $region27: #{tpu_custom_call.1} parent=11 // pred_region
          _
        $region28: #{tpu_custom_call.1} parent=11 // pred_fallthru
          _
        // Predicated region
        $region29: #{tpu_custom_call.1} parent=11 // pred_check
          %p315 = pneg %p157
        $region30: #{tpu_custom_call.1} parent=11 // pred_check_branch
          %317 = sbr.rel (%p315) target = $region32
        $region31: #{tpu_custom_call.1} parent=11 // pred_region
          _
        $region32: #{tpu_custom_call.1} parent=11 // pred_fallthru
          _
        // Predicated region
        $region33: #{tpu_custom_call.1} parent=11 // pred_check
          %p318 = pneg %p178
        $region34: #{tpu_custom_call.1} parent=11 // pred_check_branch
          %320 = sbr.rel (%p318) target = $region36
        $region35: #{tpu_custom_call.1} parent=11 // pred_region
          _
        $region36: #{tpu_custom_call.1} parent=11 // pred_fallthru
          _
        // Predicated region
        $region37: #{tpu_custom_call.1} parent=11 // pred_check
          %p321 = pneg %p199
        $region38: #{tpu_custom_call.1} parent=11 // pred_check_branch
          %323 = sbr.rel (%p321) target = $region40
        $region39: #{tpu_custom_call.1} parent=11 // pred_region
          _
        $region40: #{tpu_custom_call.1} parent=11 // pred_fallthru
          _
        // Predicated region
        $region41: #{tpu_custom_call.1} parent=11 // pred_check
          %p324 = pneg %p220
        $region42: #{tpu_custom_call.1} parent=11 // pred_check_branch
          %326 = sbr.rel (%p324) target = $region44
        $region43: #{tpu_custom_call.1} parent=11 // pred_region
          _
        $region44: #{tpu_custom_call.1} parent=11 // pred_fallthru
          _
        // Predicated region
        $region45: #{tpu_custom_call.1} parent=11 // pred_check
          %p327 = pneg %p241
        $region46: #{tpu_custom_call.1} parent=11 // pred_check_branch
          %329 = sbr.rel (%p327) target = $region48
        $region47: #{tpu_custom_call.1} parent=11 // pred_region
          _
        $region48: #{tpu_custom_call.1} parent=11 // pred_fallthru
          _
        // Predicated region
        $region49: #{tpu_custom_call.1} parent=11 // pred_check
          %p330 = pneg %p262
        $region50: #{tpu_custom_call.1} parent=11 // pred_check_branch
          %332 = sbr.rel (%p330) target = $region52
        $region51: #{tpu_custom_call.1} parent=11 // pred_region
          %s334 = ssub.s32 32, 32
          %335 = vsyncadd [#allocation8], %s334
          %s337 = sshll.u32 %s10, 4
          %s338 = int_to_ptr.vmem [resolvable:$true] %s337
          %340 = dma.vmem_to_smem %s338, 32, [#allocation9], [#allocation8]
        $region52: #{tpu_custom_call.1} parent=11 // pred_fallthru
          _
      $region12: #{tpu_custom_call.1} parent=5 // pred_fallthru
        _
      %p341 = scmp.lt.s32.totalorder %s26, 2
      // Predicated region
      $region53: #{tpu_custom_call.1} parent=5 // pred_check
        %p342 = pneg %p341
      $region54: #{tpu_custom_call.1} parent=5 // pred_check_branch
        %344 = sbr.rel (%p342) target = $region56
      $region55: #{tpu_custom_call.1} parent=5 // pred_region
        // Predicated region
        $region57: #{tpu_custom_call.1} parent=55 // pred_check
          %p345 = pneg %p46
        $region58: #{tpu_custom_call.1} parent=55 // pred_check_branch
          %347 = sbr.rel (%p345) target = $region60
        $region59: #{tpu_custom_call.1} parent=55 // pred_region
          %s348 = sand.u32 %s36, 1
          %s349 = scalar_lea.sflag [#allocation6], %s348
          %s350 = sand.u32 %s36, 1
          %s351 = smul.addr %s350, 64
          %s352 = scalar_lea.vmem [#allocation5], %s351
          %s354 = ssub.s32 1024, 1024
          %355 = vsyncadd %s349, %s354
          %s356 = smul.addr %s26, 8
          %s357 = smul.addr %s356, 128
          %s358 = scalar_lea.hbm %s0, %s357
          %s359 = sshll.u32 %s352, 4
          %s360 = int_to_ptr.vmem [resolvable:$true] %s359
          %365 = dma.hbm_to_vmem [thread:$0]  %s358, 1024, %s360, %s349, 512, 512, 32
        $region60: #{tpu_custom_call.1} parent=55 // pred_fallthru
          _
      $region56: #{tpu_custom_call.1} parent=5 // pred_fallthru
        _
      %p366 = scmp.le.s32.totalorder 1, %s26
      %p367 = scmp.lt.s32.totalorder %s26, 3
      %p368 = pnand %p366, %p367
      %p369 = pneg %p368
      // Predicated region
      $region61: #{tpu_custom_call.1} parent=5 // pred_check
        _
      $region62: #{tpu_custom_call.1} parent=5 // pred_check_branch
        %371 = sbr.rel (%p368) target = $region64
      $region63: #{tpu_custom_call.1} parent=5 // pred_region
        %s372 = ssub.s32 %s26, 1
        %s373 = sand.u32 %s39, 1
        %s374 = scalar_lea.sflag [#allocation6], %s373
        %s375 = sand.u32 %s39, 1
        %s376 = smul.addr %s375, 64
        %s377 = scalar_lea.vmem [#allocation5], %s376
        // Predicated region
        $region65: #{tpu_custom_call.1} parent=63 // pred_check
          %p378 = pneg %p52
        $region66: #{tpu_custom_call.1} parent=63 // pred_check_branch
          %380 = sbr.rel (%p378) target = $region68
        $region67: #{tpu_custom_call.1} parent=63 // pred_region
          %381 = dma.done %s374, 1024
        $region68: #{tpu_custom_call.1} parent=63 // pred_fallthru
          _
        // Predicated region
        $region69: #{tpu_custom_call.1} parent=63 // pred_check
          %p382 = pneg %p262
        $region70: #{tpu_custom_call.1} parent=63 // pred_check_branch
          %384 = sbr.rel (%p382) target = $region72
        $region71: #{tpu_custom_call.1} parent=63 // pred_region
          %385 = dma.done [#allocation8], 32
        $region72: #{tpu_custom_call.1} parent=63 // pred_fallthru
          _
        %386 = sfence
        %s387 = sand.u32 %s39, 1
        %s388 = scalar_lea.sflag [#allocation6], %s387
        %s389 = sand.u32 %s39, 1
        %s390 = smul.addr %s389, 64
        %s391 = scalar_lea.vmem [#allocation5], %s390
        %p392 = pneg %p52
        %p393 = pneg %p49
        %p394 = pneg %p73
        %p395 = pneg %p70
        %p396 = pneg %p94
        %p397 = pneg %p91
        %p398 = pneg %p115
        %p399 = pneg %p112
        %p400 = pneg %p136
        %p401 = pneg %p133
        %p402 = pneg %p157
        %p403 = pneg %p154
        %p404 = pneg %p178
        %p405 = pneg %p175
        %p406 = pneg %p199
        %p407 = pneg %p196
        %p408 = pneg %p220
        %p409 = pneg %p217
        %p410 = pneg %p241
        %p411 = pneg %p238
        %p412 = pneg %p262
        %p413 = pneg %p259
        %p414 = pneg %p288
        %p415 = pneg %p285
        %s416 = sand.u32 %s275, 1
        %s417 = scalar_lea.sflag [#allocation7], %s416
        %s418 = sand.u32 %s275, 1
        %s419 = smul.addr %s418, 64
        %s420 = scalar_lea.vmem [#allocation10], %s419
        %v421 = vld [vmem:[%s377] sm:$0xff]
        %v422 = vld [vmem:[%s377 + $0x8] sm:$0xff]
        %v423 = vld [vmem:[%s377 + $0x10] sm:$0xff]
        %v424 = vld [vmem:[%s377 + $0x18] sm:$0xff]
        %v425 = vld [vmem:[%s377 + $0x20] sm:$0xff]
        %v426 = vld [vmem:[%s377 + $0x28] sm:$0xff]
        %v427 = vld [vmem:[%s377 + $0x30] sm:$0xff]
        %v428 = vld [vmem:[%s377 + $0x38] sm:$0xff]
        %v429 = vld [vmem:[%s1] sm:$0xf]
        %430 = vst [vmem:[#allocation2] sm:$0xff] 0.0
        %431 = vst [vmem:[#allocation2 + $0x30] sm:$0xff] 0.0
        %432 = vst [vmem:[#allocation2 + $0x28] sm:$0xff] 0.0
        %433 = vst [vmem:[#allocation2 + $0x58] sm:$0xff] 0.0
        %434 = vst [vmem:[#allocation3] sm:$0x3] 0.0
        %435 = vst [vmem:[#allocation3 + $0xa] sm:$0x3] 0.0
        %436 = vst [vmem:[#allocation2 + $0x8] sm:$0xff] %v421
        %437 = vst [vmem:[#allocation2 + $0x10] sm:$0xff] %v422
        %438 = vst [vmem:[#allocation2 + $0x18] sm:$0xff] %v423
        %439 = vst [vmem:[#allocation2 + $0x20] sm:$0xff] %v424
        %440 = vst [vmem:[#allocation2 + $0x38] sm:$0xff] %v425
        %441 = vst [vmem:[#allocation2 + $0x40] sm:$0xff] %v426
        %442 = vst [vmem:[#allocation2 + $0x48] sm:$0xff] %v427
        %443 = vst [vmem:[#allocation2 + $0x50] sm:$0xff] %v428
        %v444 = vld [vmem:[#allocation2] sm:$0xff]
        %v445 = vld [vmem:[#allocation2 + $0x8] sm:$0xff]
        %v446 = vld [vmem:[#allocation2 + $0x10] sm:$0xff]
        %v447 = vld [vmem:[#allocation2 + $0x18] sm:$0xff]
        %v448 = vld [vmem:[#allocation2 + $0x20] sm:$0xff]
        %v449 = vld [vmem:[#allocation2 + $0x30] sm:$0xff]
        %v450 = vld [vmem:[#allocation2 + $0x38] sm:$0xff]
        %v451 = vld [vmem:[#allocation2 + $0x40] sm:$0xff]
        %v452 = vld [vmem:[#allocation2 + $0x48] sm:$0xff]
        %v453 = vld [vmem:[#allocation2 + $0x50] sm:$0xff]
        %v454 = vld [vmem:[#allocation2 + $0x8] sm:$0xff]
        %v455 = vld [vmem:[#allocation2 + $0x10] sm:$0xff]
        %v456 = vld [vmem:[#allocation2 + $0x18] sm:$0xff]
        %v457 = vld [vmem:[#allocation2 + $0x20] sm:$0xff]
        %v458 = vld [vmem:[#allocation2 + $0x28] sm:$0xff]
        %v459 = vld [vmem:[#allocation2 + $0x38] sm:$0xff]
        %v460 = vld [vmem:[#allocation2 + $0x40] sm:$0xff]
        %v461 = vld [vmem:[#allocation2 + $0x48] sm:$0xff]
        %v462 = vld [vmem:[#allocation2 + $0x50] sm:$0xff]
        %v463 = vld [vmem:[#allocation2 + $0x58] sm:$0xff]
        %474 = vrot.lane.b32.xlu0 %v444, 127
        %v475 = vpop.permute.xlu0 %474
        %476 = vrot.lane.b32.xlu0 %v445, 127
        %v477 = vpop.permute.xlu0 %476
        %478 = vrot.lane.b32.xlu0 %v446, 127
        %v479 = vpop.permute.xlu0 %478
        %480 = vrot.lane.b32.xlu0 %v447, 127
        %v481 = vpop.permute.xlu0 %480
        %482 = vrot.lane.b32.xlu0 %v448, 127
        %v483 = vpop.permute.xlu0 %482
        %484 = vrot.lane.b32.xlu0 %v449, 127
        %v485 = vpop.permute.xlu0 %484
        %486 = vrot.lane.b32.xlu0 %v450, 127
        %v487 = vpop.permute.xlu0 %486
        %488 = vrot.lane.b32.xlu0 %v451, 127
        %v489 = vpop.permute.xlu0 %488
        %490 = vrot.lane.b32.xlu0 %v452, 127
        %v491 = vpop.permute.xlu0 %490
        %492 = vrot.lane.b32.xlu0 %v453, 127
        %v493 = vpop.permute.xlu0 %492
        %vm494 = vcmask 1039360
        %v495 = vsel %vm494, %v475, %v477
        %v496 = vsel %vm494, %v477, %v479
        %v497 = vsel %vm494, %v479, %v481
        %v498 = vsel %vm494, %v481, %v483
        %v499 = vsel %vm494, %v485, %v487
        %v500 = vsel %vm494, %v487, %v489
        %v501 = vsel %vm494, %v489, %v491
        %v502 = vsel %vm494, %v491, %v493
        %503 = vrot.lane.b32.xlu0 %v444, 126
        %v504 = vpop.permute.xlu0 %503
        %505 = vrot.lane.b32.xlu0 %v445, 126
        %v506 = vpop.permute.xlu0 %505
        %507 = vrot.lane.b32.xlu0 %v446, 126
        %v508 = vpop.permute.xlu0 %507
        %509 = vrot.lane.b32.xlu0 %v447, 126
        %v510 = vpop.permute.xlu0 %509
        %511 = vrot.lane.b32.xlu0 %v448, 126
        %v512 = vpop.permute.xlu0 %511
        %513 = vrot.lane.b32.xlu0 %v449, 126
        %v514 = vpop.permute.xlu0 %513
        %515 = vrot.lane.b32.xlu0 %v450, 126
        %v516 = vpop.permute.xlu0 %515
        %517 = vrot.lane.b32.xlu0 %v451, 126
        %v518 = vpop.permute.xlu0 %517
        %519 = vrot.lane.b32.xlu0 %v452, 126
        %v520 = vpop.permute.xlu0 %519
        %521 = vrot.lane.b32.xlu0 %v453, 126
        %v522 = vpop.permute.xlu0 %521
        %vm523 = vcmask 1031168
        %v524 = vsel %vm523, %v504, %v506
        %v525 = vsel %vm523, %v506, %v508
        %v526 = vsel %vm523, %v508, %v510
        %v527 = vsel %vm523, %v510, %v512
        %v528 = vsel %vm523, %v514, %v516
        %v529 = vsel %vm523, %v516, %v518
        %v530 = vsel %vm523, %v518, %v520
        %v531 = vsel %vm523, %v520, %v522
        %532 = vrot.lane.b32.xlu0 %v444, 106
        %v533 = vpop.permute.xlu0 %532
        %534 = vrot.lane.b32.xlu0 %v445, 106
        %v535 = vpop.permute.xlu0 %534
        %536 = vrot.lane.b32.xlu0 %v446, 106
        %v537 = vpop.permute.xlu0 %536
        %538 = vrot.lane.b32.xlu0 %v447, 106
        %v539 = vpop.permute.xlu0 %538
        %540 = vrot.lane.b32.xlu0 %v448, 106
        %v541 = vpop.permute.xlu0 %540
        %542 = vrot.lane.b32.xlu0 %v449, 106
        %v543 = vpop.permute.xlu0 %542
        %544 = vrot.lane.b32.xlu0 %v450, 106
        %v545 = vpop.permute.xlu0 %544
        %546 = vrot.lane.b32.xlu0 %v451, 106
        %v547 = vpop.permute.xlu0 %546
        %548 = vrot.lane.b32.xlu0 %v452, 106
        %v549 = vpop.permute.xlu0 %548
        %550 = vrot.lane.b32.xlu0 %v453, 106
        %v551 = vpop.permute.xlu0 %550
        %vm552 = vcmask 867328
        %v553 = vsel %vm552, %v533, %v535
        %v554 = vsel %vm552, %v535, %v537
        %v555 = vsel %vm552, %v537, %v539
        %v556 = vsel %vm552, %v539, %v541
        %v557 = vsel %vm552, %v543, %v545
        %v558 = vsel %vm552, %v545, %v547
        %v559 = vsel %vm552, %v547, %v549
        %v560 = vsel %vm552, %v549, %v551
        %561 = vrot.lane.b32.xlu0 %v445, 105
        %v562 = vpop.permute.xlu0 %561
        %563 = vrot.lane.b32.xlu0 %v446, 105
        %v564 = vpop.permute.xlu0 %563
        %565 = vrot.lane.b32.xlu0 %v447, 105
        %v566 = vpop.permute.xlu0 %565
        %567 = vrot.lane.b32.xlu0 %v448, 105
        %v568 = vpop.permute.xlu0 %567
        %569 = vrot.lane.b32.xlu0 %v450, 105
        %v570 = vpop.permute.xlu0 %569
        %571 = vrot.lane.b32.xlu0 %v451, 105
        %v572 = vpop.permute.xlu0 %571
        %573 = vrot.lane.b32.xlu0 %v452, 105
        %v574 = vpop.permute.xlu0 %573
        %575 = vrot.lane.b32.xlu0 %v453, 105
        %v576 = vpop.permute.xlu0 %575
        %vm577 = vcmask 859136
        %v578 = vsel %vm577, %v562, %v564
        %v579 = vsel %vm577, %v564, %v566
        %v580 = vsel %vm577, %v566, %v568
        %v581 = vsel %vm577, %v570, %v572
        %v582 = vsel %vm577, %v572, %v574
        %v583 = vsel %vm577, %v574, %v576
        %594 = vrot.lane.b32.xlu0 %v454, 104
        %v595 = vpop.permute.xlu0 %594
        %596 = vrot.lane.b32.xlu0 %v455, 104
        %v597 = vpop.permute.xlu0 %596
        %598 = vrot.lane.b32.xlu0 %v456, 104
        %v599 = vpop.permute.xlu0 %598
        %600 = vrot.lane.b32.xlu0 %v457, 104
        %v601 = vpop.permute.xlu0 %600
        %602 = vrot.lane.b32.xlu0 %v458, 104
        %v603 = vpop.permute.xlu0 %602
        %604 = vrot.lane.b32.xlu0 %v459, 104
        %v605 = vpop.permute.xlu0 %604
        %606 = vrot.lane.b32.xlu0 %v460, 104
        %v607 = vpop.permute.xlu0 %606
        %608 = vrot.lane.b32.xlu0 %v461, 104
        %v609 = vpop.permute.xlu0 %608
        %610 = vrot.lane.b32.xlu0 %v462, 104
        %v611 = vpop.permute.xlu0 %610
        %612 = vrot.lane.b32.xlu0 %v463, 104
        %v613 = vpop.permute.xlu0 %612
        %vm614 = vcmask 850944
        %v615 = vsel %vm614, %v595, %v597
        %v616 = vsel %vm614, %v597, %v599
        %v617 = vsel %vm614, %v599, %v601
        %v618 = vsel %vm614, %v601, %v603
        %v619 = vsel %vm614, %v605, %v607
        %v620 = vsel %vm614, %v607, %v609
        %v621 = vsel %vm614, %v609, %v611
        %v622 = vsel %vm614, %v611, %v613
        %623 = vrot.lane.b32.xlu0 %v454, 84
        %v624 = vpop.permute.xlu0 %623
        %625 = vrot.lane.b32.xlu0 %v455, 84
        %v626 = vpop.permute.xlu0 %625
        %627 = vrot.lane.b32.xlu0 %v456, 84
        %v628 = vpop.permute.xlu0 %627
        %629 = vrot.lane.b32.xlu0 %v457, 84
        %v630 = vpop.permute.xlu0 %629
        %631 = vrot.lane.b32.xlu0 %v458, 84
        %v632 = vpop.permute.xlu0 %631
        %633 = vrot.lane.b32.xlu0 %v459, 84
        %v634 = vpop.permute.xlu0 %633
        %635 = vrot.lane.b32.xlu0 %v460, 84
        %v636 = vpop.permute.xlu0 %635
        %637 = vrot.lane.b32.xlu0 %v461, 84
        %v638 = vpop.permute.xlu0 %637
        %639 = vrot.lane.b32.xlu0 %v462, 84
        %v640 = vpop.permute.xlu0 %639
        %641 = vrot.lane.b32.xlu0 %v463, 84
        %v642 = vpop.permute.xlu0 %641
        %vm643 = vcmask 687104
        %v644 = vsel %vm643, %v624, %v626
        %v645 = vsel %vm643, %v626, %v628
        %v646 = vsel %vm643, %v628, %v630
        %v647 = vsel %vm643, %v630, %v632
        %v648 = vsel %vm643, %v634, %v636
        %v649 = vsel %vm643, %v636, %v638
        %v650 = vsel %vm643, %v638, %v640
        %v651 = vsel %vm643, %v640, %v642
        %652 = vrot.lane.b32.xlu0 %v454, 83
        %v653 = vpop.permute.xlu0 %652
        %654 = vrot.lane.b32.xlu0 %v455, 83
        %v655 = vpop.permute.xlu0 %654
        %656 = vrot.lane.b32.xlu0 %v456, 83
        %v657 = vpop.permute.xlu0 %656
        %658 = vrot.lane.b32.xlu0 %v457, 83
        %v659 = vpop.permute.xlu0 %658
        %660 = vrot.lane.b32.xlu0 %v458, 83
        %v661 = vpop.permute.xlu0 %660
        %662 = vrot.lane.b32.xlu0 %v459, 83
        %v663 = vpop.permute.xlu0 %662
        %664 = vrot.lane.b32.xlu0 %v460, 83
        %v665 = vpop.permute.xlu0 %664
        %666 = vrot.lane.b32.xlu0 %v461, 83
        %v667 = vpop.permute.xlu0 %666
        %668 = vrot.lane.b32.xlu0 %v462, 83
        %v669 = vpop.permute.xlu0 %668
        %670 = vrot.lane.b32.xlu0 %v463, 83
        %v671 = vpop.permute.xlu0 %670
        %vm672 = vcmask 678912
        %v673 = vsel %vm672, %v653, %v655
        %v674 = vsel %vm672, %v655, %v657
        %v675 = vsel %vm672, %v657, %v659
        %v676 = vsel %vm672, %v659, %v661
        %v677 = vsel %vm672, %v663, %v665
        %v678 = vsel %vm672, %v665, %v667
        %v679 = vsel %vm672, %v667, %v669
        %v680 = vsel %vm672, %v669, %v671
        %681 = vrot.lane.b32.xlu0 %v454, 82
        %v682 = vpop.permute.xlu0 %681
        %683 = vrot.lane.b32.xlu0 %v455, 82
        %v684 = vpop.permute.xlu0 %683
        %685 = vrot.lane.b32.xlu0 %v456, 82
        %v686 = vpop.permute.xlu0 %685
        %687 = vrot.lane.b32.xlu0 %v457, 82
        %v688 = vpop.permute.xlu0 %687
        %689 = vrot.lane.b32.xlu0 %v458, 82
        %v690 = vpop.permute.xlu0 %689
        %691 = vrot.lane.b32.xlu0 %v459, 82
        %v692 = vpop.permute.xlu0 %691
        %693 = vrot.lane.b32.xlu0 %v460, 82
        %v694 = vpop.permute.xlu0 %693
        %695 = vrot.lane.b32.xlu0 %v461, 82
        %v696 = vpop.permute.xlu0 %695
        %697 = vrot.lane.b32.xlu0 %v462, 82
        %v698 = vpop.permute.xlu0 %697
        %699 = vrot.lane.b32.xlu0 %v463, 82
        %v700 = vpop.permute.xlu0 %699
        %vm701 = vcmask 670720
        %v702 = vsel %vm701, %v682, %v684
        %v703 = vsel %vm701, %v684, %v686
        %v704 = vsel %vm701, %v686, %v688
        %v705 = vsel %vm701, %v688, %v690
        %v706 = vsel %vm701, %v692, %v694
        %v707 = vsel %vm701, %v694, %v696
        %v708 = vsel %vm701, %v696, %v698
        %v709 = vsel %vm701, %v698, %v700
        %v710 = vld [vmem:[%s2] sm:$0xff]
        %v711 = vld [vmem:[%s2 + $0x8] sm:$0xff]
        %v712 = vld [vmem:[%s2 + $0x10] sm:$0xff]
        %v713 = vld [vmem:[%s2 + $0x18] sm:$0xff]
        %v714 = vld [vmem:[%s3] sm:$0xff]
        %v715 = vld [vmem:[%s3 + $0x8] sm:$0xff]
        %717 = vset.pattern.permute.xlu0 0
        %718 = vperm.xlu0 %717, %v714
        %v719 = vpop.permute.xlu0 %718
        %722 = vset.pattern.permute.xlu0 0
        %723 = vperm.xlu0 %722, %v715
        %v724 = vpop.permute.xlu0 %723
        %726 = vrot.lane.b32.xlu0 %v444, 23
        %v727 = vpop.permute.xlu0 %726
        %728 = vrot.lane.b32.xlu0 %v445, 23
        %v729 = vpop.permute.xlu0 %728
        %730 = vrot.lane.b32.xlu0 %v446, 23
        %v731 = vpop.permute.xlu0 %730
        %732 = vrot.lane.b32.xlu0 %v447, 23
        %v733 = vpop.permute.xlu0 %732
        %734 = vrot.lane.b32.xlu0 %v448, 23
        %v735 = vpop.permute.xlu0 %734
        %736 = vrot.lane.b32.xlu0 %v449, 23
        %v737 = vpop.permute.xlu0 %736
        %738 = vrot.lane.b32.xlu0 %v450, 23
        %v739 = vpop.permute.xlu0 %738
        %740 = vrot.lane.b32.xlu0 %v451, 23
        %v741 = vpop.permute.xlu0 %740
        %742 = vrot.lane.b32.xlu0 %v452, 23
        %v743 = vpop.permute.xlu0 %742
        %744 = vrot.lane.b32.xlu0 %v453, 23
        %v745 = vpop.permute.xlu0 %744
        %746 = vrot.lane.b32.xlu0 %v495, 23
        %v747 = vpop.permute.xlu0 %746
        %748 = vrot.lane.b32.xlu0 %v496, 23
        %v749 = vpop.permute.xlu0 %748
        %750 = vrot.lane.b32.xlu0 %v497, 23
        %v751 = vpop.permute.xlu0 %750
        %752 = vrot.lane.b32.xlu0 %v498, 23
        %v753 = vpop.permute.xlu0 %752
        %754 = vrot.lane.b32.xlu0 %v483, 23
        %v755 = vpop.permute.xlu0 %754
        %756 = vrot.lane.b32.xlu0 %v499, 23
        %v757 = vpop.permute.xlu0 %756
        %758 = vrot.lane.b32.xlu0 %v500, 23
        %v759 = vpop.permute.xlu0 %758
        %760 = vrot.lane.b32.xlu0 %v501, 23
        %v761 = vpop.permute.xlu0 %760
        %762 = vrot.lane.b32.xlu0 %v502, 23
        %v763 = vpop.permute.xlu0 %762
        %764 = vrot.lane.b32.xlu0 %v493, 23
        %v765 = vpop.permute.xlu0 %764
        %766 = vrot.lane.b32.xlu0 %v524, 23
        %v767 = vpop.permute.xlu0 %766
        %768 = vrot.lane.b32.xlu0 %v525, 23
        %v769 = vpop.permute.xlu0 %768
        %770 = vrot.lane.b32.xlu0 %v526, 23
        %v771 = vpop.permute.xlu0 %770
        %772 = vrot.lane.b32.xlu0 %v527, 23
        %v773 = vpop.permute.xlu0 %772
        %774 = vrot.lane.b32.xlu0 %v512, 23
        %v775 = vpop.permute.xlu0 %774
        %776 = vrot.lane.b32.xlu0 %v528, 23
        %v777 = vpop.permute.xlu0 %776
        %778 = vrot.lane.b32.xlu0 %v529, 23
        %v779 = vpop.permute.xlu0 %778
        %780 = vrot.lane.b32.xlu0 %v530, 23
        %v781 = vpop.permute.xlu0 %780
        %782 = vrot.lane.b32.xlu0 %v531, 23
        %v783 = vpop.permute.xlu0 %782
        %784 = vrot.lane.b32.xlu0 %v522, 23
        %v785 = vpop.permute.xlu0 %784
        %786 = vrot.lane.b32.xlu0 %v553, 23
        %v787 = vpop.permute.xlu0 %786
        %788 = vrot.lane.b32.xlu0 %v554, 23
        %v789 = vpop.permute.xlu0 %788
        %790 = vrot.lane.b32.xlu0 %v555, 23
        %v791 = vpop.permute.xlu0 %790
        %792 = vrot.lane.b32.xlu0 %v556, 23
        %v793 = vpop.permute.xlu0 %792
        %794 = vrot.lane.b32.xlu0 %v541, 23
        %v795 = vpop.permute.xlu0 %794
        %796 = vrot.lane.b32.xlu0 %v557, 23
        %v797 = vpop.permute.xlu0 %796
        %798 = vrot.lane.b32.xlu0 %v558, 23
        %v799 = vpop.permute.xlu0 %798
        %800 = vrot.lane.b32.xlu0 %v559, 23
        %v801 = vpop.permute.xlu0 %800
        %802 = vrot.lane.b32.xlu0 %v560, 23
        %v803 = vpop.permute.xlu0 %802
        %804 = vrot.lane.b32.xlu0 %v551, 23
        %v805 = vpop.permute.xlu0 %804
        %806 = vrot.lane.b32.xlu0 %v562, 23
        %v807 = vpop.permute.xlu0 %806
        %808 = vrot.lane.b32.xlu0 %v578, 23
        %v809 = vpop.permute.xlu0 %808
        %810 = vrot.lane.b32.xlu0 %v579, 23
        %v811 = vpop.permute.xlu0 %810
        %812 = vrot.lane.b32.xlu0 %v580, 23
        %v813 = vpop.permute.xlu0 %812
        %814 = vrot.lane.b32.xlu0 %v568, 23
        %v815 = vpop.permute.xlu0 %814
        %816 = vrot.lane.b32.xlu0 %v570, 23
        %v817 = vpop.permute.xlu0 %816
        %818 = vrot.lane.b32.xlu0 %v581, 23
        %v819 = vpop.permute.xlu0 %818
        %820 = vrot.lane.b32.xlu0 %v582, 23
        %v821 = vpop.permute.xlu0 %820
        %822 = vrot.lane.b32.xlu0 %v583, 23
        %v823 = vpop.permute.xlu0 %822
        %824 = vrot.lane.b32.xlu0 %v576, 23
        %v825 = vpop.permute.xlu0 %824
        %826 = vrot.lane.b32.xlu0 %v595, 23
        %v827 = vpop.permute.xlu0 %826
        %828 = vrot.lane.b32.xlu0 %v615, 23
        %v829 = vpop.permute.xlu0 %828
        %830 = vrot.lane.b32.xlu0 %v616, 23
        %v831 = vpop.permute.xlu0 %830
        %832 = vrot.lane.b32.xlu0 %v617, 23
        %v833 = vpop.permute.xlu0 %832
        %834 = vrot.lane.b32.xlu0 %v618, 23
        %v835 = vpop.permute.xlu0 %834
        %836 = vrot.lane.b32.xlu0 %v605, 23
        %v837 = vpop.permute.xlu0 %836
        %838 = vrot.lane.b32.xlu0 %v619, 23
        %v839 = vpop.permute.xlu0 %838
        %840 = vrot.lane.b32.xlu0 %v620, 23
        %v841 = vpop.permute.xlu0 %840
        %842 = vrot.lane.b32.xlu0 %v621, 23
        %v843 = vpop.permute.xlu0 %842
        %844 = vrot.lane.b32.xlu0 %v622, 23
        %v845 = vpop.permute.xlu0 %844
        %846 = vrot.lane.b32.xlu0 %v624, 23
        %v847 = vpop.permute.xlu0 %846
        %848 = vrot.lane.b32.xlu0 %v644, 23
        %v849 = vpop.permute.xlu0 %848
        %850 = vrot.lane.b32.xlu0 %v645, 23
        %v851 = vpop.permute.xlu0 %850
        %852 = vrot.lane.b32.xlu0 %v646, 23
        %v853 = vpop.permute.xlu0 %852
        %854 = vrot.lane.b32.xlu0 %v647, 23
        %v855 = vpop.permute.xlu0 %854
        %856 = vrot.lane.b32.xlu0 %v634, 23
        %v857 = vpop.permute.xlu0 %856
        %858 = vrot.lane.b32.xlu0 %v648, 23
        %v859 = vpop.permute.xlu0 %858
        %860 = vrot.lane.b32.xlu0 %v649, 23
        %v861 = vpop.permute.xlu0 %860
        %862 = vrot.lane.b32.xlu0 %v650, 23
        %v863 = vpop.permute.xlu0 %862
        %864 = vrot.lane.b32.xlu0 %v651, 23
        %v865 = vpop.permute.xlu0 %864
        %866 = vrot.lane.b32.xlu0 %v653, 23
        %v867 = vpop.permute.xlu0 %866
        %868 = vrot.lane.b32.xlu0 %v673, 23
        %v869 = vpop.permute.xlu0 %868
        %870 = vrot.lane.b32.xlu0 %v674, 23
        %v871 = vpop.permute.xlu0 %870
        %872 = vrot.lane.b32.xlu0 %v675, 23
        %v873 = vpop.permute.xlu0 %872
        %874 = vrot.lane.b32.xlu0 %v676, 23
        %v875 = vpop.permute.xlu0 %874
        %876 = vrot.lane.b32.xlu0 %v663, 23
        %v877 = vpop.permute.xlu0 %876
        %878 = vrot.lane.b32.xlu0 %v677, 23
        %v879 = vpop.permute.xlu0 %878
        %880 = vrot.lane.b32.xlu0 %v678, 23
        %v881 = vpop.permute.xlu0 %880
        %882 = vrot.lane.b32.xlu0 %v679, 23
        %v883 = vpop.permute.xlu0 %882
        %884 = vrot.lane.b32.xlu0 %v680, 23
        %v885 = vpop.permute.xlu0 %884
        %886 = vrot.lane.b32.xlu0 %v682, 23
        %v887 = vpop.permute.xlu0 %886
        %888 = vrot.lane.b32.xlu0 %v702, 23
        %v889 = vpop.permute.xlu0 %888
        %890 = vrot.lane.b32.xlu0 %v703, 23
        %v891 = vpop.permute.xlu0 %890
        %892 = vrot.lane.b32.xlu0 %v704, 23
        %v893 = vpop.permute.xlu0 %892
        %894 = vrot.lane.b32.xlu0 %v705, 23
        %v895 = vpop.permute.xlu0 %894
        %896 = vrot.lane.b32.xlu0 %v692, 23
        %v897 = vpop.permute.xlu0 %896
        %898 = vrot.lane.b32.xlu0 %v706, 23
        %v899 = vpop.permute.xlu0 %898
        %900 = vrot.lane.b32.xlu0 %v707, 23
        %v901 = vpop.permute.xlu0 %900
        %902 = vrot.lane.b32.xlu0 %v708, 23
        %v903 = vpop.permute.xlu0 %902
        %904 = vrot.lane.b32.xlu0 %v709, 23
        %v905 = vpop.permute.xlu0 %904
        %vm906 = vcmask 187392
        %v907 = vsel %vm906, %v727, %v729
        %v908 = vsel %vm906, %v729, %v731
        %v909 = vsel %vm906, %v731, %v733
        %v910 = vsel %vm906, %v733, %v735
        %v911 = vsel %vm906, %v737, %v739
        %v912 = vsel %vm906, %v739, %v741
        %v913 = vsel %vm906, %v741, %v743
        %v914 = vsel %vm906, %v743, %v745
        %v915 = vsel %vm906, %v747, %v749
        %v916 = vsel %vm906, %v749, %v751
        %v917 = vsel %vm906, %v751, %v753
        %v918 = vsel %vm906, %v753, %v755
        %v919 = vsel %vm906, %v757, %v759
        %v920 = vsel %vm906, %v759, %v761
        %v921 = vsel %vm906, %v761, %v763
        %v922 = vsel %vm906, %v763, %v765
        %v923 = vsel %vm906, %v767, %v769
        %v924 = vsel %vm906, %v769, %v771
        %v925 = vsel %vm906, %v771, %v773
        %v926 = vsel %vm906, %v773, %v775
        %v927 = vsel %vm906, %v777, %v779
        %v928 = vsel %vm906, %v779, %v781
        %v929 = vsel %vm906, %v781, %v783
        %v930 = vsel %vm906, %v783, %v785
        %v931 = vsel %vm906, %v787, %v789
        %v932 = vsel %vm906, %v789, %v791
        %v933 = vsel %vm906, %v791, %v793
        %v934 = vsel %vm906, %v793, %v795
        %v935 = vsel %vm906, %v797, %v799
        %v936 = vsel %vm906, %v799, %v801
        %v937 = vsel %vm906, %v801, %v803
        %v938 = vsel %vm906, %v803, %v805
        %v939 = vsel %vm906, %v807, %v809
        %v940 = vsel %vm906, %v809, %v811
        %v941 = vsel %vm906, %v811, %v813
        %v942 = vsel %vm906, %v813, %v815
        %v943 = vsel %vm906, %v817, %v819
        %v944 = vsel %vm906, %v819, %v821
        %v945 = vsel %vm906, %v821, %v823
        %v946 = vsel %vm906, %v823, %v825
        %v947 = vsel %vm906, %v827, %v829
        %v948 = vsel %vm906, %v829, %v831
        %v949 = vsel %vm906, %v831, %v833
        %v950 = vsel %vm906, %v833, %v835
        %v951 = vsel %vm906, %v837, %v839
        %v952 = vsel %vm906, %v839, %v841
        %v953 = vsel %vm906, %v841, %v843
        %v954 = vsel %vm906, %v843, %v845
        %v955 = vsel %vm906, %v847, %v849
        %v956 = vsel %vm906, %v849, %v851
        %v957 = vsel %vm906, %v851, %v853
        %v958 = vsel %vm906, %v853, %v855
        %v959 = vsel %vm906, %v857, %v859
        %v960 = vsel %vm906, %v859, %v861
        %v961 = vsel %vm906, %v861, %v863
        %v962 = vsel %vm906, %v863, %v865
        %v963 = vsel %vm906, %v867, %v869
        %v964 = vsel %vm906, %v869, %v871
        %v965 = vsel %vm906, %v871, %v873
        %v966 = vsel %vm906, %v873, %v875
        %v967 = vsel %vm906, %v877, %v879
        %v968 = vsel %vm906, %v879, %v881
        %v969 = vsel %vm906, %v881, %v883
        %v970 = vsel %vm906, %v883, %v885
        %v971 = vsel %vm906, %v887, %v889
        %v972 = vsel %vm906, %v889, %v891
        %v973 = vsel %vm906, %v891, %v893
        %v974 = vsel %vm906, %v893, %v895
        %v975 = vsel %vm906, %v897, %v899
        %v976 = vsel %vm906, %v899, %v901
        %v977 = vsel %vm906, %v901, %v903
        %v978 = vsel %vm906, %v903, %v905
        %vm1051 = vcmask 130048
        %v1053 = vsel %vm1051, %v711, 0
        %v1056 = vsel %vm1051, %v713, 0
        %1058 = vmatprep.subr.mxu0 %v968
        %1059 = vmatpush1.msra.mxu0 %v967
        %1060 = vmatprep.subr.mxu0 %v964
        %1061 = vmatpush1.msra.mxu0 %v963
        %1062 = vmatprep.subr.mxu0 %v960
        %1063 = vmatpush1.msra.mxu0 %v959
        %1064 = vmatprep.subr.mxu0 %v956
        %1065 = vmatpush1.msra.mxu0 %v955
        %1066 = vmatprep.subr.mxu0 %v952
        %1067 = vmatpush1.msra.mxu0 %v951
        %1068 = vmatprep.subr.mxu0 %v948
        %1069 = vmatpush1.msra.mxu0 %v947
        %1070 = vmatprep.subr.mxu0 %v944
        %1071 = vmatpush1.msra.mxu0 %v943
        %1072 = vmatprep.subr.mxu0 %v940
        %1073 = vmatpush1.msra.mxu0 %v939
        %1074 = vmatprep.subr.mxu0 %v936
        %1075 = vmatpush1.msra.mxu0 %v935
        %1076 = vmatprep.subr.mxu0 %v932
        %1077 = vmatpush1.msra.mxu0 %v931
        %1078 = vmatprep.subr.mxu0 %v928
        %1079 = vmatpush1.msra.mxu0 %v927
        %1080 = vmatprep.subr.mxu0 %v924
        %1081 = vmatpush1.msra.mxu0 %v923
        %1082 = vmatprep.subr.mxu0 %v920
        %1083 = vmatpush1.msra.mxu0 %v919
        %1084 = vmatprep.subr.mxu0 %v916
        %1085 = vmatpush1.msra.mxu0 %v915
        %1086 = vmatprep.subr.mxu0 %v912
        %1087 = vmatpush1.msra.mxu0 %v911
        %1088 = vmatprep.subr.mxu0 %v908
        %1089 = vmatpush1.msra.mxu0 %v907
        %1090 = vmatprep.subr.mxu0 0.0
        %1091 = vmatpush2.msra.mxu0 0.0
        %1092 = vmatprep.subr.mxu0 0.0
        %1093 = vmatpush2.msra.mxu0 0.0
        %1094 = vmatprep.subr.mxu0 0.0
        %1095 = vmatpush2.msra.mxu0 0.0
        %1096 = vmatprep.subr.mxu0 0.0
        %1097 = vmatpush2.msra.mxu0 0.0
        %1098 = vmatprep.subr.mxu0 0.0
        %1099 = vmatpush2.msra.mxu0 0.0
        %1100 = vmatprep.subr.mxu0 0.0
        %1101 = vmatpush2.msra.mxu0 0.0
        %1102 = vmatprep.subr.mxu0 0.0
        %1103 = vmatpush2.msra.mxu0 0.0
        %1104 = vmatprep.subr.mxu0 0.0
        %1105 = vmatpush2.msra.mxu0 0.0
        %1106 = vmatprep.subr.mxu0 0.0
        %1107 = vmatpush2.msra.mxu0 0.0
        %1108 = vmatprep.subr.mxu0 0.0
        %1109 = vmatpush2.msra.mxu0 0.0
        %1110 = vmatprep.subr.mxu0 0.0
        %1111 = vmatpush2.msra.mxu0 0.0
        %1112 = vmatprep.subr.mxu0 0.0
        %1113 = vmatpush2.msra.mxu0 0.0
        %1114 = vmatprep.subr.mxu0 0.0
        %1115 = vmatpush2.msra.mxu0 0.0
        %1116 = vmatprep.subr.mxu0 0.0
        %1117 = vmatpush2.msra.mxu0 0.0
        %1118 = vmatprep.subr.mxu0 %v976
        %1119 = vmatpush2.msra.mxu0 %v975
        %1120 = vmatprep.subr.mxu0 %v972
        %1121 = vmatpush2.msra.mxu0 %v971
        %1122 = vmatprep.mubr.f32.mxu0 %v1053
        %1123 = vmatmul.mubr.f32.gmra.mxu0 %v710
        %v1124 = vpop.f32.mrf.mxu0
        %v1125 = vadd.f32 %v719, %v1124
        %v1126 = vpop.f32.mrf.mxu0
        %v1127 = vadd.f32 %v719, %v1126
        %1128 = vmatprep.mubr.f32.mxu0 %v1056
        %1129 = vmatmul.mubr.f32.gmra.mxu0 %v712
        %v1130 = vpop.f32.mrf.mxu0
        %v1131 = vadd.f32 %v724, %v1130
        %v1132 = vpop.f32.mrf.mxu0
        %v1133 = vadd.f32 %v724, %v1132
        %1134 = vdwg.mxu0
        %1135 = vmatprep.subr.mxu0 %v970
        %1136 = vmatpush1.msra.mxu0 %v969
        %1137 = vmatprep.subr.mxu0 %v966
        %1138 = vmatpush1.msra.mxu0 %v965
        %1139 = vmatprep.subr.mxu0 %v962
        %1140 = vmatpush1.msra.mxu0 %v961
        %1141 = vmatprep.subr.mxu0 %v958
        %1142 = vmatpush1.msra.mxu0 %v957
        %1143 = vmatprep.subr.mxu0 %v954
        %1144 = vmatpush1.msra.mxu0 %v953
        %1145 = vmatprep.subr.mxu0 %v950
        %1146 = vmatpush1.msra.mxu0 %v949
        %1147 = vmatprep.subr.mxu0 %v946
        %1148 = vmatpush1.msra.mxu0 %v945
        %1149 = vmatprep.subr.mxu0 %v942
        %1150 = vmatpush1.msra.mxu0 %v941
        %1151 = vmatprep.subr.mxu0 %v938
        %1152 = vmatpush1.msra.mxu0 %v937
        %1153 = vmatprep.subr.mxu0 %v934
        %1154 = vmatpush1.msra.mxu0 %v933
        %1155 = vmatprep.subr.mxu0 %v930
        %1156 = vmatpush1.msra.mxu0 %v929
        %1157 = vmatprep.subr.mxu0 %v926
        %1158 = vmatpush1.msra.mxu0 %v925
        %1159 = vmatprep.subr.mxu0 %v922
        %1160 = vmatpush1.msra.mxu0 %v921
        %1161 = vmatprep.subr.mxu0 %v918
        %1162 = vmatpush1.msra.mxu0 %v917
        %1163 = vmatprep.subr.mxu0 %v914
        %1164 = vmatpush1.msra.mxu0 %v913
        %1165 = vmatprep.subr.mxu0 %v910
        %1166 = vmatpush1.msra.mxu0 %v909
        %1167 = vmatprep.subr.mxu0 0.0
        %1168 = vmatpush2.msra.mxu0 0.0
        %1169 = vmatprep.subr.mxu0 0.0
        %1170 = vmatpush2.msra.mxu0 0.0
        %1171 = vmatprep.subr.mxu0 0.0
        %1172 = vmatpush2.msra.mxu0 0.0
        %1173 = vmatprep.subr.mxu0 0.0
        %1174 = vmatpush2.msra.mxu0 0.0
        %1175 = vmatprep.subr.mxu0 0.0
        %1176 = vmatpush2.msra.mxu0 0.0
        %1177 = vmatprep.subr.mxu0 0.0
        %1178 = vmatpush2.msra.mxu0 0.0
        %1179 = vmatprep.subr.mxu0 0.0
        %1180 = vmatpush2.msra.mxu0 0.0
        %1181 = vmatprep.subr.mxu0 0.0
        %1182 = vmatpush2.msra.mxu0 0.0
        %1183 = vmatprep.subr.mxu0 0.0
        %1184 = vmatpush2.msra.mxu0 0.0
        %1185 = vmatprep.subr.mxu0 0.0
        %1186 = vmatpush2.msra.mxu0 0.0
        %1187 = vmatprep.subr.mxu0 0.0
        %1188 = vmatpush2.msra.mxu0 0.0
        %1189 = vmatprep.subr.mxu0 0.0
        %1190 = vmatpush2.msra.mxu0 0.0
        %1191 = vmatprep.subr.mxu0 0.0
        %1192 = vmatpush2.msra.mxu0 0.0
        %1193 = vmatprep.subr.mxu0 0.0
        %1194 = vmatpush2.msra.mxu0 0.0
        %1195 = vmatprep.subr.mxu0 %v978
        %1196 = vmatpush2.msra.mxu0 %v977
        %1197 = vmatprep.subr.mxu0 %v974
        %1198 = vmatpush2.msra.mxu0 %v973
        %1199 = vmatprep.mubr.f32.mxu0 %v1053
        %1200 = vmatmul.mubr.f32.gmra.mxu0 %v710
        %v1201 = vpop.f32.mrf.mxu0
        %v1202 = vadd.f32 %v719, %v1201
        %v1203 = vpop.f32.mrf.mxu0
        %v1204 = vadd.f32 %v719, %v1203
        %1205 = vmatprep.mubr.f32.mxu0 %v1056
        %1206 = vmatmul.mubr.f32.gmra.mxu0 %v712
        %v1207 = vpop.f32.mrf.mxu0
        %v1208 = vadd.f32 %v724, %v1207
        %v1209 = vpop.f32.mrf.mxu0
        %v1210 = vadd.f32 %v724, %v1209
        %1211 = vdwg.mxu0
        %v1212 = vmax.f32 %v1125, 0.0
        %v1213 = vmax.f32 %v1127, 0.0
        %v1214 = vmax.f32 %v1202, 0.0
        %v1215 = vmax.f32 %v1204, 0.0
        %v1216 = vmax.f32 %v1131, 0.0
        %v1217 = vmax.f32 %v1133, 0.0
        %v1218 = vmax.f32 %v1208, 0.0
        %v1219 = vmax.f32 %v1210, 0.0
        %v1221 = vlaneseq
        %v1222 = vshrl.u32 %v1221, 7
        %v1223 = vsub.s32 0, %v1222
        %v1224 = vrot.slane %v429, %v1223
        %v1225 = vlaneseq
        %v1226 = vshrl.u32 %v1225, 7
        %v1227 = vsub.s32 1, %v1226
        %v1228 = vrot.slane %v429, %v1227
        %v1229 = vlaneseq
        %v1230 = vshrl.u32 %v1229, 7
        %v1231 = vsub.s32 2, %v1230
        %v1232 = vrot.slane %v429, %v1231
        %v1233 = vlaneseq
        %v1234 = vshrl.u32 %v1233, 7
        %v1235 = vsub.s32 3, %v1234
        %v1236 = vrot.slane %v429, %v1235
        %v1241 = vmul.f32 %v1212, %v1224
        %v1242 = vmul.f32 %v1213, %v1228
        %v1243 = vmul.f32 %v1214, %v1232
        %v1244 = vmul.f32 %v1215, %v1236
        %v1245 = vmul.f32 %v1216, %v1224
        %v1246 = vmul.f32 %v1217, %v1228
        %v1247 = vmul.f32 %v1218, %v1232
        %v1248 = vmul.f32 %v1219, %v1236
        %1249 = vst [vmem:[#allocation2 + $0x8] sm:$0xff] %v1241
        %1250 = vst [vmem:[#allocation2 + $0x10] sm:$0xff] %v1242
        %1251 = vst [vmem:[#allocation2 + $0x18] sm:$0xff] %v1243
        %1252 = vst [vmem:[#allocation2 + $0x20] sm:$0xff] %v1244
        %1253 = vst [vmem:[#allocation2 + $0x38] sm:$0xff] %v1245
        %1254 = vst [vmem:[#allocation2 + $0x40] sm:$0xff] %v1246
        %1255 = vst [vmem:[#allocation2 + $0x48] sm:$0xff] %v1247
        %1256 = vst [vmem:[#allocation2 + $0x50] sm:$0xff] %v1248
        %v1257 = vld [vmem:[#allocation2] sm:$0xff]
        %v1258 = vld [vmem:[#allocation2 + $0x8] sm:$0xff]
        %v1259 = vld [vmem:[#allocation2 + $0x10] sm:$0xff]
        %v1260 = vld [vmem:[#allocation2 + $0x18] sm:$0xff]
        %v1261 = vld [vmem:[#allocation2 + $0x20] sm:$0xff]
        %v1262 = vld [vmem:[#allocation2 + $0x30] sm:$0xff]
        %v1263 = vld [vmem:[#allocation2 + $0x38] sm:$0xff]
        %v1264 = vld [vmem:[#allocation2 + $0x40] sm:$0xff]
        %v1265 = vld [vmem:[#allocation2 + $0x48] sm:$0xff]
        %v1266 = vld [vmem:[#allocation2 + $0x50] sm:$0xff]
        %v1267 = vld [vmem:[#allocation2 + $0x8] sm:$0xff]
        %v1268 = vld [vmem:[#allocation2 + $0x10] sm:$0xff]
        %v1269 = vld [vmem:[#allocation2 + $0x18] sm:$0xff]
        %v1270 = vld [vmem:[#allocation2 + $0x20] sm:$0xff]
        %v1271 = vld [vmem:[#allocation2 + $0x28] sm:$0xff]
        %v1272 = vld [vmem:[#allocation2 + $0x38] sm:$0xff]
        %v1273 = vld [vmem:[#allocation2 + $0x40] sm:$0xff]
        %v1274 = vld [vmem:[#allocation2 + $0x48] sm:$0xff]
        %v1275 = vld [vmem:[#allocation2 + $0x50] sm:$0xff]
        %v1276 = vld [vmem:[#allocation2 + $0x58] sm:$0xff]
        %1287 = vrot.lane.b32.xlu0 %v1257, 127
        %v1288 = vpop.permute.xlu0 %1287
        %1289 = vrot.lane.b32.xlu0 %v1258, 127
        %v1290 = vpop.permute.xlu0 %1289
        %1291 = vrot.lane.b32.xlu0 %v1259, 127
        %v1292 = vpop.permute.xlu0 %1291
        %1293 = vrot.lane.b32.xlu0 %v1260, 127
        %v1294 = vpop.permute.xlu0 %1293
        %1295 = vrot.lane.b32.xlu0 %v1261, 127
        %v1296 = vpop.permute.xlu0 %1295
        %1297 = vrot.lane.b32.xlu0 %v1262, 127
        %v1298 = vpop.permute.xlu0 %1297
        %1299 = vrot.lane.b32.xlu0 %v1263, 127
        %v1300 = vpop.permute.xlu0 %1299
        %1301 = vrot.lane.b32.xlu0 %v1264, 127
        %v1302 = vpop.permute.xlu0 %1301
        %1303 = vrot.lane.b32.xlu0 %v1265, 127
        %v1304 = vpop.permute.xlu0 %1303
        %1305 = vrot.lane.b32.xlu0 %v1266, 127
        %v1306 = vpop.permute.xlu0 %1305
        %v1307 = vsel %vm494, %v1288, %v1290
        %v1308 = vsel %vm494, %v1290, %v1292
        %v1309 = vsel %vm494, %v1292, %v1294
        %v1310 = vsel %vm494, %v1294, %v1296
        %v1311 = vsel %vm494, %v1298, %v1300
        %v1312 = vsel %vm494, %v1300, %v1302
        %v1313 = vsel %vm494, %v1302, %v1304
        %v1314 = vsel %vm494, %v1304, %v1306
        %1315 = vrot.lane.b32.xlu0 %v1257, 126
        %v1316 = vpop.permute.xlu0 %1315
        %1317 = vrot.lane.b32.xlu0 %v1258, 126
        %v1318 = vpop.permute.xlu0 %1317
        %1319 = vrot.lane.b32.xlu0 %v1259, 126
        %v1320 = vpop.permute.xlu0 %1319
        %1321 = vrot.lane.b32.xlu0 %v1260, 126
        %v1322 = vpop.permute.xlu0 %1321
        %1323 = vrot.lane.b32.xlu0 %v1261, 126
        %v1324 = vpop.permute.xlu0 %1323
        %1325 = vrot.lane.b32.xlu0 %v1262, 126
        %v1326 = vpop.permute.xlu0 %1325
        %1327 = vrot.lane.b32.xlu0 %v1263, 126
        %v1328 = vpop.permute.xlu0 %1327
        %1329 = vrot.lane.b32.xlu0 %v1264, 126
        %v1330 = vpop.permute.xlu0 %1329
        %1331 = vrot.lane.b32.xlu0 %v1265, 126
        %v1332 = vpop.permute.xlu0 %1331
        %1333 = vrot.lane.b32.xlu0 %v1266, 126
        %v1334 = vpop.permute.xlu0 %1333
        %v1335 = vsel %vm523, %v1316, %v1318
        %v1336 = vsel %vm523, %v1318, %v1320
        %v1337 = vsel %vm523, %v1320, %v1322
        %v1338 = vsel %vm523, %v1322, %v1324
        %v1339 = vsel %vm523, %v1326, %v1328
        %v1340 = vsel %vm523, %v1328, %v1330
        %v1341 = vsel %vm523, %v1330, %v1332
        %v1342 = vsel %vm523, %v1332, %v1334
        %1343 = vrot.lane.b32.xlu0 %v1257, 106
        %v1344 = vpop.permute.xlu0 %1343
        %1345 = vrot.lane.b32.xlu0 %v1258, 106
        %v1346 = vpop.permute.xlu0 %1345
        %1347 = vrot.lane.b32.xlu0 %v1259, 106
        %v1348 = vpop.permute.xlu0 %1347
        %1349 = vrot.lane.b32.xlu0 %v1260, 106
        %v1350 = vpop.permute.xlu0 %1349
        %1351 = vrot.lane.b32.xlu0 %v1261, 106
        %v1352 = vpop.permute.xlu0 %1351
        %1353 = vrot.lane.b32.xlu0 %v1262, 106
        %v1354 = vpop.permute.xlu0 %1353
        %1355 = vrot.lane.b32.xlu0 %v1263, 106
        %v1356 = vpop.permute.xlu0 %1355
        %1357 = vrot.lane.b32.xlu0 %v1264, 106
        %v1358 = vpop.permute.xlu0 %1357
        %1359 = vrot.lane.b32.xlu0 %v1265, 106
        %v1360 = vpop.permute.xlu0 %1359
        %1361 = vrot.lane.b32.xlu0 %v1266, 106
        %v1362 = vpop.permute.xlu0 %1361
        %v1363 = vsel %vm552, %v1344, %v1346
        %v1364 = vsel %vm552, %v1346, %v1348
        %v1365 = vsel %vm552, %v1348, %v1350
        %v1366 = vsel %vm552, %v1350, %v1352
        %v1367 = vsel %vm552, %v1354, %v1356
        %v1368 = vsel %vm552, %v1356, %v1358
        %v1369 = vsel %vm552, %v1358, %v1360
        %v1370 = vsel %vm552, %v1360, %v1362
        %1371 = vrot.lane.b32.xlu0 %v1258, 105
        %v1372 = vpop.permute.xlu0 %1371
        %1373 = vrot.lane.b32.xlu0 %v1259, 105
        %v1374 = vpop.permute.xlu0 %1373
        %1375 = vrot.lane.b32.xlu0 %v1260, 105
        %v1376 = vpop.permute.xlu0 %1375
        %1377 = vrot.lane.b32.xlu0 %v1261, 105
        %v1378 = vpop.permute.xlu0 %1377
        %1379 = vrot.lane.b32.xlu0 %v1263, 105
        %v1380 = vpop.permute.xlu0 %1379
        %1381 = vrot.lane.b32.xlu0 %v1264, 105
        %v1382 = vpop.permute.xlu0 %1381
        %1383 = vrot.lane.b32.xlu0 %v1265, 105
        %v1384 = vpop.permute.xlu0 %1383
        %1385 = vrot.lane.b32.xlu0 %v1266, 105
        %v1386 = vpop.permute.xlu0 %1385
        %v1387 = vsel %vm577, %v1372, %v1374
        %v1388 = vsel %vm577, %v1374, %v1376
        %v1389 = vsel %vm577, %v1376, %v1378
        %v1390 = vsel %vm577, %v1380, %v1382
        %v1391 = vsel %vm577, %v1382, %v1384
        %v1392 = vsel %vm577, %v1384, %v1386
        %1403 = vrot.lane.b32.xlu0 %v1267, 104
        %v1404 = vpop.permute.xlu0 %1403
        %1405 = vrot.lane.b32.xlu0 %v1268, 104
        %v1406 = vpop.permute.xlu0 %1405
        %1407 = vrot.lane.b32.xlu0 %v1269, 104
        %v1408 = vpop.permute.xlu0 %1407
        %1409 = vrot.lane.b32.xlu0 %v1270, 104
        %v1410 = vpop.permute.xlu0 %1409
        %1411 = vrot.lane.b32.xlu0 %v1271, 104
        %v1412 = vpop.permute.xlu0 %1411
        %1413 = vrot.lane.b32.xlu0 %v1272, 104
        %v1414 = vpop.permute.xlu0 %1413
        %1415 = vrot.lane.b32.xlu0 %v1273, 104
        %v1416 = vpop.permute.xlu0 %1415
        %1417 = vrot.lane.b32.xlu0 %v1274, 104
        %v1418 = vpop.permute.xlu0 %1417
        %1419 = vrot.lane.b32.xlu0 %v1275, 104
        %v1420 = vpop.permute.xlu0 %1419
        %1421 = vrot.lane.b32.xlu0 %v1276, 104
        %v1422 = vpop.permute.xlu0 %1421
        %v1423 = vsel %vm614, %v1404, %v1406
        %v1424 = vsel %vm614, %v1406, %v1408
        %v1425 = vsel %vm614, %v1408, %v1410
        %v1426 = vsel %vm614, %v1410, %v1412
        %v1427 = vsel %vm614, %v1414, %v1416
        %v1428 = vsel %vm614, %v1416, %v1418
        %v1429 = vsel %vm614, %v1418, %v1420
        %v1430 = vsel %vm614, %v1420, %v1422
        %1431 = vrot.lane.b32.xlu0 %v1267, 84
        %v1432 = vpop.permute.xlu0 %1431
        %1433 = vrot.lane.b32.xlu0 %v1268, 84
        %v1434 = vpop.permute.xlu0 %1433
        %1435 = vrot.lane.b32.xlu0 %v1269, 84
        %v1436 = vpop.permute.xlu0 %1435
        %1437 = vrot.lane.b32.xlu0 %v1270, 84
        %v1438 = vpop.permute.xlu0 %1437
        %1439 = vrot.lane.b32.xlu0 %v1271, 84
        %v1440 = vpop.permute.xlu0 %1439
        %1441 = vrot.lane.b32.xlu0 %v1272, 84
        %v1442 = vpop.permute.xlu0 %1441
        %1443 = vrot.lane.b32.xlu0 %v1273, 84
        %v1444 = vpop.permute.xlu0 %1443
        %1445 = vrot.lane.b32.xlu0 %v1274, 84
        %v1446 = vpop.permute.xlu0 %1445
        %1447 = vrot.lane.b32.xlu0 %v1275, 84
        %v1448 = vpop.permute.xlu0 %1447
        %1449 = vrot.lane.b32.xlu0 %v1276, 84
        %v1450 = vpop.permute.xlu0 %1449
        %v1451 = vsel %vm643, %v1432, %v1434
        %v1452 = vsel %vm643, %v1434, %v1436
        %v1453 = vsel %vm643, %v1436, %v1438
        %v1454 = vsel %vm643, %v1438, %v1440
        %v1455 = vsel %vm643, %v1442, %v1444
        %v1456 = vsel %vm643, %v1444, %v1446
        %v1457 = vsel %vm643, %v1446, %v1448
        %v1458 = vsel %vm643, %v1448, %v1450
        %1459 = vrot.lane.b32.xlu0 %v1267, 83
        %v1460 = vpop.permute.xlu0 %1459
        %1461 = vrot.lane.b32.xlu0 %v1268, 83
        %v1462 = vpop.permute.xlu0 %1461
        %1463 = vrot.lane.b32.xlu0 %v1269, 83
        %v1464 = vpop.permute.xlu0 %1463
        %1465 = vrot.lane.b32.xlu0 %v1270, 83
        %v1466 = vpop.permute.xlu0 %1465
        %1467 = vrot.lane.b32.xlu0 %v1271, 83
        %v1468 = vpop.permute.xlu0 %1467
        %1469 = vrot.lane.b32.xlu0 %v1272, 83
        %v1470 = vpop.permute.xlu0 %1469
        %1471 = vrot.lane.b32.xlu0 %v1273, 83
        %v1472 = vpop.permute.xlu0 %1471
        %1473 = vrot.lane.b32.xlu0 %v1274, 83
        %v1474 = vpop.permute.xlu0 %1473
        %1475 = vrot.lane.b32.xlu0 %v1275, 83
        %v1476 = vpop.permute.xlu0 %1475
        %1477 = vrot.lane.b32.xlu0 %v1276, 83
        %v1478 = vpop.permute.xlu0 %1477
        %v1479 = vsel %vm672, %v1460, %v1462
        %v1480 = vsel %vm672, %v1462, %v1464
        %v1481 = vsel %vm672, %v1464, %v1466
        %v1482 = vsel %vm672, %v1466, %v1468
        %v1483 = vsel %vm672, %v1470, %v1472
        %v1484 = vsel %vm672, %v1472, %v1474
        %v1485 = vsel %vm672, %v1474, %v1476
        %v1486 = vsel %vm672, %v1476, %v1478
        %1487 = vrot.lane.b32.xlu0 %v1267, 82
        %v1488 = vpop.permute.xlu0 %1487
        %1489 = vrot.lane.b32.xlu0 %v1268, 82
        %v1490 = vpop.permute.xlu0 %1489
        %1491 = vrot.lane.b32.xlu0 %v1269, 82
        %v1492 = vpop.permute.xlu0 %1491
        %1493 = vrot.lane.b32.xlu0 %v1270, 82
        %v1494 = vpop.permute.xlu0 %1493
        %1495 = vrot.lane.b32.xlu0 %v1271, 82
        %v1496 = vpop.permute.xlu0 %1495
        %1497 = vrot.lane.b32.xlu0 %v1272, 82
        %v1498 = vpop.permute.xlu0 %1497
        %1499 = vrot.lane.b32.xlu0 %v1273, 82
        %v1500 = vpop.permute.xlu0 %1499
        %1501 = vrot.lane.b32.xlu0 %v1274, 82
        %v1502 = vpop.permute.xlu0 %1501
        %1503 = vrot.lane.b32.xlu0 %v1275, 82
        %v1504 = vpop.permute.xlu0 %1503
        %1505 = vrot.lane.b32.xlu0 %v1276, 82
        %v1506 = vpop.permute.xlu0 %1505
        %v1507 = vsel %vm701, %v1488, %v1490
        %v1508 = vsel %vm701, %v1490, %v1492
        %v1509 = vsel %vm701, %v1492, %v1494
        %v1510 = vsel %vm701, %v1494, %v1496
        %v1511 = vsel %vm701, %v1498, %v1500
        %v1512 = vsel %vm701, %v1500, %v1502
        %v1513 = vsel %vm701, %v1502, %v1504
        %v1514 = vsel %vm701, %v1504, %v1506
        %v1515 = vld [vmem:[%s4] sm:$0xff]
        %v1516 = vld [vmem:[%s4 + $0x8] sm:$0xff]
        %v1517 = vld [vmem:[%s4 + $0x10] sm:$0xff]
        %v1518 = vld [vmem:[%s4 + $0x18] sm:$0xff]
        %v1519 = vld [vmem:[%s5] sm:$0xff]
        %v1520 = vld [vmem:[%s5 + $0x8] sm:$0xff]
        %1522 = vset.pattern.permute.xlu0 0
        %1523 = vperm.xlu0 %1522, %v1519
        %v1524 = vpop.permute.xlu0 %1523
        %1527 = vset.pattern.permute.xlu0 0
        %1528 = vperm.xlu0 %1527, %v1520
        %v1529 = vpop.permute.xlu0 %1528
        %1531 = vrot.lane.b32.xlu0 %v1257, 23
        %v1532 = vpop.permute.xlu0 %1531
        %1533 = vrot.lane.b32.xlu0 %v1258, 23
        %v1534 = vpop.permute.xlu0 %1533
        %1535 = vrot.lane.b32.xlu0 %v1259, 23
        %v1536 = vpop.permute.xlu0 %1535
        %1537 = vrot.lane.b32.xlu0 %v1260, 23
        %v1538 = vpop.permute.xlu0 %1537
        %1539 = vrot.lane.b32.xlu0 %v1261, 23
        %v1540 = vpop.permute.xlu0 %1539
        %1541 = vrot.lane.b32.xlu0 %v1262, 23
        %v1542 = vpop.permute.xlu0 %1541
        %1543 = vrot.lane.b32.xlu0 %v1263, 23
        %v1544 = vpop.permute.xlu0 %1543
        %1545 = vrot.lane.b32.xlu0 %v1264, 23
        %v1546 = vpop.permute.xlu0 %1545
        %1547 = vrot.lane.b32.xlu0 %v1265, 23
        %v1548 = vpop.permute.xlu0 %1547
        %1549 = vrot.lane.b32.xlu0 %v1266, 23
        %v1550 = vpop.permute.xlu0 %1549
        %1551 = vrot.lane.b32.xlu0 %v1307, 23
        %v1552 = vpop.permute.xlu0 %1551
        %1553 = vrot.lane.b32.xlu0 %v1308, 23
        %v1554 = vpop.permute.xlu0 %1553
        %1555 = vrot.lane.b32.xlu0 %v1309, 23
        %v1556 = vpop.permute.xlu0 %1555
        %1557 = vrot.lane.b32.xlu0 %v1310, 23
        %v1558 = vpop.permute.xlu0 %1557
        %1559 = vrot.lane.b32.xlu0 %v1296, 23
        %v1560 = vpop.permute.xlu0 %1559
        %1561 = vrot.lane.b32.xlu0 %v1311, 23
        %v1562 = vpop.permute.xlu0 %1561
        %1563 = vrot.lane.b32.xlu0 %v1312, 23
        %v1564 = vpop.permute.xlu0 %1563
        %1565 = vrot.lane.b32.xlu0 %v1313, 23
        %v1566 = vpop.permute.xlu0 %1565
        %1567 = vrot.lane.b32.xlu0 %v1314, 23
        %v1568 = vpop.permute.xlu0 %1567
        %1569 = vrot.lane.b32.xlu0 %v1306, 23
        %v1570 = vpop.permute.xlu0 %1569
        %1571 = vrot.lane.b32.xlu0 %v1335, 23
        %v1572 = vpop.permute.xlu0 %1571
        %1573 = vrot.lane.b32.xlu0 %v1336, 23
        %v1574 = vpop.permute.xlu0 %1573
        %1575 = vrot.lane.b32.xlu0 %v1337, 23
        %v1576 = vpop.permute.xlu0 %1575
        %1577 = vrot.lane.b32.xlu0 %v1338, 23
        %v1578 = vpop.permute.xlu0 %1577
        %1579 = vrot.lane.b32.xlu0 %v1324, 23
        %v1580 = vpop.permute.xlu0 %1579
        %1581 = vrot.lane.b32.xlu0 %v1339, 23
        %v1582 = vpop.permute.xlu0 %1581
        %1583 = vrot.lane.b32.xlu0 %v1340, 23
        %v1584 = vpop.permute.xlu0 %1583
        %1585 = vrot.lane.b32.xlu0 %v1341, 23
        %v1586 = vpop.permute.xlu0 %1585
        %1587 = vrot.lane.b32.xlu0 %v1342, 23
        %v1588 = vpop.permute.xlu0 %1587
        %1589 = vrot.lane.b32.xlu0 %v1334, 23
        %v1590 = vpop.permute.xlu0 %1589
        %1591 = vrot.lane.b32.xlu0 %v1363, 23
        %v1592 = vpop.permute.xlu0 %1591
        %1593 = vrot.lane.b32.xlu0 %v1364, 23
        %v1594 = vpop.permute.xlu0 %1593
        %1595 = vrot.lane.b32.xlu0 %v1365, 23
        %v1596 = vpop.permute.xlu0 %1595
        %1597 = vrot.lane.b32.xlu0 %v1366, 23
        %v1598 = vpop.permute.xlu0 %1597
        %1599 = vrot.lane.b32.xlu0 %v1352, 23
        %v1600 = vpop.permute.xlu0 %1599
        %1601 = vrot.lane.b32.xlu0 %v1367, 23
        %v1602 = vpop.permute.xlu0 %1601
        %1603 = vrot.lane.b32.xlu0 %v1368, 23
        %v1604 = vpop.permute.xlu0 %1603
        %1605 = vrot.lane.b32.xlu0 %v1369, 23
        %v1606 = vpop.permute.xlu0 %1605
        %1607 = vrot.lane.b32.xlu0 %v1370, 23
        %v1608 = vpop.permute.xlu0 %1607
        %1609 = vrot.lane.b32.xlu0 %v1362, 23
        %v1610 = vpop.permute.xlu0 %1609
        %1611 = vrot.lane.b32.xlu0 %v1372, 23
        %v1612 = vpop.permute.xlu0 %1611
        %1613 = vrot.lane.b32.xlu0 %v1387, 23
        %v1614 = vpop.permute.xlu0 %1613
        %1615 = vrot.lane.b32.xlu0 %v1388, 23
        %v1616 = vpop.permute.xlu0 %1615
        %1617 = vrot.lane.b32.xlu0 %v1389, 23
        %v1618 = vpop.permute.xlu0 %1617
        %1619 = vrot.lane.b32.xlu0 %v1378, 23
        %v1620 = vpop.permute.xlu0 %1619
        %1621 = vrot.lane.b32.xlu0 %v1380, 23
        %v1622 = vpop.permute.xlu0 %1621
        %1623 = vrot.lane.b32.xlu0 %v1390, 23
        %v1624 = vpop.permute.xlu0 %1623
        %1625 = vrot.lane.b32.xlu0 %v1391, 23
        %v1626 = vpop.permute.xlu0 %1625
        %1627 = vrot.lane.b32.xlu0 %v1392, 23
        %v1628 = vpop.permute.xlu0 %1627
        %1629 = vrot.lane.b32.xlu0 %v1386, 23
        %v1630 = vpop.permute.xlu0 %1629
        %1631 = vrot.lane.b32.xlu0 %v1404, 23
        %v1632 = vpop.permute.xlu0 %1631
        %1633 = vrot.lane.b32.xlu0 %v1423, 23
        %v1634 = vpop.permute.xlu0 %1633
        %1635 = vrot.lane.b32.xlu0 %v1424, 23
        %v1636 = vpop.permute.xlu0 %1635
        %1637 = vrot.lane.b32.xlu0 %v1425, 23
        %v1638 = vpop.permute.xlu0 %1637
        %1639 = vrot.lane.b32.xlu0 %v1426, 23
        %v1640 = vpop.permute.xlu0 %1639
        %1641 = vrot.lane.b32.xlu0 %v1414, 23
        %v1642 = vpop.permute.xlu0 %1641
        %1643 = vrot.lane.b32.xlu0 %v1427, 23
        %v1644 = vpop.permute.xlu0 %1643
        %1645 = vrot.lane.b32.xlu0 %v1428, 23
        %v1646 = vpop.permute.xlu0 %1645
        %1647 = vrot.lane.b32.xlu0 %v1429, 23
        %v1648 = vpop.permute.xlu0 %1647
        %1649 = vrot.lane.b32.xlu0 %v1430, 23
        %v1650 = vpop.permute.xlu0 %1649
        %1651 = vrot.lane.b32.xlu0 %v1432, 23
        %v1652 = vpop.permute.xlu0 %1651
        %1653 = vrot.lane.b32.xlu0 %v1451, 23
        %v1654 = vpop.permute.xlu0 %1653
        %1655 = vrot.lane.b32.xlu0 %v1452, 23
        %v1656 = vpop.permute.xlu0 %1655
        %1657 = vrot.lane.b32.xlu0 %v1453, 23
        %v1658 = vpop.permute.xlu0 %1657
        %1659 = vrot.lane.b32.xlu0 %v1454, 23
        %v1660 = vpop.permute.xlu0 %1659
        %1661 = vrot.lane.b32.xlu0 %v1442, 23
        %v1662 = vpop.permute.xlu0 %1661
        %1663 = vrot.lane.b32.xlu0 %v1455, 23
        %v1664 = vpop.permute.xlu0 %1663
        %1665 = vrot.lane.b32.xlu0 %v1456, 23
        %v1666 = vpop.permute.xlu0 %1665
        %1667 = vrot.lane.b32.xlu0 %v1457, 23
        %v1668 = vpop.permute.xlu0 %1667
        %1669 = vrot.lane.b32.xlu0 %v1458, 23
        %v1670 = vpop.permute.xlu0 %1669
        %1671 = vrot.lane.b32.xlu0 %v1460, 23
        %v1672 = vpop.permute.xlu0 %1671
        %1673 = vrot.lane.b32.xlu0 %v1479, 23
        %v1674 = vpop.permute.xlu0 %1673
        %1675 = vrot.lane.b32.xlu0 %v1480, 23
        %v1676 = vpop.permute.xlu0 %1675
        %1677 = vrot.lane.b32.xlu0 %v1481, 23
        %v1678 = vpop.permute.xlu0 %1677
        %1679 = vrot.lane.b32.xlu0 %v1482, 23
        %v1680 = vpop.permute.xlu0 %1679
        %1681 = vrot.lane.b32.xlu0 %v1470, 23
        %v1682 = vpop.permute.xlu0 %1681
        %1683 = vrot.lane.b32.xlu0 %v1483, 23
        %v1684 = vpop.permute.xlu0 %1683
        %1685 = vrot.lane.b32.xlu0 %v1484, 23
        %v1686 = vpop.permute.xlu0 %1685
        %1687 = vrot.lane.b32.xlu0 %v1485, 23
        %v1688 = vpop.permute.xlu0 %1687
        %1689 = vrot.lane.b32.xlu0 %v1486, 23
        %v1690 = vpop.permute.xlu0 %1689
        %1691 = vrot.lane.b32.xlu0 %v1488, 23
        %v1692 = vpop.permute.xlu0 %1691
        %1693 = vrot.lane.b32.xlu0 %v1507, 23
        %v1694 = vpop.permute.xlu0 %1693
        %1695 = vrot.lane.b32.xlu0 %v1508, 23
        %v1696 = vpop.permute.xlu0 %1695
        %1697 = vrot.lane.b32.xlu0 %v1509, 23
        %v1698 = vpop.permute.xlu0 %1697
        %1699 = vrot.lane.b32.xlu0 %v1510, 23
        %v1700 = vpop.permute.xlu0 %1699
        %1701 = vrot.lane.b32.xlu0 %v1498, 23
        %v1702 = vpop.permute.xlu0 %1701
        %1703 = vrot.lane.b32.xlu0 %v1511, 23
        %v1704 = vpop.permute.xlu0 %1703
        %1705 = vrot.lane.b32.xlu0 %v1512, 23
        %v1706 = vpop.permute.xlu0 %1705
        %1707 = vrot.lane.b32.xlu0 %v1513, 23
        %v1708 = vpop.permute.xlu0 %1707
        %1709 = vrot.lane.b32.xlu0 %v1514, 23
        %v1710 = vpop.permute.xlu0 %1709
        %v1711 = vsel %vm906, %v1532, %v1534
        %v1712 = vsel %vm906, %v1534, %v1536
        %v1713 = vsel %vm906, %v1536, %v1538
        %v1714 = vsel %vm906, %v1538, %v1540
        %v1715 = vsel %vm906, %v1542, %v1544
        %v1716 = vsel %vm906, %v1544, %v1546
        %v1717 = vsel %vm906, %v1546, %v1548
        %v1718 = vsel %vm906, %v1548, %v1550
        %v1719 = vsel %vm906, %v1552, %v1554
        %v1720 = vsel %vm906, %v1554, %v1556
        %v1721 = vsel %vm906, %v1556, %v1558
        %v1722 = vsel %vm906, %v1558, %v1560
        %v1723 = vsel %vm906, %v1562, %v1564
        %v1724 = vsel %vm906, %v1564, %v1566
        %v1725 = vsel %vm906, %v1566, %v1568
        %v1726 = vsel %vm906, %v1568, %v1570
        %v1727 = vsel %vm906, %v1572, %v1574
        %v1728 = vsel %vm906, %v1574, %v1576
        %v1729 = vsel %vm906, %v1576, %v1578
        %v1730 = vsel %vm906, %v1578, %v1580
        %v1731 = vsel %vm906, %v1582, %v1584
        %v1732 = vsel %vm906, %v1584, %v1586
        %v1733 = vsel %vm906, %v1586, %v1588
        %v1734 = vsel %vm906, %v1588, %v1590
        %v1735 = vsel %vm906, %v1592, %v1594
        %v1736 = vsel %vm906, %v1594, %v1596
        %v1737 = vsel %vm906, %v1596, %v1598
        %v1738 = vsel %vm906, %v1598, %v1600
        %v1739 = vsel %vm906, %v1602, %v1604
        %v1740 = vsel %vm906, %v1604, %v1606
        %v1741 = vsel %vm906, %v1606, %v1608
        %v1742 = vsel %vm906, %v1608, %v1610
        %v1743 = vsel %vm906, %v1612, %v1614
        %v1744 = vsel %vm906, %v1614, %v1616
        %v1745 = vsel %vm906, %v1616, %v1618
        %v1746 = vsel %vm906, %v1618, %v1620
        %v1747 = vsel %vm906, %v1622, %v1624
        %v1748 = vsel %vm906, %v1624, %v1626
        %v1749 = vsel %vm906, %v1626, %v1628
        %v1750 = vsel %vm906, %v1628, %v1630
        %v1751 = vsel %vm906, %v1632, %v1634
        %v1752 = vsel %vm906, %v1634, %v1636
        %v1753 = vsel %vm906, %v1636, %v1638
        %v1754 = vsel %vm906, %v1638, %v1640
        %v1755 = vsel %vm906, %v1642, %v1644
        %v1756 = vsel %vm906, %v1644, %v1646
        %v1757 = vsel %vm906, %v1646, %v1648
        %v1758 = vsel %vm906, %v1648, %v1650
        %v1759 = vsel %vm906, %v1652, %v1654
        %v1760 = vsel %vm906, %v1654, %v1656
        %v1761 = vsel %vm906, %v1656, %v1658
        %v1762 = vsel %vm906, %v1658, %v1660
        %v1763 = vsel %vm906, %v1662, %v1664
        %v1764 = vsel %vm906, %v1664, %v1666
        %v1765 = vsel %vm906, %v1666, %v1668
        %v1766 = vsel %vm906, %v1668, %v1670
        %v1767 = vsel %vm906, %v1672, %v1674
        %v1768 = vsel %vm906, %v1674, %v1676
        %v1769 = vsel %vm906, %v1676, %v1678
        %v1770 = vsel %vm906, %v1678, %v1680
        %v1771 = vsel %vm906, %v1682, %v1684
        %v1772 = vsel %vm906, %v1684, %v1686
        %v1773 = vsel %vm906, %v1686, %v1688
        %v1774 = vsel %vm906, %v1688, %v1690
        %v1775 = vsel %vm906, %v1692, %v1694
        %v1776 = vsel %vm906, %v1694, %v1696
        %v1777 = vsel %vm906, %v1696, %v1698
        %v1778 = vsel %vm906, %v1698, %v1700
        %v1779 = vsel %vm906, %v1702, %v1704
        %v1780 = vsel %vm906, %v1704, %v1706
        %v1781 = vsel %vm906, %v1706, %v1708
        %v1782 = vsel %vm906, %v1708, %v1710
        %v1856 = vsel %vm1051, %v1516, 0
        %v1859 = vsel %vm1051, %v1518, 0
        %1861 = vmatprep.subr.mxu0 %v1772
        %1862 = vmatpush1.msra.mxu0 %v1771
        %1863 = vmatprep.subr.mxu0 %v1768
        %1864 = vmatpush1.msra.mxu0 %v1767
        %1865 = vmatprep.subr.mxu0 %v1764
        %1866 = vmatpush1.msra.mxu0 %v1763
        %1867 = vmatprep.subr.mxu0 %v1760
        %1868 = vmatpush1.msra.mxu0 %v1759
        %1869 = vmatprep.subr.mxu0 %v1756
        %1870 = vmatpush1.msra.mxu0 %v1755
        %1871 = vmatprep.subr.mxu0 %v1752
        %1872 = vmatpush1.msra.mxu0 %v1751
        %1873 = vmatprep.subr.mxu0 %v1748
        %1874 = vmatpush1.msra.mxu0 %v1747
        %1875 = vmatprep.subr.mxu0 %v1744
        %1876 = vmatpush1.msra.mxu0 %v1743
        %1877 = vmatprep.subr.mxu0 %v1740
        %1878 = vmatpush1.msra.mxu0 %v1739
        %1879 = vmatprep.subr.mxu0 %v1736
        %1880 = vmatpush1.msra.mxu0 %v1735
        %1881 = vmatprep.subr.mxu0 %v1732
        %1882 = vmatpush1.msra.mxu0 %v1731
        %1883 = vmatprep.subr.mxu0 %v1728
        %1884 = vmatpush1.msra.mxu0 %v1727
        %1885 = vmatprep.subr.mxu0 %v1724
        %1886 = vmatpush1.msra.mxu0 %v1723
        %1887 = vmatprep.subr.mxu0 %v1720
        %1888 = vmatpush1.msra.mxu0 %v1719
        %1889 = vmatprep.subr.mxu0 %v1716
        %1890 = vmatpush1.msra.mxu0 %v1715
        %1891 = vmatprep.subr.mxu0 %v1712
        %1892 = vmatpush1.msra.mxu0 %v1711
        %1893 = vmatprep.subr.mxu0 0.0
        %1894 = vmatpush2.msra.mxu0 0.0
        %1895 = vmatprep.subr.mxu0 0.0
        %1896 = vmatpush2.msra.mxu0 0.0
        %1897 = vmatprep.subr.mxu0 0.0
        %1898 = vmatpush2.msra.mxu0 0.0
        %1899 = vmatprep.subr.mxu0 0.0
        %1900 = vmatpush2.msra.mxu0 0.0
        %1901 = vmatprep.subr.mxu0 0.0
        %1902 = vmatpush2.msra.mxu0 0.0
        %1903 = vmatprep.subr.mxu0 0.0
        %1904 = vmatpush2.msra.mxu0 0.0
        %1905 = vmatprep.subr.mxu0 0.0
        %1906 = vmatpush2.msra.mxu0 0.0
        %1907 = vmatprep.subr.mxu0 0.0
        %1908 = vmatpush2.msra.mxu0 0.0
        %1909 = vmatprep.subr.mxu0 0.0
        %1910 = vmatpush2.msra.mxu0 0.0
        %1911 = vmatprep.subr.mxu0 0.0
        %1912 = vmatpush2.msra.mxu0 0.0
        %1913 = vmatprep.subr.mxu0 0.0
        %1914 = vmatpush2.msra.mxu0 0.0
        %1915 = vmatprep.subr.mxu0 0.0
        %1916 = vmatpush2.msra.mxu0 0.0
        %1917 = vmatprep.subr.mxu0 0.0
        %1918 = vmatpush2.msra.mxu0 0.0
        %1919 = vmatprep.subr.mxu0 0.0
        %1920 = vmatpush2.msra.mxu0 0.0
        %1921 = vmatprep.subr.mxu0 %v1780
        %1922 = vmatpush2.msra.mxu0 %v1779
        %1923 = vmatprep.subr.mxu0 %v1776
        %1924 = vmatpush2.msra.mxu0 %v1775
        %1925 = vmatprep.mubr.f32.mxu0 %v1856
        %1926 = vmatmul.mubr.f32.gmra.mxu0 %v1515
        %v1927 = vpop.f32.mrf.mxu0
        %v1928 = vadd.f32 %v1524, %v1927
        %v1929 = vpop.f32.mrf.mxu0
        %v1930 = vadd.f32 %v1524, %v1929
        %1931 = vmatprep.mubr.f32.mxu0 %v1859
        %1932 = vmatmul.mubr.f32.gmra.mxu0 %v1517
        %v1933 = vpop.f32.mrf.mxu0
        %v1934 = vadd.f32 %v1529, %v1933
        %v1935 = vpop.f32.mrf.mxu0
        %v1936 = vadd.f32 %v1529, %v1935
        %1937 = vdwg.mxu0
        %1938 = vmatprep.subr.mxu0 %v1774
        %1939 = vmatpush1.msra.mxu0 %v1773
        %1940 = vmatprep.subr.mxu0 %v1770
        %1941 = vmatpush1.msra.mxu0 %v1769
        %1942 = vmatprep.subr.mxu0 %v1766
        %1943 = vmatpush1.msra.mxu0 %v1765
        %1944 = vmatprep.subr.mxu0 %v1762
        %1945 = vmatpush1.msra.mxu0 %v1761
        %1946 = vmatprep.subr.mxu0 %v1758
        %1947 = vmatpush1.msra.mxu0 %v1757
        %1948 = vmatprep.subr.mxu0 %v1754
        %1949 = vmatpush1.msra.mxu0 %v1753
        %1950 = vmatprep.subr.mxu0 %v1750
        %1951 = vmatpush1.msra.mxu0 %v1749
        %1952 = vmatprep.subr.mxu0 %v1746
        %1953 = vmatpush1.msra.mxu0 %v1745
        %1954 = vmatprep.subr.mxu0 %v1742
        %1955 = vmatpush1.msra.mxu0 %v1741
        %1956 = vmatprep.subr.mxu0 %v1738
        %1957 = vmatpush1.msra.mxu0 %v1737
        %1958 = vmatprep.subr.mxu0 %v1734
        %1959 = vmatpush1.msra.mxu0 %v1733
        %1960 = vmatprep.subr.mxu0 %v1730
        %1961 = vmatpush1.msra.mxu0 %v1729
        %1962 = vmatprep.subr.mxu0 %v1726
        %1963 = vmatpush1.msra.mxu0 %v1725
        %1964 = vmatprep.subr.mxu0 %v1722
        %1965 = vmatpush1.msra.mxu0 %v1721
        %1966 = vmatprep.subr.mxu0 %v1718
        %1967 = vmatpush1.msra.mxu0 %v1717
        %1968 = vmatprep.subr.mxu0 %v1714
        %1969 = vmatpush1.msra.mxu0 %v1713
        %1970 = vmatprep.subr.mxu0 0.0
        %1971 = vmatpush2.msra.mxu0 0.0
        %1972 = vmatprep.subr.mxu0 0.0
        %1973 = vmatpush2.msra.mxu0 0.0
        %1974 = vmatprep.subr.mxu0 0.0
        %1975 = vmatpush2.msra.mxu0 0.0
        %1976 = vmatprep.subr.mxu0 0.0
        %1977 = vmatpush2.msra.mxu0 0.0
        %1978 = vmatprep.subr.mxu0 0.0
        %1979 = vmatpush2.msra.mxu0 0.0
        %1980 = vmatprep.subr.mxu0 0.0
        %1981 = vmatpush2.msra.mxu0 0.0
        %1982 = vmatprep.subr.mxu0 0.0
        %1983 = vmatpush2.msra.mxu0 0.0
        %1984 = vmatprep.subr.mxu0 0.0
        %1985 = vmatpush2.msra.mxu0 0.0
        %1986 = vmatprep.subr.mxu0 0.0
        %1987 = vmatpush2.msra.mxu0 0.0
        %1988 = vmatprep.subr.mxu0 0.0
        %1989 = vmatpush2.msra.mxu0 0.0
        %1990 = vmatprep.subr.mxu0 0.0
        %1991 = vmatpush2.msra.mxu0 0.0
        %1992 = vmatprep.subr.mxu0 0.0
        %1993 = vmatpush2.msra.mxu0 0.0
        %1994 = vmatprep.subr.mxu0 0.0
        %1995 = vmatpush2.msra.mxu0 0.0
        %1996 = vmatprep.subr.mxu0 0.0
        %1997 = vmatpush2.msra.mxu0 0.0
        %1998 = vmatprep.subr.mxu0 %v1782
        %1999 = vmatpush2.msra.mxu0 %v1781
        %2000 = vmatprep.subr.mxu0 %v1778
        %2001 = vmatpush2.msra.mxu0 %v1777
        %2002 = vmatprep.mubr.f32.mxu0 %v1856
        %2003 = vmatmul.mubr.f32.gmra.mxu0 %v1515
        %v2004 = vpop.f32.mrf.mxu0
        %v2005 = vadd.f32 %v1524, %v2004
        %v2006 = vpop.f32.mrf.mxu0
        %v2007 = vadd.f32 %v1524, %v2006
        %2008 = vmatprep.mubr.f32.mxu0 %v1859
        %2009 = vmatmul.mubr.f32.gmra.mxu0 %v1517
        %v2010 = vpop.f32.mrf.mxu0
        %v2011 = vadd.f32 %v1529, %v2010
        %v2012 = vpop.f32.mrf.mxu0
        %v2013 = vadd.f32 %v1529, %v2012
        %2014 = vdwg.mxu0
        %v2015 = vmul.f32 %v1928, %v1224
        %v2016 = vmul.f32 %v1930, %v1228
        %v2017 = vmul.f32 %v2005, %v1232
        %v2018 = vmul.f32 %v2007, %v1236
        %v2019 = vmul.f32 %v1934, %v1224
        %v2020 = vmul.f32 %v1936, %v1228
        %v2021 = vmul.f32 %v2011, %v1232
        %v2022 = vmul.f32 %v2013, %v1236
        %v2023 = vadd.f32 %v2015, %v2016
        %v2024 = vadd.f32 %v2023, %v2017
        %v2025 = vadd.f32 %v2024, %v2018
        %2026 = vadd.xlane.f32.xlu0 %v2025
        %v2027 = vpop.xlane.xlu0 %2026
        %v2028 = vadd.f32 %v2019, %v2020
        %v2029 = vadd.f32 %v2028, %v2021
        %v2030 = vadd.f32 %v2029, %v2022
        %2031 = vadd.xlane.f32.xlu0 %v2030
        %v2032 = vpop.xlane.xlu0 %2031
        %v2033 = vmul.f32 %v2027, 0.00390625
        %v2034 = vmul.f32 %v2032, 0.00390625
        %v2035 = vld [vmem:[%s6] sm:$0xff]
        %v2036 = vld [vmem:[%s6 + $0x8] sm:$0xff]
        %v2037 = vmul.f32 %v2035, %v2033
        %v2038 = vmul.f32 %v2036, %v2034
        %vm2039 = vcmask 7168
        %v2040 = vsel %vm2039, %v2037, 0.0
        %v2041 = vsel %vm2039, %v2038, 0.0
        %v2042 = vadd.f32 %v2040, %v2041
        %v2043 = vrot.slane %v2042, 4
        %v2044 = vadd.f32 %v2042, %v2043
        %v2045 = vrot.slane %v2044, 2
        %v2046 = vadd.f32 %v2044, %v2045
        %v2047 = vrot.slane %v2046, 1
        %v2048 = vadd.f32 %v2046, %v2047
        %v2049 = vld [vmem:[#allocation4] sm:$0x1]
        %v2050 = vadd.f32 %v2048, %v2049
        %vm2051 = vcmp.ge.f32.partialorder %v2050, 0.0
        %v2052 = vmul.f32 %v2050, 0.1
        %v2053 = vsel %vm2051, %v2050, %v2052
        %v2054 = vld [vmem:[%s8] sm:$0xff]
        %v2055 = vld [vmem:[%s8 + $0x8] sm:$0xff]
        %v2056 = vlaneseq
        %v2057 = vshrl.u32 %v2056, 7
        %v2058 = vsub.s32 0, %v2057
        %v2059 = vrot.slane %v2053, %v2058
        %v2060 = vmul.f32 %v2054, %v2059
        %v2061 = vmul.f32 %v2055, %v2059
        %v2062 = vadd.f32 %v2060, 0.0
        %v2063 = vadd.f32 %v2061, 0.0
        %v2064 = vld [vmem:[%s9] sm:$0xff]
        %v2065 = vld [vmem:[%s9 + $0x8] sm:$0xff]
        %v2066 = vadd.f32 %v2062, %v2064
        %v2067 = vadd.f32 %v2063, %v2065
        %v2068 = vsub.f32 0.0, %v2066
        %v2069 = vsub.f32 0.0, %v2067
        %v2070 = vmul.f32 %v2068, 1.442695
        %v2071 = vpow.pop %v2070
        %v2072 = vmul.f32 %v2069, 1.442695
        %v2073 = vpow.pop %v2072
        %v2074 = vadd.f32 %v2071, 1.0
        %v2075 = vadd.f32 %v2073, 1.0
        %v2076 = vrcp.pop %v2074
        %v2077 = vmul.f32 1.0, %v2076
        %v2078 = vrcp.pop %v2075
        %v2079 = vmul.f32 1.0, %v2078
        %2081 = vset.pattern.permute.xlu0 0
        %2082 = vperm.xlu0 %2081, %v2077
        %v2083 = vpop.permute.xlu0 %2082
        %2086 = vset.pattern.permute.xlu0 0
        %2087 = vperm.xlu0 %2086, %v2079
        %v2088 = vpop.permute.xlu0 %2087
        %v2090 = vmul.f32 %v2015, %v2083
        %v2091 = vmul.f32 %v2016, %v2083
        %v2092 = vmul.f32 %v2017, %v2083
        %v2093 = vmul.f32 %v2018, %v2083
        %v2094 = vmul.f32 %v2019, %v2088
        %v2095 = vmul.f32 %v2020, %v2088
        %v2096 = vmul.f32 %v2021, %v2088
        %v2097 = vmul.f32 %v2022, %v2088
        %v2098 = vadd.f32 %v2090, %v2094
        %v2099 = vrot.slane %v2098, 4
        %v2100 = vadd.f32 %v2098, %v2099
        %v2101 = vrot.slane %v2100, 2
        %v2102 = vadd.f32 %v2100, %v2101
        %v2103 = vrot.slane %v2102, 1
        %v2104 = vadd.f32 %v2102, %v2103
        %v2105 = vadd.f32 %v2091, %v2095
        %v2106 = vrot.slane %v2105, 4
        %v2107 = vadd.f32 %v2105, %v2106
        %v2108 = vrot.slane %v2107, 2
        %v2109 = vadd.f32 %v2107, %v2108
        %v2110 = vrot.slane %v2109, 1
        %v2111 = vadd.f32 %v2109, %v2110
        %v2112 = vadd.f32 %v2092, %v2096
        %v2113 = vrot.slane %v2112, 4
        %v2114 = vadd.f32 %v2112, %v2113
        %v2115 = vrot.slane %v2114, 2
        %v2116 = vadd.f32 %v2114, %v2115
        %v2117 = vrot.slane %v2116, 1
        %v2118 = vadd.f32 %v2116, %v2117
        %v2119 = vadd.f32 %v2093, %v2097
        %v2120 = vrot.slane %v2119, 4
        %v2121 = vadd.f32 %v2119, %v2120
        %v2122 = vrot.slane %v2121, 2
        %v2123 = vadd.f32 %v2121, %v2122
        %v2124 = vrot.slane %v2123, 1
        %v2125 = vadd.f32 %v2123, %v2124
        %v2126 = vmul.f32 %v2104, 0.0625
        %v2127 = vmul.f32 %v2111, 0.0625
        %v2128 = vmul.f32 %v2118, 0.0625
        %v2129 = vmul.f32 %v2125, 0.0625
        %v2134 = vcombine.low %v2126, %v2127
        %v2135 = vcombine.low %v2128, %v2129
        %v2137 = vunpack.c.l.s4 1966171168
        %v2138 = vunpack.c.0.s8 %v2137
        %v2139 = vlaneseq
        %v2140 = vshrl.u32 %v2139, 7
        %v2141 = vsub.s32 %v2138, %v2140
        %v2142 = vrot.slane %v2134, %v2141
        %v2144 = vunpack.c.l.s4 1966171168
        %v2145 = vunpack.c.0.s8 %v2144
        %v2146 = vlaneseq
        %v2147 = vshrl.u32 %v2146, 7
        %v2148 = vsub.s32 %v2145, %v2147
        %v2149 = vrot.slane %v2135, %v2148
        %v2150 = vcombine.low %v2142, %v2149
        %v2152 = vunpack.c.l.s4 1966171168
        %v2153 = vunpack.c.0.s8 %v2152
        %v2154 = vlaneseq
        %v2155 = vshrl.u32 %v2154, 7
        %v2156 = vsub.s32 %v2153, %v2155
        %v2157 = vrot.slane %v2150, %v2156
        %v2159 = vlaneseq
        %vm2160 = vcmp.ge.s32.totalorder %v2159, 0
        %vm2161 = vcmp.lt.s32.totalorder %v2159, 512
        %vm2162 = vmand %vm2160, %vm2161
        %s2163 = scalar_lea.vmem [#allocation3], 2
        %2164 = vst.msk [vmem:[%s2163] ss:$2 sm:$0xf] %vm2162, %v2157
        %v2165 = vmax.f32 %v2090, %v2094
        %v2166 = vrot.slane %v2165, 4
        %v2167 = vmax.f32 %v2165, %v2166
        %v2168 = vrot.slane %v2167, 2
        %v2169 = vmax.f32 %v2167, %v2168
        %v2170 = vrot.slane %v2169, 1
        %v2171 = vmax.f32 %v2169, %v2170
        %v2172 = vmax.f32 %v2091, %v2095
        %v2173 = vrot.slane %v2172, 4
        %v2174 = vmax.f32 %v2172, %v2173
        %v2175 = vrot.slane %v2174, 2
        %v2176 = vmax.f32 %v2174, %v2175
        %v2177 = vrot.slane %v2176, 1
        %v2178 = vmax.f32 %v2176, %v2177
        %v2179 = vmax.f32 %v2092, %v2096
        %v2180 = vrot.slane %v2179, 4
        %v2181 = vmax.f32 %v2179, %v2180
        %v2182 = vrot.slane %v2181, 2
        %v2183 = vmax.f32 %v2181, %v2182
        %v2184 = vrot.slane %v2183, 1
        %v2185 = vmax.f32 %v2183, %v2184
        %v2186 = vmax.f32 %v2093, %v2097
        %v2187 = vrot.slane %v2186, 4
        %v2188 = vmax.f32 %v2186, %v2187
        %v2189 = vrot.slane %v2188, 2
        %v2190 = vmax.f32 %v2188, %v2189
        %v2191 = vrot.slane %v2190, 1
        %v2192 = vmax.f32 %v2190, %v2191
        %v2197 = vcombine.low %v2171, %v2178
        %v2198 = vcombine.low %v2185, %v2192
        %v2200 = vunpack.c.l.s4 1966171168
        %v2201 = vunpack.c.0.s8 %v2200
        %v2202 = vlaneseq
        %v2203 = vshrl.u32 %v2202, 7
        %v2204 = vsub.s32 %v2201, %v2203
        %v2205 = vrot.slane %v2197, %v2204
        %v2207 = vunpack.c.l.s4 1966171168
        %v2208 = vunpack.c.0.s8 %v2207
        %v2209 = vlaneseq
        %v2210 = vshrl.u32 %v2209, 7
        %v2211 = vsub.s32 %v2208, %v2210
        %v2212 = vrot.slane %v2198, %v2211
        %v2213 = vcombine.low %v2205, %v2212
        %v2215 = vunpack.c.l.s4 1966171168
        %v2216 = vunpack.c.0.s8 %v2215
        %v2217 = vlaneseq
        %v2218 = vshrl.u32 %v2217, 7
        %v2219 = vsub.s32 %v2216, %v2218
        %v2220 = vrot.slane %v2213, %v2219
        %s2222 = scalar_lea.vmem [#allocation3], 3
        %2223 = vst.msk [vmem:[%s2222] ss:$2 sm:$0xf] %vm2162, %v2220
        %v2224 = vld [vmem:[#allocation3] sm:$0xff]
        %v2225 = vld [vmem:[#allocation3 + $0x8] sm:$0x3]
        %s2226 = sld [smem:[#allocation9]]
        %v2227 = vstv %s2226
        %v2228 = vmul.f32 %v2227, %v2224
        %v2229 = vmul.f32 %v2227, %v2225
        %v2230 = vadd.f32 %v2228, 0.0
        %v2231 = vadd.f32 %v2229, 0.0
        %s2232 = sld [smem:[#allocation9 + $0x80]]
        %v2233 = vstv %s2232
        %v2234 = vmul.f32 %v2233, %v2224
        %v2235 = vmul.f32 %v2233, %v2225
        %v2236 = vadd.f32 %v2234, 0.0
        %v2237 = vadd.f32 %v2235, 0.0
        %s2238 = sld [smem:[#allocation9 + $0x1]]
        %v2239 = vstv %s2238
        %v2240 = vmul.f32 %v2239, %v2224
        %v2241 = vmul.f32 %v2239, %v2225
        %2244 = vrot.lane.b32.xlu0 %v2240, 127
        %v2245 = vpop.permute.xlu0 %2244
        %2246 = vrot.lane.b32.xlu0 %v2241, 127
        %v2247 = vpop.permute.xlu0 %2246
        %v2248 = vrot.slane %v2245, 2
        %v2249 = vrot.slane %v2247, 2
        %vm2250 = vcmask 1045504
        %v2251 = vsel %vm2250, %v2248, %v2249
        %v2252 = vsel %vm494, %v2245, %v2251
        %v2255 = vadd.f32 %v2230, %v2252
        %v2256 = vadd.f32 %v2231, %v2247
        %s2257 = sld [smem:[#allocation9 + $0x81]]
        %v2258 = vstv %s2257
        %v2259 = vmul.f32 %v2258, %v2224
        %v2260 = vmul.f32 %v2258, %v2225
        %2263 = vrot.lane.b32.xlu0 %v2259, 127
        %v2264 = vpop.permute.xlu0 %2263
        %2265 = vrot.lane.b32.xlu0 %v2260, 127
        %v2266 = vpop.permute.xlu0 %2265
        %v2267 = vrot.slane %v2264, 2
        %v2268 = vrot.slane %v2266, 2
        %v2269 = vsel %vm2250, %v2267, %v2268
        %v2270 = vsel %vm494, %v2264, %v2269
        %v2273 = vadd.f32 %v2236, %v2270
        %v2274 = vadd.f32 %v2237, %v2266
        %s2275 = sld [smem:[#allocation9 + $0x2]]
        %v2276 = vstv %s2275
        %v2277 = vmul.f32 %v2276, %v2224
        %v2278 = vmul.f32 %v2276, %v2225
        %2281 = vrot.lane.b32.xlu0 %v2277, 126
        %v2282 = vpop.permute.xlu0 %2281
        %2283 = vrot.lane.b32.xlu0 %v2278, 126
        %v2284 = vpop.permute.xlu0 %2283
        %v2285 = vrot.slane %v2282, 2
        %v2286 = vrot.slane %v2284, 2
        %v2287 = vsel %vm2250, %v2285, %v2286
        %v2288 = vsel %vm523, %v2282, %v2287
        %v2291 = vadd.f32 %v2255, %v2288
        %v2292 = vadd.f32 %v2256, %v2284
        %s2293 = sld [smem:[#allocation9 + $0x82]]
        %v2294 = vstv %s2293
        %v2295 = vmul.f32 %v2294, %v2224
        %v2296 = vmul.f32 %v2294, %v2225
        %2299 = vrot.lane.b32.xlu0 %v2295, 126
        %v2300 = vpop.permute.xlu0 %2299
        %2301 = vrot.lane.b32.xlu0 %v2296, 126
        %v2302 = vpop.permute.xlu0 %2301
        %v2303 = vrot.slane %v2300, 2
        %v2304 = vrot.slane %v2302, 2
        %v2305 = vsel %vm2250, %v2303, %v2304
        %v2306 = vsel %vm523, %v2300, %v2305
        %v2309 = vadd.f32 %v2273, %v2306
        %v2310 = vadd.f32 %v2274, %v2302
        %s2311 = sld [smem:[#allocation9 + $0x3]]
        %v2312 = vstv %s2311
        %v2313 = vmul.f32 %v2312, %v2224
        %v2314 = vmul.f32 %v2312, %v2225
        %2317 = vrot.lane.b32.xlu0 %v2313, 125
        %v2318 = vpop.permute.xlu0 %2317
        %2319 = vrot.lane.b32.xlu0 %v2314, 125
        %v2320 = vpop.permute.xlu0 %2319
        %v2321 = vrot.slane %v2318, 2
        %v2322 = vrot.slane %v2320, 2
        %v2323 = vsel %vm2250, %v2321, %v2322
        %vm2324 = vcmask 1022976
        %v2325 = vsel %vm2324, %v2318, %v2323
        %v2328 = vadd.f32 %v2291, %v2325
        %v2329 = vadd.f32 %v2292, %v2320
        %s2330 = sld [smem:[#allocation9 + $0x83]]
        %v2331 = vstv %s2330
        %v2332 = vmul.f32 %v2331, %v2224
        %v2333 = vmul.f32 %v2331, %v2225
        %2336 = vrot.lane.b32.xlu0 %v2332, 125
        %v2337 = vpop.permute.xlu0 %2336
        %2338 = vrot.lane.b32.xlu0 %v2333, 125
        %v2339 = vpop.permute.xlu0 %2338
        %v2340 = vrot.slane %v2337, 2
        %v2341 = vrot.slane %v2339, 2
        %v2342 = vsel %vm2250, %v2340, %v2341
        %v2343 = vsel %vm2324, %v2337, %v2342
        %v2346 = vadd.f32 %v2309, %v2343
        %v2347 = vadd.f32 %v2310, %v2339
        %s2348 = sld [smem:[#allocation9 + $0x4]]
        %v2349 = vstv %s2348
        %v2350 = vmul.f32 %v2349, %v2224
        %v2351 = vmul.f32 %v2349, %v2225
        %2354 = vrot.lane.b32.xlu0 %v2350, 124
        %v2355 = vpop.permute.xlu0 %2354
        %2356 = vrot.lane.b32.xlu0 %v2351, 124
        %v2357 = vpop.permute.xlu0 %2356
        %v2358 = vrot.slane %v2355, 2
        %v2359 = vrot.slane %v2357, 2
        %v2360 = vsel %vm2250, %v2358, %v2359
        %vm2361 = vcmask 1014784
        %v2362 = vsel %vm2361, %v2355, %v2360
        %v2365 = vadd.f32 %v2328, %v2362
        %v2366 = vadd.f32 %v2329, %v2357
        %s2367 = sld [smem:[#allocation9 + $0x84]]
        %v2368 = vstv %s2367
        %v2369 = vmul.f32 %v2368, %v2224
        %v2370 = vmul.f32 %v2368, %v2225
        %2373 = vrot.lane.b32.xlu0 %v2369, 124
        %v2374 = vpop.permute.xlu0 %2373
        %2375 = vrot.lane.b32.xlu0 %v2370, 124
        %v2376 = vpop.permute.xlu0 %2375
        %v2377 = vrot.slane %v2374, 2
        %v2378 = vrot.slane %v2376, 2
        %v2379 = vsel %vm2250, %v2377, %v2378
        %v2380 = vsel %vm2361, %v2374, %v2379
        %v2383 = vadd.f32 %v2346, %v2380
        %v2384 = vadd.f32 %v2347, %v2376
        %s2385 = sld [smem:[#allocation9 + $0x5]]
        %v2386 = vstv %s2385
        %v2387 = vmul.f32 %v2386, %v2224
        %v2388 = vmul.f32 %v2386, %v2225
        %2391 = vrot.lane.b32.xlu0 %v2387, 123
        %v2392 = vpop.permute.xlu0 %2391
        %2393 = vrot.lane.b32.xlu0 %v2388, 123
        %v2394 = vpop.permute.xlu0 %2393
        %v2395 = vrot.slane %v2392, 2
        %v2396 = vrot.slane %v2394, 2
        %v2397 = vsel %vm2250, %v2395, %v2396
        %vm2398 = vcmask 1006592
        %v2399 = vsel %vm2398, %v2392, %v2397
        %v2402 = vadd.f32 %v2365, %v2399
        %v2403 = vadd.f32 %v2366, %v2394
        %s2404 = sld [smem:[#allocation9 + $0x85]]
        %v2405 = vstv %s2404
        %v2406 = vmul.f32 %v2405, %v2224
        %v2407 = vmul.f32 %v2405, %v2225
        %2410 = vrot.lane.b32.xlu0 %v2406, 123
        %v2411 = vpop.permute.xlu0 %2410
        %2412 = vrot.lane.b32.xlu0 %v2407, 123
        %v2413 = vpop.permute.xlu0 %2412
        %v2414 = vrot.slane %v2411, 2
        %v2415 = vrot.slane %v2413, 2
        %v2416 = vsel %vm2250, %v2414, %v2415
        %v2417 = vsel %vm2398, %v2411, %v2416
        %v2420 = vadd.f32 %v2383, %v2417
        %v2421 = vadd.f32 %v2384, %v2413
        %s2422 = sld [smem:[#allocation9 + $0x6]]
        %v2423 = vstv %s2422
        %v2424 = vmul.f32 %v2423, %v2224
        %v2425 = vmul.f32 %v2423, %v2225
        %2428 = vrot.lane.b32.xlu0 %v2424, 122
        %v2429 = vpop.permute.xlu0 %2428
        %2430 = vrot.lane.b32.xlu0 %v2425, 122
        %v2431 = vpop.permute.xlu0 %2430
        %v2432 = vrot.slane %v2429, 2
        %v2433 = vrot.slane %v2431, 2
        %v2434 = vsel %vm2250, %v2432, %v2433
        %vm2435 = vcmask 998400
        %v2436 = vsel %vm2435, %v2429, %v2434
        %v2439 = vadd.f32 %v2402, %v2436
        %v2440 = vadd.f32 %v2403, %v2431
        %s2441 = sld [smem:[#allocation9 + $0x86]]
        %v2442 = vstv %s2441
        %v2443 = vmul.f32 %v2442, %v2224
        %v2444 = vmul.f32 %v2442, %v2225
        %2447 = vrot.lane.b32.xlu0 %v2443, 122
        %v2448 = vpop.permute.xlu0 %2447
        %2449 = vrot.lane.b32.xlu0 %v2444, 122
        %v2450 = vpop.permute.xlu0 %2449
        %v2451 = vrot.slane %v2448, 2
        %v2452 = vrot.slane %v2450, 2
        %v2453 = vsel %vm2250, %v2451, %v2452
        %v2454 = vsel %vm2435, %v2448, %v2453
        %v2457 = vadd.f32 %v2420, %v2454
        %v2458 = vadd.f32 %v2421, %v2450
        %s2459 = sld [smem:[#allocation9 + $0x7]]
        %v2460 = vstv %s2459
        %v2461 = vmul.f32 %v2460, %v2224
        %v2462 = vmul.f32 %v2460, %v2225
        %2465 = vrot.lane.b32.xlu0 %v2461, 106
        %v2466 = vpop.permute.xlu0 %2465
        %2467 = vrot.lane.b32.xlu0 %v2462, 106
        %v2468 = vpop.permute.xlu0 %2467
        %v2469 = vrot.slane %v2466, 2
        %v2470 = vrot.slane %v2468, 2
        %v2471 = vsel %vm2250, %v2469, %v2470
        %v2472 = vsel %vm552, %v2466, %v2471
        %v2475 = vadd.f32 %v2439, %v2472
        %v2476 = vadd.f32 %v2440, %v2468
        %s2477 = sld [smem:[#allocation9 + $0x87]]
        %v2478 = vstv %s2477
        %v2479 = vmul.f32 %v2478, %v2224
        %v2480 = vmul.f32 %v2478, %v2225
        %2483 = vrot.lane.b32.xlu0 %v2479, 106
        %v2484 = vpop.permute.xlu0 %2483
        %2485 = vrot.lane.b32.xlu0 %v2480, 106
        %v2486 = vpop.permute.xlu0 %2485
        %v2487 = vrot.slane %v2484, 2
        %v2488 = vrot.slane %v2486, 2
        %v2489 = vsel %vm2250, %v2487, %v2488
        %v2490 = vsel %vm552, %v2484, %v2489
        %v2493 = vadd.f32 %v2457, %v2490
        %v2494 = vadd.f32 %v2458, %v2486
        %s2495 = sld [smem:[#allocation9 + $0x8]]
        %v2496 = vstv %s2495
        %v2497 = vmul.f32 %v2496, %v2224
        %v2498 = vmul.f32 %v2496, %v2225
        %2501 = vrot.lane.b32.xlu0 %v2497, 105
        %v2502 = vpop.permute.xlu0 %2501
        %2503 = vrot.lane.b32.xlu0 %v2498, 105
        %v2504 = vpop.permute.xlu0 %2503
        %v2505 = vrot.slane %v2502, 2
        %v2506 = vrot.slane %v2504, 2
        %v2507 = vsel %vm2250, %v2505, %v2506
        %v2508 = vsel %vm577, %v2502, %v2507
        %v2511 = vadd.f32 %v2475, %v2508
        %v2512 = vadd.f32 %v2476, %v2504
        %s2513 = sld [smem:[#allocation9 + $0x88]]
        %v2514 = vstv %s2513
        %v2515 = vmul.f32 %v2514, %v2224
        %v2516 = vmul.f32 %v2514, %v2225
        %2519 = vrot.lane.b32.xlu0 %v2515, 105
        %v2520 = vpop.permute.xlu0 %2519
        %2521 = vrot.lane.b32.xlu0 %v2516, 105
        %v2522 = vpop.permute.xlu0 %2521
        %v2523 = vrot.slane %v2520, 2
        %v2524 = vrot.slane %v2522, 2
        %v2525 = vsel %vm2250, %v2523, %v2524
        %v2526 = vsel %vm577, %v2520, %v2525
        %v2529 = vadd.f32 %v2493, %v2526
        %v2530 = vadd.f32 %v2494, %v2522
        %s2531 = sld [smem:[#allocation9 + $0x9]]
        %v2532 = vstv %s2531
        %v2533 = vmul.f32 %v2532, %v2224
        %v2534 = vmul.f32 %v2532, %v2225
        %2537 = vrot.lane.b32.xlu0 %v2533, 104
        %v2538 = vpop.permute.xlu0 %2537
        %2539 = vrot.lane.b32.xlu0 %v2534, 104
        %v2540 = vpop.permute.xlu0 %2539
        %v2541 = vrot.slane %v2538, 2
        %v2542 = vrot.slane %v2540, 2
        %v2543 = vsel %vm2250, %v2541, %v2542
        %v2544 = vsel %vm614, %v2538, %v2543
        %v2547 = vadd.f32 %v2511, %v2544
        %v2548 = vadd.f32 %v2512, %v2540
        %s2549 = sld [smem:[#allocation9 + $0x89]]
        %v2550 = vstv %s2549
        %v2551 = vmul.f32 %v2550, %v2224
        %v2552 = vmul.f32 %v2550, %v2225
        %2555 = vrot.lane.b32.xlu0 %v2551, 104
        %v2556 = vpop.permute.xlu0 %2555
        %2557 = vrot.lane.b32.xlu0 %v2552, 104
        %v2558 = vpop.permute.xlu0 %2557
        %v2559 = vrot.slane %v2556, 2
        %v2560 = vrot.slane %v2558, 2
        %v2561 = vsel %vm2250, %v2559, %v2560
        %v2562 = vsel %vm614, %v2556, %v2561
        %v2565 = vadd.f32 %v2529, %v2562
        %v2566 = vadd.f32 %v2530, %v2558
        %s2567 = sld [smem:[#allocation9 + $0xa]]
        %v2568 = vstv %s2567
        %v2569 = vmul.f32 %v2568, %v2224
        %v2570 = vmul.f32 %v2568, %v2225
        %2573 = vrot.lane.b32.xlu0 %v2569, 103
        %v2574 = vpop.permute.xlu0 %2573
        %2575 = vrot.lane.b32.xlu0 %v2570, 103
        %v2576 = vpop.permute.xlu0 %2575
        %v2577 = vrot.slane %v2574, 2
        %v2578 = vrot.slane %v2576, 2
        %v2579 = vsel %vm2250, %v2577, %v2578
        %vm2580 = vcmask 842752
        %v2581 = vsel %vm2580, %v2574, %v2579
        %v2584 = vadd.f32 %v2547, %v2581
        %v2585 = vadd.f32 %v2548, %v2576
        %s2586 = sld [smem:[#allocation9 + $0x8a]]
        %v2587 = vstv %s2586
        %v2588 = vmul.f32 %v2587, %v2224
        %v2589 = vmul.f32 %v2587, %v2225
        %2592 = vrot.lane.b32.xlu0 %v2588, 103
        %v2593 = vpop.permute.xlu0 %2592
        %2594 = vrot.lane.b32.xlu0 %v2589, 103
        %v2595 = vpop.permute.xlu0 %2594
        %v2596 = vrot.slane %v2593, 2
        %v2597 = vrot.slane %v2595, 2
        %v2598 = vsel %vm2250, %v2596, %v2597
        %v2599 = vsel %vm2580, %v2593, %v2598
        %v2602 = vadd.f32 %v2565, %v2599
        %v2603 = vadd.f32 %v2566, %v2595
        %s2604 = sld [smem:[#allocation9 + $0xb]]
        %v2605 = vstv %s2604
        %v2606 = vmul.f32 %v2605, %v2224
        %v2607 = vmul.f32 %v2605, %v2225
        %2610 = vrot.lane.b32.xlu0 %v2606, 102
        %v2611 = vpop.permute.xlu0 %2610
        %2612 = vrot.lane.b32.xlu0 %v2607, 102
        %v2613 = vpop.permute.xlu0 %2612
        %v2614 = vrot.slane %v2611, 2
        %v2615 = vrot.slane %v2613, 2
        %v2616 = vsel %vm2250, %v2614, %v2615
        %vm2617 = vcmask 834560
        %v2618 = vsel %vm2617, %v2611, %v2616
        %v2621 = vadd.f32 %v2584, %v2618
        %v2622 = vadd.f32 %v2585, %v2613
        %s2623 = sld [smem:[#allocation9 + $0x8b]]
        %v2624 = vstv %s2623
        %v2625 = vmul.f32 %v2624, %v2224
        %v2626 = vmul.f32 %v2624, %v2225
        %2629 = vrot.lane.b32.xlu0 %v2625, 102
        %v2630 = vpop.permute.xlu0 %2629
        %2631 = vrot.lane.b32.xlu0 %v2626, 102
        %v2632 = vpop.permute.xlu0 %2631
        %v2633 = vrot.slane %v2630, 2
        %v2634 = vrot.slane %v2632, 2
        %v2635 = vsel %vm2250, %v2633, %v2634
        %v2636 = vsel %vm2617, %v2630, %v2635
        %v2639 = vadd.f32 %v2602, %v2636
        %v2640 = vadd.f32 %v2603, %v2632
        %s2641 = sld [smem:[#allocation9 + $0xc]]
        %v2642 = vstv %s2641
        %v2643 = vmul.f32 %v2642, %v2224
        %v2644 = vmul.f32 %v2642, %v2225
        %2647 = vrot.lane.b32.xlu0 %v2643, 101
        %v2648 = vpop.permute.xlu0 %2647
        %2649 = vrot.lane.b32.xlu0 %v2644, 101
        %v2650 = vpop.permute.xlu0 %2649
        %v2651 = vrot.slane %v2648, 2
        %v2652 = vrot.slane %v2650, 2
        %v2653 = vsel %vm2250, %v2651, %v2652
        %vm2654 = vcmask 826368
        %v2655 = vsel %vm2654, %v2648, %v2653
        %v2658 = vadd.f32 %v2621, %v2655
        %v2659 = vadd.f32 %v2622, %v2650
        %s2660 = sld [smem:[#allocation9 + $0x8c]]
        %v2661 = vstv %s2660
        %v2662 = vmul.f32 %v2661, %v2224
        %v2663 = vmul.f32 %v2661, %v2225
        %2666 = vrot.lane.b32.xlu0 %v2662, 101
        %v2667 = vpop.permute.xlu0 %2666
        %2668 = vrot.lane.b32.xlu0 %v2663, 101
        %v2669 = vpop.permute.xlu0 %2668
        %v2670 = vrot.slane %v2667, 2
        %v2671 = vrot.slane %v2669, 2
        %v2672 = vsel %vm2250, %v2670, %v2671
        %v2673 = vsel %vm2654, %v2667, %v2672
        %v2676 = vadd.f32 %v2639, %v2673
        %v2677 = vadd.f32 %v2640, %v2669
        %s2678 = sld [smem:[#allocation9 + $0xd]]
        %v2679 = vstv %s2678
        %v2680 = vmul.f32 %v2679, %v2224
        %v2681 = vmul.f32 %v2679, %v2225
        %2684 = vrot.lane.b32.xlu0 %v2680, 100
        %v2685 = vpop.permute.xlu0 %2684
        %2686 = vrot.lane.b32.xlu0 %v2681, 100
        %v2687 = vpop.permute.xlu0 %2686
        %v2688 = vrot.slane %v2685, 2
        %v2689 = vrot.slane %v2687, 2
        %v2690 = vsel %vm2250, %v2688, %v2689
        %vm2691 = vcmask 818176
        %v2692 = vsel %vm2691, %v2685, %v2690
        %v2695 = vadd.f32 %v2658, %v2692
        %v2696 = vadd.f32 %v2659, %v2687
        %s2697 = sld [smem:[#allocation9 + $0x8d]]
        %v2698 = vstv %s2697
        %v2699 = vmul.f32 %v2698, %v2224
        %v2700 = vmul.f32 %v2698, %v2225
        %2703 = vrot.lane.b32.xlu0 %v2699, 100
        %v2704 = vpop.permute.xlu0 %2703
        %2705 = vrot.lane.b32.xlu0 %v2700, 100
        %v2706 = vpop.permute.xlu0 %2705
        %v2707 = vrot.slane %v2704, 2
        %v2708 = vrot.slane %v2706, 2
        %v2709 = vsel %vm2250, %v2707, %v2708
        %v2710 = vsel %vm2691, %v2704, %v2709
        %v2713 = vadd.f32 %v2676, %v2710
        %v2714 = vadd.f32 %v2677, %v2706
        %s2715 = sld [smem:[#allocation9 + $0xe]]
        %v2716 = vstv %s2715
        %v2717 = vmul.f32 %v2716, %v2224
        %v2718 = vmul.f32 %v2716, %v2225
        %2721 = vrot.lane.b32.xlu0 %v2717, 84
        %v2722 = vpop.permute.xlu0 %2721
        %2723 = vrot.lane.b32.xlu0 %v2718, 84
        %v2724 = vpop.permute.xlu0 %2723
        %v2725 = vrot.slane %v2722, 2
        %v2726 = vrot.slane %v2724, 2
        %v2727 = vsel %vm2250, %v2725, %v2726
        %v2728 = vsel %vm643, %v2722, %v2727
        %v2731 = vadd.f32 %v2695, %v2728
        %v2732 = vadd.f32 %v2696, %v2724
        %s2733 = sld [smem:[#allocation9 + $0x8e]]
        %v2734 = vstv %s2733
        %v2735 = vmul.f32 %v2734, %v2224
        %v2736 = vmul.f32 %v2734, %v2225
        %2739 = vrot.lane.b32.xlu0 %v2735, 84
        %v2740 = vpop.permute.xlu0 %2739
        %2741 = vrot.lane.b32.xlu0 %v2736, 84
        %v2742 = vpop.permute.xlu0 %2741
        %v2743 = vrot.slane %v2740, 2
        %v2744 = vrot.slane %v2742, 2
        %v2745 = vsel %vm2250, %v2743, %v2744
        %v2746 = vsel %vm643, %v2740, %v2745
        %v2749 = vadd.f32 %v2713, %v2746
        %v2750 = vadd.f32 %v2714, %v2742
        %s2751 = sld [smem:[#allocation9 + $0xf]]
        %v2752 = vstv %s2751
        %v2753 = vmul.f32 %v2752, %v2224
        %v2754 = vmul.f32 %v2752, %v2225
        %2757 = vrot.lane.b32.xlu0 %v2753, 83
        %v2758 = vpop.permute.xlu0 %2757
        %2759 = vrot.lane.b32.xlu0 %v2754, 83
        %v2760 = vpop.permute.xlu0 %2759
        %v2761 = vrot.slane %v2758, 2
        %v2762 = vrot.slane %v2760, 2
        %v2763 = vsel %vm2250, %v2761, %v2762
        %v2764 = vsel %vm672, %v2758, %v2763
        %v2767 = vadd.f32 %v2731, %v2764
        %v2768 = vadd.f32 %v2732, %v2760
        %s2769 = sld [smem:[#allocation9 + $0x8f]]
        %v2770 = vstv %s2769
        %v2771 = vmul.f32 %v2770, %v2224
        %v2772 = vmul.f32 %v2770, %v2225
        %2775 = vrot.lane.b32.xlu0 %v2771, 83
        %v2776 = vpop.permute.xlu0 %2775
        %2777 = vrot.lane.b32.xlu0 %v2772, 83
        %v2778 = vpop.permute.xlu0 %2777
        %v2779 = vrot.slane %v2776, 2
        %v2780 = vrot.slane %v2778, 2
        %v2781 = vsel %vm2250, %v2779, %v2780
        %v2782 = vsel %vm672, %v2776, %v2781
        %v2785 = vadd.f32 %v2749, %v2782
        %v2786 = vadd.f32 %v2750, %v2778
        %s2787 = sld [smem:[#allocation9 + $0x10]]
        %v2788 = vstv %s2787
        %v2789 = vmul.f32 %v2788, %v2224
        %v2790 = vmul.f32 %v2788, %v2225
        %2793 = vrot.lane.b32.xlu0 %v2789, 82
        %v2794 = vpop.permute.xlu0 %2793
        %2795 = vrot.lane.b32.xlu0 %v2790, 82
        %v2796 = vpop.permute.xlu0 %2795
        %v2797 = vrot.slane %v2794, 2
        %v2798 = vrot.slane %v2796, 2
        %v2799 = vsel %vm2250, %v2797, %v2798
        %v2800 = vsel %vm701, %v2794, %v2799
        %v2803 = vadd.f32 %v2767, %v2800
        %v2804 = vadd.f32 %v2768, %v2796
        %s2805 = sld [smem:[#allocation9 + $0x90]]
        %v2806 = vstv %s2805
        %v2807 = vmul.f32 %v2806, %v2224
        %v2808 = vmul.f32 %v2806, %v2225
        %2811 = vrot.lane.b32.xlu0 %v2807, 82
        %v2812 = vpop.permute.xlu0 %2811
        %2813 = vrot.lane.b32.xlu0 %v2808, 82
        %v2814 = vpop.permute.xlu0 %2813
        %v2815 = vrot.slane %v2812, 2
        %v2816 = vrot.slane %v2814, 2
        %v2817 = vsel %vm2250, %v2815, %v2816
        %v2818 = vsel %vm701, %v2812, %v2817
        %v2821 = vadd.f32 %v2785, %v2818
        %v2822 = vadd.f32 %v2786, %v2814
        %s2823 = sld [smem:[#allocation9 + $0x11]]
        %v2824 = vstv %s2823
        %v2825 = vmul.f32 %v2824, %v2224
        %v2826 = vmul.f32 %v2824, %v2225
        %2829 = vrot.lane.b32.xlu0 %v2825, 81
        %v2830 = vpop.permute.xlu0 %2829
        %2831 = vrot.lane.b32.xlu0 %v2826, 81
        %v2832 = vpop.permute.xlu0 %2831
        %v2833 = vrot.slane %v2830, 2
        %v2834 = vrot.slane %v2832, 2
        %v2835 = vsel %vm2250, %v2833, %v2834
        %vm2836 = vcmask 662528
        %v2837 = vsel %vm2836, %v2830, %v2835
        %v2840 = vadd.f32 %v2803, %v2837
        %v2841 = vadd.f32 %v2804, %v2832
        %s2842 = sld [smem:[#allocation9 + $0x91]]
        %v2843 = vstv %s2842
        %v2844 = vmul.f32 %v2843, %v2224
        %v2845 = vmul.f32 %v2843, %v2225
        %2848 = vrot.lane.b32.xlu0 %v2844, 81
        %v2849 = vpop.permute.xlu0 %2848
        %2850 = vrot.lane.b32.xlu0 %v2845, 81
        %v2851 = vpop.permute.xlu0 %2850
        %v2852 = vrot.slane %v2849, 2
        %v2853 = vrot.slane %v2851, 2
        %v2854 = vsel %vm2250, %v2852, %v2853
        %v2855 = vsel %vm2836, %v2849, %v2854
        %v2858 = vadd.f32 %v2821, %v2855
        %v2859 = vadd.f32 %v2822, %v2851
        %s2860 = sld [smem:[#allocation9 + $0x12]]
        %v2861 = vstv %s2860
        %v2862 = vmul.f32 %v2861, %v2224
        %v2863 = vmul.f32 %v2861, %v2225
        %2866 = vrot.lane.b32.xlu0 %v2862, 80
        %v2867 = vpop.permute.xlu0 %2866
        %2868 = vrot.lane.b32.xlu0 %v2863, 80
        %v2869 = vpop.permute.xlu0 %2868
        %v2870 = vrot.slane %v2867, 2
        %v2871 = vrot.slane %v2869, 2
        %v2872 = vsel %vm2250, %v2870, %v2871
        %vm2873 = vcmask 654336
        %v2874 = vsel %vm2873, %v2867, %v2872
        %v2877 = vadd.f32 %v2840, %v2874
        %v2878 = vadd.f32 %v2841, %v2869
        %s2879 = sld [smem:[#allocation9 + $0x92]]
        %v2880 = vstv %s2879
        %v2881 = vmul.f32 %v2880, %v2224
        %v2882 = vmul.f32 %v2880, %v2225
        %2885 = vrot.lane.b32.xlu0 %v2881, 80
        %v2886 = vpop.permute.xlu0 %2885
        %2887 = vrot.lane.b32.xlu0 %v2882, 80
        %v2888 = vpop.permute.xlu0 %2887
        %v2889 = vrot.slane %v2886, 2
        %v2890 = vrot.slane %v2888, 2
        %v2891 = vsel %vm2250, %v2889, %v2890
        %v2892 = vsel %vm2873, %v2886, %v2891
        %v2895 = vadd.f32 %v2858, %v2892
        %v2896 = vadd.f32 %v2859, %v2888
        %s2897 = sld [smem:[#allocation9 + $0x13]]
        %v2898 = vstv %s2897
        %v2899 = vmul.f32 %v2898, %v2224
        %v2900 = vmul.f32 %v2898, %v2225
        %2903 = vrot.lane.b32.xlu0 %v2899, 79
        %v2904 = vpop.permute.xlu0 %2903
        %2905 = vrot.lane.b32.xlu0 %v2900, 79
        %v2906 = vpop.permute.xlu0 %2905
        %v2907 = vrot.slane %v2904, 2
        %v2908 = vrot.slane %v2906, 2
        %v2909 = vsel %vm2250, %v2907, %v2908
        %vm2910 = vcmask 646144
        %v2911 = vsel %vm2910, %v2904, %v2909
        %v2914 = vadd.f32 %v2877, %v2911
        %v2915 = vadd.f32 %v2878, %v2906
        %s2916 = sld [smem:[#allocation9 + $0x93]]
        %v2917 = vstv %s2916
        %v2918 = vmul.f32 %v2917, %v2224
        %v2919 = vmul.f32 %v2917, %v2225
        %2922 = vrot.lane.b32.xlu0 %v2918, 79
        %v2923 = vpop.permute.xlu0 %2922
        %2924 = vrot.lane.b32.xlu0 %v2919, 79
        %v2925 = vpop.permute.xlu0 %2924
        %v2926 = vrot.slane %v2923, 2
        %v2927 = vrot.slane %v2925, 2
        %v2928 = vsel %vm2250, %v2926, %v2927
        %v2929 = vsel %vm2910, %v2923, %v2928
        %v2932 = vadd.f32 %v2895, %v2929
        %v2933 = vadd.f32 %v2896, %v2925
        %s2934 = sld [smem:[#allocation9 + $0x14]]
        %v2935 = vstv %s2934
        %v2936 = vmul.f32 %v2935, %v2224
        %v2937 = vmul.f32 %v2935, %v2225
        %2940 = vrot.lane.b32.xlu0 %v2936, 78
        %v2941 = vpop.permute.xlu0 %2940
        %2942 = vrot.lane.b32.xlu0 %v2937, 78
        %v2943 = vpop.permute.xlu0 %2942
        %v2944 = vrot.slane %v2941, 2
        %v2945 = vrot.slane %v2943, 2
        %v2946 = vsel %vm2250, %v2944, %v2945
        %vm2947 = vcmask 637952
        %v2948 = vsel %vm2947, %v2941, %v2946
        %v2951 = vadd.f32 %v2914, %v2948
        %v2952 = vadd.f32 %v2915, %v2943
        %s2953 = sld [smem:[#allocation9 + $0x94]]
        %v2954 = vstv %s2953
        %v2955 = vmul.f32 %v2954, %v2224
        %v2956 = vmul.f32 %v2954, %v2225
        %2959 = vrot.lane.b32.xlu0 %v2955, 78
        %v2960 = vpop.permute.xlu0 %2959
        %2961 = vrot.lane.b32.xlu0 %v2956, 78
        %v2962 = vpop.permute.xlu0 %2961
        %v2963 = vrot.slane %v2960, 2
        %v2964 = vrot.slane %v2962, 2
        %v2965 = vsel %vm2250, %v2963, %v2964
        %v2966 = vsel %vm2947, %v2960, %v2965
        %v2969 = vadd.f32 %v2932, %v2966
        %v2970 = vadd.f32 %v2933, %v2962
        %s2971 = sld [smem:[#allocation9 + $0x15]]
        %v2972 = vstv %s2971
        %v2973 = vmul.f32 %v2972, %v2224
        %v2974 = vmul.f32 %v2972, %v2225
        %2977 = vrot.lane.b32.xlu0 %v2973, 62
        %v2978 = vpop.permute.xlu0 %2977
        %2979 = vrot.lane.b32.xlu0 %v2974, 62
        %v2980 = vpop.permute.xlu0 %2979
        %v2981 = vrot.slane %v2978, 2
        %v2982 = vrot.slane %v2980, 2
        %v2983 = vsel %vm2250, %v2981, %v2982
        %vm2984 = vcmask 506880
        %v2985 = vsel %vm2984, %v2978, %v2983
        %v2988 = vadd.f32 %v2951, %v2985
        %v2989 = vadd.f32 %v2952, %v2980
        %s2990 = sld [smem:[#allocation9 + $0x95]]
        %v2991 = vstv %s2990
        %v2992 = vmul.f32 %v2991, %v2224
        %v2993 = vmul.f32 %v2991, %v2225
        %2996 = vrot.lane.b32.xlu0 %v2992, 62
        %v2997 = vpop.permute.xlu0 %2996
        %2998 = vrot.lane.b32.xlu0 %v2993, 62
        %v2999 = vpop.permute.xlu0 %2998
        %v3000 = vrot.slane %v2997, 2
        %v3001 = vrot.slane %v2999, 2
        %v3002 = vsel %vm2250, %v3000, %v3001
        %v3003 = vsel %vm2984, %v2997, %v3002
        %v3006 = vadd.f32 %v2969, %v3003
        %v3007 = vadd.f32 %v2970, %v2999
        %s3008 = sld [smem:[#allocation9 + $0x16]]
        %v3009 = vstv %s3008
        %v3010 = vmul.f32 %v3009, %v2224
        %v3011 = vmul.f32 %v3009, %v2225
        %3014 = vrot.lane.b32.xlu0 %v3010, 61
        %v3015 = vpop.permute.xlu0 %3014
        %3016 = vrot.lane.b32.xlu0 %v3011, 61
        %v3017 = vpop.permute.xlu0 %3016
        %v3018 = vrot.slane %v3015, 2
        %v3019 = vrot.slane %v3017, 2
        %v3020 = vsel %vm2250, %v3018, %v3019
        %vm3021 = vcmask 498688
        %v3022 = vsel %vm3021, %v3015, %v3020
        %v3025 = vadd.f32 %v2988, %v3022
        %v3026 = vadd.f32 %v2989, %v3017
        %s3027 = sld [smem:[#allocation9 + $0x96]]
        %v3028 = vstv %s3027
        %v3029 = vmul.f32 %v3028, %v2224
        %v3030 = vmul.f32 %v3028, %v2225
        %3033 = vrot.lane.b32.xlu0 %v3029, 61
        %v3034 = vpop.permute.xlu0 %3033
        %3035 = vrot.lane.b32.xlu0 %v3030, 61
        %v3036 = vpop.permute.xlu0 %3035
        %v3037 = vrot.slane %v3034, 2
        %v3038 = vrot.slane %v3036, 2
        %v3039 = vsel %vm2250, %v3037, %v3038
        %v3040 = vsel %vm3021, %v3034, %v3039
        %v3043 = vadd.f32 %v3006, %v3040
        %v3044 = vadd.f32 %v3007, %v3036
        %s3045 = sld [smem:[#allocation9 + $0x17]]
        %v3046 = vstv %s3045
        %v3047 = vmul.f32 %v3046, %v2224
        %v3048 = vmul.f32 %v3046, %v2225
        %3051 = vrot.lane.b32.xlu0 %v3047, 60
        %v3052 = vpop.permute.xlu0 %3051
        %3053 = vrot.lane.b32.xlu0 %v3048, 60
        %v3054 = vpop.permute.xlu0 %3053
        %v3055 = vrot.slane %v3052, 2
        %v3056 = vrot.slane %v3054, 2
        %v3057 = vsel %vm2250, %v3055, %v3056
        %vm3058 = vcmask 490496
        %v3059 = vsel %vm3058, %v3052, %v3057
        %v3062 = vadd.f32 %v3025, %v3059
        %v3063 = vadd.f32 %v3026, %v3054
        %s3064 = sld [smem:[#allocation9 + $0x97]]
        %v3065 = vstv %s3064
        %v3066 = vmul.f32 %v3065, %v2224
        %v3067 = vmul.f32 %v3065, %v2225
        %3070 = vrot.lane.b32.xlu0 %v3066, 60
        %v3071 = vpop.permute.xlu0 %3070
        %3072 = vrot.lane.b32.xlu0 %v3067, 60
        %v3073 = vpop.permute.xlu0 %3072
        %v3074 = vrot.slane %v3071, 2
        %v3075 = vrot.slane %v3073, 2
        %v3076 = vsel %vm2250, %v3074, %v3075
        %v3077 = vsel %vm3058, %v3071, %v3076
        %v3080 = vadd.f32 %v3043, %v3077
        %v3081 = vadd.f32 %v3044, %v3073
        %v3082 = vld [vmem:[#allocation3 + $0x2] sm:$0xff]
        %s3083 = sld [smem:[#allocation9 + $0x18]]
        %v3084 = vstv %s3083
        %v3085 = vmul.f32 %v3084, %v3082
        %3087 = vrot.lane.b32.xlu0 %v3085, 59
        %v3088 = vpop.permute.xlu0 %3087
        %v3089 = vrot.slane %v3088, 6
        %vm3090 = vcmask 482304
        %v3091 = vsel %vm3090, %v3089, %v3088
        %v3094 = vadd.f32 %v3062, %v3091
        %v3095 = vadd.f32 %v3063, %v3089
        %s3096 = sld [smem:[#allocation9 + $0x98]]
        %v3097 = vstv %s3096
        %v3098 = vmul.f32 %v3097, %v3082
        %3100 = vrot.lane.b32.xlu0 %v3098, 59
        %v3101 = vpop.permute.xlu0 %3100
        %v3102 = vrot.slane %v3101, 6
        %v3103 = vsel %vm3090, %v3102, %v3101
        %v3106 = vadd.f32 %v3080, %v3103
        %v3107 = vadd.f32 %v3081, %v3102
        %v3108 = vld [vmem:[#allocation3 + $0x2] sm:$0xff]
        %v3109 = vld [vmem:[#allocation3 + $0xa] sm:$0x3]
        %s3110 = sld [smem:[#allocation9 + $0x19]]
        %v3111 = vstv %s3110
        %v3112 = vmul.f32 %v3111, %v3108
        %v3113 = vmul.f32 %v3111, %v3109
        %3116 = vrot.lane.b32.xlu0 %v3112, 58
        %v3117 = vpop.permute.xlu0 %3116
        %3118 = vrot.lane.b32.xlu0 %v3113, 58
        %v3119 = vpop.permute.xlu0 %3118
        %v3120 = vrot.slane %v3117, 6
        %vm3121 = vcmask 474112
        %v3122 = vsel %vm3121, %v3120, %v3117
        %v3123 = vsel %vm3121, %v3120, %v3119
        %v3126 = vadd.f32 %v3094, %v3122
        %v3127 = vadd.f32 %v3095, %v3123
        %s3128 = sld [smem:[#allocation9 + $0x99]]
        %v3129 = vstv %s3128
        %v3130 = vmul.f32 %v3129, %v3108
        %v3131 = vmul.f32 %v3129, %v3109
        %3134 = vrot.lane.b32.xlu0 %v3130, 58
        %v3135 = vpop.permute.xlu0 %3134
        %3136 = vrot.lane.b32.xlu0 %v3131, 58
        %v3137 = vpop.permute.xlu0 %3136
        %v3138 = vrot.slane %v3135, 6
        %v3139 = vsel %vm3121, %v3138, %v3135
        %v3140 = vsel %vm3121, %v3138, %v3137
        %v3143 = vadd.f32 %v3106, %v3139
        %v3144 = vadd.f32 %v3107, %v3140
        %s3145 = sld [smem:[#allocation9 + $0x1a]]
        %v3146 = vstv %s3145
        %v3147 = vmul.f32 %v3146, %v3108
        %v3148 = vmul.f32 %v3146, %v3109
        %3151 = vrot.lane.b32.xlu0 %v3147, 57
        %v3152 = vpop.permute.xlu0 %3151
        %3153 = vrot.lane.b32.xlu0 %v3148, 57
        %v3154 = vpop.permute.xlu0 %3153
        %v3155 = vrot.slane %v3152, 6
        %vm3156 = vcmask 465920
        %v3157 = vsel %vm3156, %v3155, %v3152
        %v3158 = vsel %vm3156, %v3155, %v3154
        %v3161 = vadd.f32 %v3126, %v3157
        %v3162 = vadd.f32 %v3127, %v3158
        %s3163 = sld [smem:[#allocation9 + $0x9a]]
        %v3164 = vstv %s3163
        %v3165 = vmul.f32 %v3164, %v3108
        %v3166 = vmul.f32 %v3164, %v3109
        %3169 = vrot.lane.b32.xlu0 %v3165, 57
        %v3170 = vpop.permute.xlu0 %3169
        %3171 = vrot.lane.b32.xlu0 %v3166, 57
        %v3172 = vpop.permute.xlu0 %3171
        %v3173 = vrot.slane %v3170, 6
        %v3174 = vsel %vm3156, %v3173, %v3170
        %v3175 = vsel %vm3156, %v3173, %v3172
        %v3178 = vadd.f32 %v3143, %v3174
        %v3179 = vadd.f32 %v3144, %v3175
        %s3180 = sld [smem:[#allocation9 + $0x1b]]
        %v3181 = vstv %s3180
        %v3182 = vmul.f32 %v3181, %v3108
        %v3183 = vmul.f32 %v3181, %v3109
        %3186 = vrot.lane.b32.xlu0 %v3182, 56
        %v3187 = vpop.permute.xlu0 %3186
        %3188 = vrot.lane.b32.xlu0 %v3183, 56
        %v3189 = vpop.permute.xlu0 %3188
        %v3190 = vrot.slane %v3187, 6
        %vm3191 = vcmask 457728
        %v3192 = vsel %vm3191, %v3190, %v3187
        %v3193 = vsel %vm3191, %v3190, %v3189
        %v3196 = vadd.f32 %v3161, %v3192
        %v3197 = vadd.f32 %v3162, %v3193
        %s3198 = sld [smem:[#allocation9 + $0x9b]]
        %v3199 = vstv %s3198
        %v3200 = vmul.f32 %v3199, %v3108
        %v3201 = vmul.f32 %v3199, %v3109
        %3204 = vrot.lane.b32.xlu0 %v3200, 56
        %v3205 = vpop.permute.xlu0 %3204
        %3206 = vrot.lane.b32.xlu0 %v3201, 56
        %v3207 = vpop.permute.xlu0 %3206
        %v3208 = vrot.slane %v3205, 6
        %v3209 = vsel %vm3191, %v3208, %v3205
        %v3210 = vsel %vm3191, %v3208, %v3207
        %v3213 = vadd.f32 %v3178, %v3209
        %v3214 = vadd.f32 %v3179, %v3210
        %s3215 = sld [smem:[#allocation9 + $0x1c]]
        %v3216 = vstv %s3215
        %v3217 = vmul.f32 %v3216, %v3108
        %v3218 = vmul.f32 %v3216, %v3109
        %3221 = vrot.lane.b32.xlu0 %v3217, 40
        %v3222 = vpop.permute.xlu0 %3221
        %3223 = vrot.lane.b32.xlu0 %v3218, 40
        %v3224 = vpop.permute.xlu0 %3223
        %v3225 = vrot.slane %v3222, 6
        %vm3226 = vcmask 326656
        %v3227 = vsel %vm3226, %v3225, %v3222
        %v3228 = vsel %vm3226, %v3225, %v3224
        %v3231 = vadd.f32 %v3196, %v3227
        %v3232 = vadd.f32 %v3197, %v3228
        %s3233 = sld [smem:[#allocation9 + $0x9c]]
        %v3234 = vstv %s3233
        %v3235 = vmul.f32 %v3234, %v3108
        %v3236 = vmul.f32 %v3234, %v3109
        %3239 = vrot.lane.b32.xlu0 %v3235, 40
        %v3240 = vpop.permute.xlu0 %3239
        %3241 = vrot.lane.b32.xlu0 %v3236, 40
        %v3242 = vpop.permute.xlu0 %3241
        %v3243 = vrot.slane %v3240, 6
        %v3244 = vsel %vm3226, %v3243, %v3240
        %v3245 = vsel %vm3226, %v3243, %v3242
        %v3248 = vadd.f32 %v3213, %v3244
        %v3249 = vadd.f32 %v3214, %v3245
        %s3250 = sld [smem:[#allocation9 + $0x1d]]
        %v3251 = vstv %s3250
        %v3252 = vmul.f32 %v3251, %v3108
        %v3253 = vmul.f32 %v3251, %v3109
        %3256 = vrot.lane.b32.xlu0 %v3252, 39
        %v3257 = vpop.permute.xlu0 %3256
        %3258 = vrot.lane.b32.xlu0 %v3253, 39
        %v3259 = vpop.permute.xlu0 %3258
        %v3260 = vrot.slane %v3257, 6
        %vm3261 = vcmask 318464
        %v3262 = vsel %vm3261, %v3260, %v3257
        %v3263 = vsel %vm3261, %v3260, %v3259
        %v3266 = vadd.f32 %v3231, %v3262
        %v3267 = vadd.f32 %v3232, %v3263
        %s3268 = sld [smem:[#allocation9 + $0x9d]]
        %v3269 = vstv %s3268
        %v3270 = vmul.f32 %v3269, %v3108
        %v3271 = vmul.f32 %v3269, %v3109
        %3274 = vrot.lane.b32.xlu0 %v3270, 39
        %v3275 = vpop.permute.xlu0 %3274
        %3276 = vrot.lane.b32.xlu0 %v3271, 39
        %v3277 = vpop.permute.xlu0 %3276
        %v3278 = vrot.slane %v3275, 6
        %v3279 = vsel %vm3261, %v3278, %v3275
        %v3280 = vsel %vm3261, %v3278, %v3277
        %v3283 = vadd.f32 %v3248, %v3279
        %v3284 = vadd.f32 %v3249, %v3280
        %s3285 = sld [smem:[#allocation9 + $0x1e]]
        %v3286 = vstv %s3285
        %v3287 = vmul.f32 %v3286, %v3108
        %v3288 = vmul.f32 %v3286, %v3109
        %3291 = vrot.lane.b32.xlu0 %v3287, 38
        %v3292 = vpop.permute.xlu0 %3291
        %3293 = vrot.lane.b32.xlu0 %v3288, 38
        %v3294 = vpop.permute.xlu0 %3293
        %v3295 = vrot.slane %v3292, 6
        %vm3296 = vcmask 310272
        %v3297 = vsel %vm3296, %v3295, %v3292
        %v3298 = vsel %vm3296, %v3295, %v3294
        %v3301 = vadd.f32 %v3266, %v3297
        %v3302 = vadd.f32 %v3267, %v3298
        %s3303 = sld [smem:[#allocation9 + $0x9e]]
        %v3304 = vstv %s3303
        %v3305 = vmul.f32 %v3304, %v3108
        %v3306 = vmul.f32 %v3304, %v3109
        %3309 = vrot.lane.b32.xlu0 %v3305, 38
        %v3310 = vpop.permute.xlu0 %3309
        %3311 = vrot.lane.b32.xlu0 %v3306, 38
        %v3312 = vpop.permute.xlu0 %3311
        %v3313 = vrot.slane %v3310, 6
        %v3314 = vsel %vm3296, %v3313, %v3310
        %v3315 = vsel %vm3296, %v3313, %v3312
        %v3318 = vadd.f32 %v3283, %v3314
        %v3319 = vadd.f32 %v3284, %v3315
        %s3320 = sld [smem:[#allocation9 + $0x1f]]
        %v3321 = vstv %s3320
        %v3322 = vmul.f32 %v3321, %v3108
        %v3323 = vmul.f32 %v3321, %v3109
        %3326 = vrot.lane.b32.xlu0 %v3322, 37
        %v3327 = vpop.permute.xlu0 %3326
        %3328 = vrot.lane.b32.xlu0 %v3323, 37
        %v3329 = vpop.permute.xlu0 %3328
        %v3330 = vrot.slane %v3327, 6
        %vm3331 = vcmask 302080
        %v3332 = vsel %vm3331, %v3330, %v3327
        %v3333 = vsel %vm3331, %v3330, %v3329
        %v3336 = vadd.f32 %v3301, %v3332
        %v3337 = vadd.f32 %v3302, %v3333
        %s3338 = sld [smem:[#allocation9 + $0x9f]]
        %v3339 = vstv %s3338
        %v3340 = vmul.f32 %v3339, %v3108
        %v3341 = vmul.f32 %v3339, %v3109
        %3344 = vrot.lane.b32.xlu0 %v3340, 37
        %v3345 = vpop.permute.xlu0 %3344
        %3346 = vrot.lane.b32.xlu0 %v3341, 37
        %v3347 = vpop.permute.xlu0 %3346
        %v3348 = vrot.slane %v3345, 6
        %v3349 = vsel %vm3331, %v3348, %v3345
        %v3350 = vsel %vm3331, %v3348, %v3347
        %v3353 = vadd.f32 %v3318, %v3349
        %v3354 = vadd.f32 %v3319, %v3350
        %s3355 = sld [smem:[#allocation9 + $0x20]]
        %v3356 = vstv %s3355
        %v3357 = vmul.f32 %v3356, %v3108
        %v3358 = vmul.f32 %v3356, %v3109
        %3361 = vrot.lane.b32.xlu0 %v3357, 36
        %v3362 = vpop.permute.xlu0 %3361
        %3363 = vrot.lane.b32.xlu0 %v3358, 36
        %v3364 = vpop.permute.xlu0 %3363
        %v3365 = vrot.slane %v3362, 6
        %vm3366 = vcmask 293888
        %v3367 = vsel %vm3366, %v3365, %v3362
        %v3368 = vsel %vm3366, %v3365, %v3364
        %v3371 = vadd.f32 %v3336, %v3367
        %v3372 = vadd.f32 %v3337, %v3368
        %s3373 = sld [smem:[#allocation9 + $0xa0]]
        %v3374 = vstv %s3373
        %v3375 = vmul.f32 %v3374, %v3108
        %v3376 = vmul.f32 %v3374, %v3109
        %3379 = vrot.lane.b32.xlu0 %v3375, 36
        %v3380 = vpop.permute.xlu0 %3379
        %3381 = vrot.lane.b32.xlu0 %v3376, 36
        %v3382 = vpop.permute.xlu0 %3381
        %v3383 = vrot.slane %v3380, 6
        %v3384 = vsel %vm3366, %v3383, %v3380
        %v3385 = vsel %vm3366, %v3383, %v3382
        %v3388 = vadd.f32 %v3353, %v3384
        %v3389 = vadd.f32 %v3354, %v3385
        %s3390 = sld [smem:[#allocation9 + $0x21]]
        %v3391 = vstv %s3390
        %v3392 = vmul.f32 %v3391, %v3108
        %v3393 = vmul.f32 %v3391, %v3109
        %3396 = vrot.lane.b32.xlu0 %v3392, 35
        %v3397 = vpop.permute.xlu0 %3396
        %3398 = vrot.lane.b32.xlu0 %v3393, 35
        %v3399 = vpop.permute.xlu0 %3398
        %v3400 = vrot.slane %v3397, 6
        %vm3401 = vcmask 285696
        %v3402 = vsel %vm3401, %v3400, %v3397
        %v3403 = vsel %vm3401, %v3400, %v3399
        %v3406 = vadd.f32 %v3371, %v3402
        %v3407 = vadd.f32 %v3372, %v3403
        %s3408 = sld [smem:[#allocation9 + $0xa1]]
        %v3409 = vstv %s3408
        %v3410 = vmul.f32 %v3409, %v3108
        %v3411 = vmul.f32 %v3409, %v3109
        %3414 = vrot.lane.b32.xlu0 %v3410, 35
        %v3415 = vpop.permute.xlu0 %3414
        %3416 = vrot.lane.b32.xlu0 %v3411, 35
        %v3417 = vpop.permute.xlu0 %3416
        %v3418 = vrot.slane %v3415, 6
        %v3419 = vsel %vm3401, %v3418, %v3415
        %v3420 = vsel %vm3401, %v3418, %v3417
        %v3423 = vadd.f32 %v3388, %v3419
        %v3424 = vadd.f32 %v3389, %v3420
        %s3425 = sld [smem:[#allocation9 + $0x22]]
        %v3426 = vstv %s3425
        %v3427 = vmul.f32 %v3426, %v3108
        %v3428 = vmul.f32 %v3426, %v3109
        %3431 = vrot.lane.b32.xlu0 %v3427, 34
        %v3432 = vpop.permute.xlu0 %3431
        %3433 = vrot.lane.b32.xlu0 %v3428, 34
        %v3434 = vpop.permute.xlu0 %3433
        %v3435 = vrot.slane %v3432, 6
        %vm3436 = vcmask 277504
        %v3437 = vsel %vm3436, %v3435, %v3432
        %v3438 = vsel %vm3436, %v3435, %v3434
        %v3441 = vadd.f32 %v3406, %v3437
        %v3442 = vadd.f32 %v3407, %v3438
        %s3443 = sld [smem:[#allocation9 + $0xa2]]
        %v3444 = vstv %s3443
        %v3445 = vmul.f32 %v3444, %v3108
        %v3446 = vmul.f32 %v3444, %v3109
        %3449 = vrot.lane.b32.xlu0 %v3445, 34
        %v3450 = vpop.permute.xlu0 %3449
        %3451 = vrot.lane.b32.xlu0 %v3446, 34
        %v3452 = vpop.permute.xlu0 %3451
        %v3453 = vrot.slane %v3450, 6
        %v3454 = vsel %vm3436, %v3453, %v3450
        %v3455 = vsel %vm3436, %v3453, %v3452
        %v3458 = vadd.f32 %v3423, %v3454
        %v3459 = vadd.f32 %v3424, %v3455
        %s3460 = sld [smem:[#allocation9 + $0x23]]
        %v3461 = vstv %s3460
        %v3462 = vmul.f32 %v3461, %v3108
        %v3463 = vmul.f32 %v3461, %v3109
        %3466 = vrot.lane.b32.xlu0 %v3462, 18
        %v3467 = vpop.permute.xlu0 %3466
        %3468 = vrot.lane.b32.xlu0 %v3463, 18
        %v3469 = vpop.permute.xlu0 %3468
        %v3470 = vrot.slane %v3467, 6
        %vm3471 = vcmask 146432
        %v3472 = vsel %vm3471, %v3470, %v3467
        %v3473 = vsel %vm3471, %v3470, %v3469
        %v3476 = vadd.f32 %v3441, %v3472
        %v3477 = vadd.f32 %v3442, %v3473
        %s3478 = sld [smem:[#allocation9 + $0xa3]]
        %v3479 = vstv %s3478
        %v3480 = vmul.f32 %v3479, %v3108
        %v3481 = vmul.f32 %v3479, %v3109
        %3484 = vrot.lane.b32.xlu0 %v3480, 18
        %v3485 = vpop.permute.xlu0 %3484
        %3486 = vrot.lane.b32.xlu0 %v3481, 18
        %v3487 = vpop.permute.xlu0 %3486
        %v3488 = vrot.slane %v3485, 6
        %v3489 = vsel %vm3471, %v3488, %v3485
        %v3490 = vsel %vm3471, %v3488, %v3487
        %v3493 = vadd.f32 %v3458, %v3489
        %v3494 = vadd.f32 %v3459, %v3490
        %s3495 = sld [smem:[#allocation9 + $0x24]]
        %v3496 = vstv %s3495
        %v3497 = vmul.f32 %v3496, %v3108
        %v3498 = vmul.f32 %v3496, %v3109
        %3501 = vrot.lane.b32.xlu0 %v3497, 17
        %v3502 = vpop.permute.xlu0 %3501
        %3503 = vrot.lane.b32.xlu0 %v3498, 17
        %v3504 = vpop.permute.xlu0 %3503
        %v3505 = vrot.slane %v3502, 6
        %vm3506 = vcmask 138240
        %v3507 = vsel %vm3506, %v3505, %v3502
        %v3508 = vsel %vm3506, %v3505, %v3504
        %v3511 = vadd.f32 %v3476, %v3507
        %v3512 = vadd.f32 %v3477, %v3508
        %s3513 = sld [smem:[#allocation9 + $0xa4]]
        %v3514 = vstv %s3513
        %v3515 = vmul.f32 %v3514, %v3108
        %v3516 = vmul.f32 %v3514, %v3109
        %3519 = vrot.lane.b32.xlu0 %v3515, 17
        %v3520 = vpop.permute.xlu0 %3519
        %3521 = vrot.lane.b32.xlu0 %v3516, 17
        %v3522 = vpop.permute.xlu0 %3521
        %v3523 = vrot.slane %v3520, 6
        %v3524 = vsel %vm3506, %v3523, %v3520
        %v3525 = vsel %vm3506, %v3523, %v3522
        %v3528 = vadd.f32 %v3493, %v3524
        %v3529 = vadd.f32 %v3494, %v3525
        %s3530 = sld [smem:[#allocation9 + $0x25]]
        %v3531 = vstv %s3530
        %v3532 = vmul.f32 %v3531, %v3108
        %v3533 = vmul.f32 %v3531, %v3109
        %3536 = vrot.lane.b32.xlu0 %v3532, 16
        %v3537 = vpop.permute.xlu0 %3536
        %3538 = vrot.lane.b32.xlu0 %v3533, 16
        %v3539 = vpop.permute.xlu0 %3538
        %v3540 = vrot.slane %v3537, 6
        %v3541 = vsel %vm1051, %v3540, %v3537
        %v3542 = vsel %vm1051, %v3540, %v3539
        %v3545 = vadd.f32 %v3511, %v3541
        %v3546 = vadd.f32 %v3512, %v3542
        %s3547 = sld [smem:[#allocation9 + $0xa5]]
        %v3548 = vstv %s3547
        %v3549 = vmul.f32 %v3548, %v3108
        %v3550 = vmul.f32 %v3548, %v3109
        %3553 = vrot.lane.b32.xlu0 %v3549, 16
        %v3554 = vpop.permute.xlu0 %3553
        %3555 = vrot.lane.b32.xlu0 %v3550, 16
        %v3556 = vpop.permute.xlu0 %3555
        %v3557 = vrot.slane %v3554, 6
        %v3558 = vsel %vm1051, %v3557, %v3554
        %v3559 = vsel %vm1051, %v3557, %v3556
        %v3562 = vadd.f32 %v3528, %v3558
        %v3563 = vadd.f32 %v3529, %v3559
        %s3564 = sld [smem:[#allocation9 + $0x26]]
        %v3565 = vstv %s3564
        %v3566 = vmul.f32 %v3565, %v3108
        %v3567 = vmul.f32 %v3565, %v3109
        %3570 = vrot.lane.b32.xlu0 %v3566, 15
        %v3571 = vpop.permute.xlu0 %3570
        %3572 = vrot.lane.b32.xlu0 %v3567, 15
        %v3573 = vpop.permute.xlu0 %3572
        %v3574 = vrot.slane %v3571, 6
        %vm3575 = vcmask 121856
        %v3576 = vsel %vm3575, %v3574, %v3571
        %v3577 = vsel %vm3575, %v3574, %v3573
        %v3580 = vadd.f32 %v3545, %v3576
        %v3581 = vadd.f32 %v3546, %v3577
        %s3582 = sld [smem:[#allocation9 + $0xa6]]
        %v3583 = vstv %s3582
        %v3584 = vmul.f32 %v3583, %v3108
        %v3585 = vmul.f32 %v3583, %v3109
        %3588 = vrot.lane.b32.xlu0 %v3584, 15
        %v3589 = vpop.permute.xlu0 %3588
        %3590 = vrot.lane.b32.xlu0 %v3585, 15
        %v3591 = vpop.permute.xlu0 %3590
        %v3592 = vrot.slane %v3589, 6
        %v3593 = vsel %vm3575, %v3592, %v3589
        %v3594 = vsel %vm3575, %v3592, %v3591
        %v3597 = vadd.f32 %v3562, %v3593
        %v3598 = vadd.f32 %v3563, %v3594
        %s3599 = sld [smem:[#allocation9 + $0x27]]
        %v3600 = vstv %s3599
        %v3601 = vmul.f32 %v3600, %v3108
        %v3602 = vmul.f32 %v3600, %v3109
        %3605 = vrot.lane.b32.xlu0 %v3601, 14
        %v3606 = vpop.permute.xlu0 %3605
        %3607 = vrot.lane.b32.xlu0 %v3602, 14
        %v3608 = vpop.permute.xlu0 %3607
        %v3609 = vrot.slane %v3606, 6
        %vm3610 = vcmask 113664
        %v3611 = vsel %vm3610, %v3609, %v3606
        %v3612 = vsel %vm3610, %v3609, %v3608
        %v3615 = vadd.f32 %v3580, %v3611
        %v3616 = vadd.f32 %v3581, %v3612
        %s3617 = sld [smem:[#allocation9 + $0xa7]]
        %v3618 = vstv %s3617
        %v3619 = vmul.f32 %v3618, %v3108
        %v3620 = vmul.f32 %v3618, %v3109
        %3623 = vrot.lane.b32.xlu0 %v3619, 14
        %v3624 = vpop.permute.xlu0 %3623
        %3625 = vrot.lane.b32.xlu0 %v3620, 14
        %v3626 = vpop.permute.xlu0 %3625
        %v3627 = vrot.slane %v3624, 6
        %v3628 = vsel %vm3610, %v3627, %v3624
        %v3629 = vsel %vm3610, %v3627, %v3626
        %v3632 = vadd.f32 %v3597, %v3628
        %v3633 = vadd.f32 %v3598, %v3629
        %s3634 = sld [smem:[#allocation9 + $0x28]]
        %v3635 = vstv %s3634
        %v3636 = vmul.f32 %v3635, %v3108
        %v3637 = vmul.f32 %v3635, %v3109
        %3640 = vrot.lane.b32.xlu0 %v3636, 13
        %v3641 = vpop.permute.xlu0 %3640
        %3642 = vrot.lane.b32.xlu0 %v3637, 13
        %v3643 = vpop.permute.xlu0 %3642
        %v3644 = vrot.slane %v3641, 6
        %vm3645 = vcmask 105472
        %v3646 = vsel %vm3645, %v3644, %v3641
        %v3647 = vsel %vm3645, %v3644, %v3643
        %v3650 = vadd.f32 %v3615, %v3646
        %v3651 = vadd.f32 %v3616, %v3647
        %s3652 = sld [smem:[#allocation9 + $0xa8]]
        %v3653 = vstv %s3652
        %v3654 = vmul.f32 %v3653, %v3108
        %v3655 = vmul.f32 %v3653, %v3109
        %3658 = vrot.lane.b32.xlu0 %v3654, 13
        %v3659 = vpop.permute.xlu0 %3658
        %3660 = vrot.lane.b32.xlu0 %v3655, 13
        %v3661 = vpop.permute.xlu0 %3660
        %v3662 = vrot.slane %v3659, 6
        %v3663 = vsel %vm3645, %v3662, %v3659
        %v3664 = vsel %vm3645, %v3662, %v3661
        %v3667 = vadd.f32 %v3632, %v3663
        %v3668 = vadd.f32 %v3633, %v3664
        %s3669 = sld [smem:[#allocation9 + $0x29]]
        %v3670 = vstv %s3669
        %v3671 = vmul.f32 %v3670, %v3108
        %v3672 = vmul.f32 %v3670, %v3109
        %3675 = vrot.lane.b32.xlu0 %v3671, 12
        %v3676 = vpop.permute.xlu0 %3675
        %3677 = vrot.lane.b32.xlu0 %v3672, 12
        %v3678 = vpop.permute.xlu0 %3677
        %v3679 = vrot.slane %v3676, 6
        %vm3680 = vcmask 97280
        %v3681 = vsel %vm3680, %v3679, %v3676
        %v3682 = vsel %vm3680, %v3679, %v3678
        %v3685 = vadd.f32 %v3650, %v3681
        %v3686 = vadd.f32 %v3651, %v3682
        %s3687 = sld [smem:[#allocation9 + $0xa9]]
        %v3688 = vstv %s3687
        %v3689 = vmul.f32 %v3688, %v3108
        %v3690 = vmul.f32 %v3688, %v3109
        %3693 = vrot.lane.b32.xlu0 %v3689, 12
        %v3694 = vpop.permute.xlu0 %3693
        %3695 = vrot.lane.b32.xlu0 %v3690, 12
        %v3696 = vpop.permute.xlu0 %3695
        %v3697 = vrot.slane %v3694, 6
        %v3698 = vsel %vm3680, %v3697, %v3694
        %v3699 = vsel %vm3680, %v3697, %v3696
        %v3702 = vadd.f32 %v3667, %v3698
        %v3703 = vadd.f32 %v3668, %v3699
        %s3704 = sld [smem:[#allocation9 + $0x2a]]
        %v3705 = vstv %s3704
        %v3706 = vmul.f32 %v3705, %v3108
        %v3707 = vmul.f32 %v3705, %v3109
        %3710 = vrot.lane.b32.xlu0 %v3706, 124
        %v3711 = vpop.permute.xlu0 %3710
        %3712 = vrot.lane.b32.xlu0 %v3707, 124
        %v3713 = vpop.permute.xlu0 %3712
        %v3714 = vrot.slane %v3711, 2
        %v3715 = vrot.slane %v3713, 2
        %v3716 = vsel %vm2250, %v3714, %v3715
        %v3717 = vsel %vm2361, %v3711, %v3716
        %v3720 = vadd.f32 %v3685, %v3717
        %v3721 = vadd.f32 %v3686, %v3713
        %s3722 = sld [smem:[#allocation9 + $0xaa]]
        %v3723 = vstv %s3722
        %v3724 = vmul.f32 %v3723, %v3108
        %v3725 = vmul.f32 %v3723, %v3109
        %3728 = vrot.lane.b32.xlu0 %v3724, 124
        %v3729 = vpop.permute.xlu0 %3728
        %3730 = vrot.lane.b32.xlu0 %v3725, 124
        %v3731 = vpop.permute.xlu0 %3730
        %v3732 = vrot.slane %v3729, 2
        %v3733 = vrot.slane %v3731, 2
        %v3734 = vsel %vm2250, %v3732, %v3733
        %v3735 = vsel %vm2361, %v3729, %v3734
        %v3738 = vadd.f32 %v3702, %v3735
        %v3739 = vadd.f32 %v3703, %v3731
        %s3740 = sld [smem:[#allocation9 + $0x2b]]
        %v3741 = vstv %s3740
        %v3742 = vmul.f32 %v3741, %v3108
        %v3743 = vmul.f32 %v3741, %v3109
        %3746 = vrot.lane.b32.xlu0 %v3742, 123
        %v3747 = vpop.permute.xlu0 %3746
        %3748 = vrot.lane.b32.xlu0 %v3743, 123
        %v3749 = vpop.permute.xlu0 %3748
        %v3750 = vrot.slane %v3747, 2
        %v3751 = vrot.slane %v3749, 2
        %v3752 = vsel %vm2250, %v3750, %v3751
        %v3753 = vsel %vm2398, %v3747, %v3752
        %v3756 = vadd.f32 %v3720, %v3753
        %v3757 = vadd.f32 %v3721, %v3749
        %s3758 = sld [smem:[#allocation9 + $0xab]]
        %v3759 = vstv %s3758
        %v3760 = vmul.f32 %v3759, %v3108
        %v3761 = vmul.f32 %v3759, %v3109
        %3764 = vrot.lane.b32.xlu0 %v3760, 123
        %v3765 = vpop.permute.xlu0 %3764
        %3766 = vrot.lane.b32.xlu0 %v3761, 123
        %v3767 = vpop.permute.xlu0 %3766
        %v3768 = vrot.slane %v3765, 2
        %v3769 = vrot.slane %v3767, 2
        %v3770 = vsel %vm2250, %v3768, %v3769
        %v3771 = vsel %vm2398, %v3765, %v3770
        %v3774 = vadd.f32 %v3738, %v3771
        %v3775 = vadd.f32 %v3739, %v3767
        %s3776 = sld [smem:[#allocation9 + $0x2c]]
        %v3777 = vstv %s3776
        %v3778 = vmul.f32 %v3777, %v3108
        %v3779 = vmul.f32 %v3777, %v3109
        %3782 = vrot.lane.b32.xlu0 %v3778, 122
        %v3783 = vpop.permute.xlu0 %3782
        %3784 = vrot.lane.b32.xlu0 %v3779, 122
        %v3785 = vpop.permute.xlu0 %3784
        %v3786 = vrot.slane %v3783, 2
        %v3787 = vrot.slane %v3785, 2
        %v3788 = vsel %vm2250, %v3786, %v3787
        %v3789 = vsel %vm2435, %v3783, %v3788
        %v3792 = vadd.f32 %v3756, %v3789
        %v3793 = vadd.f32 %v3757, %v3785
        %s3794 = sld [smem:[#allocation9 + $0xac]]
        %v3795 = vstv %s3794
        %v3796 = vmul.f32 %v3795, %v3108
        %v3797 = vmul.f32 %v3795, %v3109
        %3800 = vrot.lane.b32.xlu0 %v3796, 122
        %v3801 = vpop.permute.xlu0 %3800
        %3802 = vrot.lane.b32.xlu0 %v3797, 122
        %v3803 = vpop.permute.xlu0 %3802
        %v3804 = vrot.slane %v3801, 2
        %v3805 = vrot.slane %v3803, 2
        %v3806 = vsel %vm2250, %v3804, %v3805
        %v3807 = vsel %vm2435, %v3801, %v3806
        %v3810 = vadd.f32 %v3774, %v3807
        %v3811 = vadd.f32 %v3775, %v3803
        %s3812 = sld [smem:[#allocation9 + $0x2d]]
        %v3813 = vstv %s3812
        %v3814 = vmul.f32 %v3813, %v3108
        %v3815 = vmul.f32 %v3813, %v3109
        %3818 = vrot.lane.b32.xlu0 %v3814, 121
        %v3819 = vpop.permute.xlu0 %3818
        %3820 = vrot.lane.b32.xlu0 %v3815, 121
        %v3821 = vpop.permute.xlu0 %3820
        %v3822 = vrot.slane %v3819, 2
        %v3823 = vrot.slane %v3821, 2
        %v3824 = vsel %vm2250, %v3822, %v3823
        %vm3825 = vcmask 990208
        %v3826 = vsel %vm3825, %v3819, %v3824
        %v3829 = vadd.f32 %v3792, %v3826
        %v3830 = vadd.f32 %v3793, %v3821
        %s3831 = sld [smem:[#allocation9 + $0xad]]
        %v3832 = vstv %s3831
        %v3833 = vmul.f32 %v3832, %v3108
        %v3834 = vmul.f32 %v3832, %v3109
        %3837 = vrot.lane.b32.xlu0 %v3833, 121
        %v3838 = vpop.permute.xlu0 %3837
        %3839 = vrot.lane.b32.xlu0 %v3834, 121
        %v3840 = vpop.permute.xlu0 %3839
        %v3841 = vrot.slane %v3838, 2
        %v3842 = vrot.slane %v3840, 2
        %v3843 = vsel %vm2250, %v3841, %v3842
        %v3844 = vsel %vm3825, %v3838, %v3843
        %v3847 = vadd.f32 %v3810, %v3844
        %v3848 = vadd.f32 %v3811, %v3840
        %s3849 = sld [smem:[#allocation9 + $0x2e]]
        %v3850 = vstv %s3849
        %v3851 = vmul.f32 %v3850, %v3108
        %v3852 = vmul.f32 %v3850, %v3109
        %3855 = vrot.lane.b32.xlu0 %v3851, 120
        %v3856 = vpop.permute.xlu0 %3855
        %3857 = vrot.lane.b32.xlu0 %v3852, 120
        %v3858 = vpop.permute.xlu0 %3857
        %v3859 = vrot.slane %v3856, 2
        %v3860 = vrot.slane %v3858, 2
        %v3861 = vsel %vm2250, %v3859, %v3860
        %vm3862 = vcmask 982016
        %v3863 = vsel %vm3862, %v3856, %v3861
        %v3866 = vadd.f32 %v3829, %v3863
        %v3867 = vadd.f32 %v3830, %v3858
        %s3868 = sld [smem:[#allocation9 + $0xae]]
        %v3869 = vstv %s3868
        %v3870 = vmul.f32 %v3869, %v3108
        %v3871 = vmul.f32 %v3869, %v3109
        %3874 = vrot.lane.b32.xlu0 %v3870, 120
        %v3875 = vpop.permute.xlu0 %3874
        %3876 = vrot.lane.b32.xlu0 %v3871, 120
        %v3877 = vpop.permute.xlu0 %3876
        %v3878 = vrot.slane %v3875, 2
        %v3879 = vrot.slane %v3877, 2
        %v3880 = vsel %vm2250, %v3878, %v3879
        %v3881 = vsel %vm3862, %v3875, %v3880
        %v3884 = vadd.f32 %v3847, %v3881
        %v3885 = vadd.f32 %v3848, %v3877
        %s3886 = sld [smem:[#allocation9 + $0x2f]]
        %v3887 = vstv %s3886
        %v3888 = vmul.f32 %v3887, %v3108
        %v3889 = vmul.f32 %v3887, %v3109
        %3892 = vrot.lane.b32.xlu0 %v3888, 119
        %v3893 = vpop.permute.xlu0 %3892
        %3894 = vrot.lane.b32.xlu0 %v3889, 119
        %v3895 = vpop.permute.xlu0 %3894
        %v3896 = vrot.slane %v3893, 2
        %v3897 = vrot.slane %v3895, 2
        %v3898 = vsel %vm2250, %v3896, %v3897
        %vm3899 = vcmask 973824
        %v3900 = vsel %vm3899, %v3893, %v3898
        %v3903 = vadd.f32 %v3866, %v3900
        %v3904 = vadd.f32 %v3867, %v3895
        %s3905 = sld [smem:[#allocation9 + $0xaf]]
        %v3906 = vstv %s3905
        %v3907 = vmul.f32 %v3906, %v3108
        %v3908 = vmul.f32 %v3906, %v3109
        %3911 = vrot.lane.b32.xlu0 %v3907, 119
        %v3912 = vpop.permute.xlu0 %3911
        %3913 = vrot.lane.b32.xlu0 %v3908, 119
        %v3914 = vpop.permute.xlu0 %3913
        %v3915 = vrot.slane %v3912, 2
        %v3916 = vrot.slane %v3914, 2
        %v3917 = vsel %vm2250, %v3915, %v3916
        %v3918 = vsel %vm3899, %v3912, %v3917
        %v3921 = vadd.f32 %v3884, %v3918
        %v3922 = vadd.f32 %v3885, %v3914
        %s3923 = sld [smem:[#allocation9 + $0x30]]
        %v3924 = vstv %s3923
        %v3925 = vmul.f32 %v3924, %v3108
        %v3926 = vmul.f32 %v3924, %v3109
        %3929 = vrot.lane.b32.xlu0 %v3925, 118
        %v3930 = vpop.permute.xlu0 %3929
        %3931 = vrot.lane.b32.xlu0 %v3926, 118
        %v3932 = vpop.permute.xlu0 %3931
        %v3933 = vrot.slane %v3930, 2
        %v3934 = vrot.slane %v3932, 2
        %v3935 = vsel %vm2250, %v3933, %v3934
        %vm3936 = vcmask 965632
        %v3937 = vsel %vm3936, %v3930, %v3935
        %v3940 = vadd.f32 %v3903, %v3937
        %v3941 = vadd.f32 %v3904, %v3932
        %s3942 = sld [smem:[#allocation9 + $0xb0]]
        %v3943 = vstv %s3942
        %v3944 = vmul.f32 %v3943, %v3108
        %v3945 = vmul.f32 %v3943, %v3109
        %3948 = vrot.lane.b32.xlu0 %v3944, 118
        %v3949 = vpop.permute.xlu0 %3948
        %3950 = vrot.lane.b32.xlu0 %v3945, 118
        %v3951 = vpop.permute.xlu0 %3950
        %v3952 = vrot.slane %v3949, 2
        %v3953 = vrot.slane %v3951, 2
        %v3954 = vsel %vm2250, %v3952, %v3953
        %v3955 = vsel %vm3936, %v3949, %v3954
        %v3958 = vadd.f32 %v3921, %v3955
        %v3959 = vadd.f32 %v3922, %v3951
        %v3962 = vrot.slane %v3958, 7
        %v3963 = vrot.slane %v3962, 2
        %v3964 = vrot.slane %v3959, 7
        %v3965 = vrot.slane %v3964, 2
        %v3968 = vadd.f32 %v3940, %v3963
        %v3969 = vadd.f32 %v3941, %v3965
        %v3970 = vsub.f32 0.0, %v3968
        %v3971 = vsub.f32 0.0, %v3969
        %v3972 = vmul.f32 %v3970, 1.442695
        %v3973 = vpow.pop %v3972
        %v3974 = vmul.f32 %v3971, 1.442695
        %v3975 = vpow.pop %v3974
        %v3976 = vadd.f32 %v3973, 1.0
        %v3977 = vadd.f32 %v3975, 1.0
        %v3978 = vrcp.pop %v3976
        %v3979 = vmul.f32 1.0, %v3978
        %v3980 = vrcp.pop %v3977
        %v3981 = vmul.f32 1.0, %v3980
        %v3984 = vlaneseq
        %v3985 = vshrl.u32 %v3984, 7
        %v3986 = vsub.s32 0, %v3985
        %v3987 = vrot.slane %v3979, %v3986
        %v3988 = vlaneseq
        %v3989 = vshrl.u32 %v3988, 7
        %v3990 = vsub.s32 2, %v3989
        %v3991 = vrot.slane %v3979, %v3990
        %v3992 = vlaneseq
        %v3993 = vshrl.u32 %v3992, 7
        %v3994 = vsub.s32 4, %v3993
        %v3995 = vrot.slane %v3979, %v3994
        %v3996 = vlaneseq
        %v3997 = vshrl.u32 %v3996, 7
        %v3998 = vsub.s32 6, %v3997
        %v3999 = vrot.slane %v3979, %v3998
        %v4000 = vlaneseq
        %v4001 = vshrl.u32 %v4000, 7
        %v4002 = vsub.s32 0, %v4001
        %v4003 = vrot.slane %v3981, %v4002
        %v4009 = vlaneseq
        %v4010 = vshrl.u32 %v4009, 7
        %v4011 = vsub.s32 0, %v4010
        %v4012 = vrot.slane %v3987, %v4011
        %v4013 = vlaneseq
        %v4014 = vshrl.u32 %v4013, 7
        %v4015 = vsub.s32 0, %v4014
        %v4016 = vrot.slane %v3991, %v4015
        %v4017 = vlaneseq
        %v4018 = vshrl.u32 %v4017, 7
        %v4019 = vsub.s32 0, %v4018
        %v4020 = vrot.slane %v3995, %v4019
        %v4021 = vlaneseq
        %v4022 = vshrl.u32 %v4021, 7
        %v4023 = vsub.s32 0, %v4022
        %v4024 = vrot.slane %v3999, %v4023
        %v4025 = vlaneseq
        %v4026 = vshrl.u32 %v4025, 7
        %v4027 = vsub.s32 0, %v4026
        %v4028 = vrot.slane %v4003, %v4027
        %4034 = vrot.lane.b32.xlu0 %v4012, 69
        %v4035 = vpop.permute.xlu0 %4034
        %4036 = vrot.lane.b32.xlu0 %v4016, 69
        %v4037 = vpop.permute.xlu0 %4036
        %4038 = vrot.lane.b32.xlu0 %v4020, 69
        %v4039 = vpop.permute.xlu0 %4038
        %4040 = vrot.lane.b32.xlu0 %v4024, 69
        %v4041 = vpop.permute.xlu0 %4040
        %4042 = vrot.lane.b32.xlu0 %v4028, 69
        %v4043 = vpop.permute.xlu0 %4042
        %vm4044 = vcmask 564224
        %v4045 = vsel %vm4044, %v4035, %v4037
        %v4046 = vsel %vm4044, %v4037, %v4039
        %v4047 = vsel %vm4044, %v4039, %v4041
        %v4048 = vsel %vm4044, %v4041, %v4043
        %v4053 = vadd.f32 %v421, %v4045
        %v4054 = vadd.f32 %v422, %v4046
        %v4055 = vadd.f32 %v423, %v4047
        %v4056 = vadd.f32 %v424, %v4048
        %v4057 = vadd.f32 %v425, %v4045
        %v4058 = vadd.f32 %v426, %v4046
        %v4059 = vadd.f32 %v427, %v4047
        %v4060 = vadd.f32 %v428, %v4048
        %4061 = vst [vmem:[%s420] sm:$0xff] %v4053
        %4062 = vst [vmem:[%s420 + $0x8] sm:$0xff] %v4054
        %4063 = vst [vmem:[%s420 + $0x10] sm:$0xff] %v4055
        %4064 = vst [vmem:[%s420 + $0x18] sm:$0xff] %v4056
        %4065 = vst [vmem:[%s420 + $0x20] sm:$0xff] %v4057
        %4066 = vst [vmem:[%s420 + $0x28] sm:$0xff] %v4058
        %4067 = vst [vmem:[%s420 + $0x30] sm:$0xff] %v4059
        %4068 = vst [vmem:[%s420 + $0x38] sm:$0xff] %v4060
        %s4069 = sand.u32 %s275, 1
        %s4070 = scalar_lea.sflag [#allocation7], %s4069
        %s4071 = sand.u32 %s275, 1
        %s4072 = smul.addr %s4071, 64
        %s4073 = scalar_lea.vmem [#allocation10], %s4072
        // Predicated region
        $region73: #{tpu_custom_call.1} parent=63 // pred_check
          %p4074 = pneg %p285
        $region74: #{tpu_custom_call.1} parent=63 // pred_check_branch
          %4076 = sbr.rel (%p4074) target = $region76
        $region75: #{tpu_custom_call.1} parent=63 // pred_region
          %s4078 = ssub.s32 1024, 1024
          %4079 = vsyncadd %s4070, %s4078
          %s4080 = smul.addr %s31, 8
          %s4081 = smul.addr %s4080, 128
          %s4082 = scalar_lea.hbm %s11, %s4081
          %s4083 = sshll.u32 %s4073, 4
          %s4084 = int_to_ptr.vmem [resolvable:$true] %s4083
          %4089 = dma.vmem_to_hbm [thread:$0]  %s4084, 1024, %s4082, %s4070, 512, 512, 32
        $region76: #{tpu_custom_call.1} parent=63 // pred_fallthru
          _
      $region64: #{tpu_custom_call.1} parent=5 // pred_fallthru
        _
      %p4090 = scmp.le.s32.totalorder 2, %s26
      // Predicated region
      $region77: #{tpu_custom_call.1} parent=5 // pred_check
        %p4091 = pneg %p4090
      $region78: #{tpu_custom_call.1} parent=5 // pred_check_branch
        %4093 = sbr.rel (%p4091) target = $region80
      $region79: #{tpu_custom_call.1} parent=5 // pred_region
        %s4094 = ssub.s32 %s26, 2
        // Predicated region
        $region81: #{tpu_custom_call.1} parent=79 // pred_check
          %p4095 = pneg %p291
        $region82: #{tpu_custom_call.1} parent=79 // pred_check_branch
          %4097 = sbr.rel (%p4095) target = $region84
        $region83: #{tpu_custom_call.1} parent=79 // pred_region
          %s4098 = sand.u32 %s276, 1
          %s4099 = scalar_lea.sflag [#allocation7], %s4098
          %s4100 = sand.u32 %s276, 1
          %s4101 = smul.addr %s4100, 64
          %s4102 = scalar_lea.vmem [#allocation10], %s4101
          %4103 = dma.done %s4099, 1024
        $region84: #{tpu_custom_call.1} parent=79 // pred_fallthru
          _
      $region80: #{tpu_custom_call.1} parent=5 // pred_fallthru
        _
    $region6: #{tpu_custom_call.1} parent=1 // loop_footer
      %s30 = sadd.s32 1, %s26
    $region7: #{tpu_custom_call.1} parent=1 // loop_footer_branch
      %25 = sbr.rel target = $region3
    $region8: #{tpu_custom_call.1} parent=1 // loop_exit
      _
    %4104 = vsyncpa [#allocation6], 1
    %s4105 = scalar_lea.sflag [#allocation6], 1
    %4106 = vsyncpa %s4105, 1
    %4107 = vsyncpa [#allocation7], 1
    %s4108 = scalar_lea.sflag [#allocation7], 1
    %4109 = vsyncpa %s4108, 1
    %4110 = vsyncpa [#allocation8], 1
    %s4111 = scalar_lea.sflag [#allocation8], 1
    %4112 = vsyncpa %s4111, 1

</llo_original>
